<compile_context>
chip_gen: v6e
topology: v6e:2x2x1
jax: 0.10.0
libtpu: 0.0.40
codegen_flags: <defaults>
</compile_context>

<pallas_src>
import math
import numpy as np
import jax
import jax.numpy as jnp
from jax.experimental import pallas as pl
from jax.experimental.pallas import tpu as pltpu

# ---- hyper-parameters (match M1DCNN_Net defaults) ----
B = 4                               # batch
C = 64                              # input_channels (spectral bands)
NC = 10                             # n_classes
K = math.ceil(C / 9)                # conv kernel_size = 8
POOL = math.ceil(K / 5)             # pool_size = 2
OC1 = 20                            # conv_1 out channels
OC2 = 20                            # conv_2 out channels
L1 = C - K + 1                      # length after conv_1      (57)
L2 = L1 - K + 1                     # length after conv_2      (50)
L3 = (L2 - POOL) // POOL + 1        # length after MaxPool1d   (25)
F = OC2 * L3                        # features_size (torch dry-run value, 500)
H1 = 100                            # fc1 width
NC_PAD = 128                        # fc2 output padded to a full lane group
BN_EPS = 1e-5

D1 = OC1 * L1                       # 1140  (conv_1 slab width, channel-major: col = c*L1 + m)
D2 = OC2 * L2                       # 1000  (conv_2 slab width, channel-major: col = o*L2 + l)


def m1dcnn_kernel(x_ref, w1u_ref, b1t_ref, gamma_ref, beta_ref,
                  selmean_ref, seltile_ref, w2u_ref, b2t_ref,
                  wf1e_ref, bf1_ref, wf2tp_ref, bf2p_ref, out_ref):
    """Whole forward pass in one kernel, all intermediates lane-dense 2-D.

    x:(B,C)  w1u:(C,D1)  b1t:(1,D1)  gamma/beta:(1,OC1)
    selmean:(D1,OC1) (per-channel mean selector, pre-scaled by 1/(B*L1))
    seltile:(OC1,D1) (channel -> column tiler)
    w2u:(D1,D2)  b2t:(1,D2)  wf1e:(D2,H1) (pool-stride + NCL flatten folded, zero rows elsewhere)
    bf1:(1,H1)  wf2tp:(H1,NC_PAD)  bf2p:(1,NC_PAD)  out:(B,NC_PAD)
    """
    x = x_ref[...]                                                         # (B, C)

    # ---- conv_1 (Toeplitz-unfolded): one MXU push, lane-dense result ----
    h1 = jnp.dot(x, w1u_ref[...], preferred_element_type=jnp.float32) + b1t_ref[...]   # (B, D1)

    # ---- BatchNorm1d(OC1), train-mode batch statistics ----
    # TODO(synk): running_mean/running_var bookkeeping (training side effect) not modeled; output-only.
    # Single-pass E[x^2]-mean^2 variance: fine here (activations are near zero-mean at this init).
    s1 = jnp.sum(h1, axis=0, keepdims=True)                                # (1, D1)
    s2 = jnp.sum(h1 * h1, axis=0, keepdims=True)                           # (1, D1)
    stats = jnp.dot(jnp.concatenate([s1, s2], axis=0), selmean_ref[...],
                    preferred_element_type=jnp.float32)                    # (2, OC1): [mean, E[x^2]]
    mean = stats[0:1, :]
    var = stats[1:2, :] - mean * mean
    scale = gamma_ref[...] * jax.lax.rsqrt(var + BN_EPS)                   # (1, OC1)
    shift = beta_ref[...] - mean * scale                                   # (1, OC1)
    ss_tiled = jnp.dot(jnp.concatenate([scale, shift], axis=0), seltile_ref[...],
                       preferred_element_type=jnp.float32)                 # (2, D1)
    h1 = h1 * ss_tiled[0:1, :] + ss_tiled[1:2, :]                          # (B, D1)

    # ---- conv_2 (block-Toeplitz-unfolded): columns land in torch NCL flatten order ----
    h2 = jnp.dot(h1, w2u_ref[...], preferred_element_type=jnp.float32) + b2t_ref[...]  # (B, D2)

    # ---- MaxPool1d(POOL) as shifted-slab max; window starts are baked into wf1e's nonzero rows.
    # (shift-left implemented as an explicit rotate via concat: unambiguous semantics, one XLU-ish op;
    #  wrapped columns only touch never-selected positions.)
    m = h2
    for q in range(1, POOL):
        m = jnp.maximum(m, jnp.concatenate([h2[:, q:], h2[:, :q]], axis=1))
    t = jnp.tanh(m)                                                        # (B, D2)  tanh on full slab

    # ---- fc1 (pool-stride selection + NCL flatten folded into weight) -> tanh -> fc2 (128-lane padded)
    h = jnp.tanh(jnp.dot(t, wf1e_ref[...], preferred_element_type=jnp.float32) + bf1_ref[...])
    out_ref[...] = jnp.dot(h, wf2tp_ref[...], preferred_element_type=jnp.float32) + bf2p_ref[...]


_VMEM = pl.BlockSpec(memory_space=pltpu.MemorySpace.VMEM)


@jax.jit
def m1dcnn_forward(x, kernel_params):
    xb = x.reshape(B, C)                                   # squeeze(-1).squeeze(-1)
    # Whole net in one pallas_call; working set ~5.6 MB so no grid / tiling needed at B=4.
    # For large batches: add a leading batch grid + dimension_semantics=("parallel",).
    out_pad = pl.pallas_call(
        m1dcnn_kernel,
        out_shape=jax.ShapeDtypeStruct((B, NC_PAD), jnp.float32),
        in_specs=[_VMEM] * 13,
        out_specs=_VMEM,
        compiler_params=pltpu.CompilerParams(vmem_limit_bytes=32 * 1024 * 1024),
    )(xb, *kernel_params)
    return out_pad[:, :NC]


def init_params(key):
    """Synthetic init matching M1DCNN_Net.weight_init (U(-0.05,0.05) weights, zero bias),
    plus one-time host-side construction of the unfolded / folded kernel weight layouts."""
    k1, k2, k3, k4 = jax.random.split(key, 4)
    u = lambda k, shp: jax.random.uniform(k, shp, jnp.float32, -0.05, 0.05)
    w1 = u(k1, (OC1, 1, K))            # torch conv_1.weight
    w2 = u(k2, (OC2, OC1, K))          # torch conv_2.weight
    wf1 = u(k3, (H1, F))               # torch fc1.weight
    wf2 = u(k4, (NC, H1))              # torch fc2.weight
    b1 = jnp.zeros((1, OC1), jnp.float32)
    b2 = jnp.zeros((1, OC2), jnp.float32)
    gamma = jnp.ones((1, OC1), jnp.float32)     # bn_conv.weight default
    beta = jnp.zeros((1, OC1), jnp.float32)     # bn_conv.bias default
    bf1 = jnp.zeros((1, H1), jnp.float32)
    bf2 = jnp.zeros((1, NC), jnp.float32)

    w1_np, w2_np = np.asarray(w1), np.asarray(w2)
    wf1_np, wf2_np = np.asarray(wf1), np.asarray(wf2)
    b1_np, b2_np = np.asarray(b1)[0], np.asarray(b2)[0]
    ar1, ar2 = np.arange(L1), np.arange(L2)

    # conv_1 Toeplitz:  h1[b, c*L1+m] = sum_k x[b, m+k] * w1[c,0,k]
    w1_unf = np.zeros((C, D1), np.float32)
    for c in range(OC1):
        for k in range(K):
            w1_unf[k + ar1, c * L1 + ar1] = w1_np[c, 0, k]
    b1_tiled = np.repeat(b1_np, L1)[None, :].astype(np.float32)            # (1, D1)

    # per-channel mean selector (pre-divided by B*L1) and channel->column tiler
    sel_mean = np.zeros((D1, OC1), np.float32)
    sel_tile = np.zeros((OC1, D1), np.float32)
    for c in range(OC1):
        sel_mean[c * L1 + ar1, c] = 1.0 / (B * L1)
        sel_tile[c, c * L1 + ar1] = 1.0

    # conv_2 block-Toeplitz, output columns in torch NCL (channel-major) order:
    #   h2[b, o*L2+l] = sum_{c,k} h1bn[b, c*L1 + l + k] * w2[o,c,k]
    w2_unf = np.zeros((D1, D2), np.float32)
    for o in range(OC2):
        for c in range(OC1):
            for k in range(K):
                w2_unf[c * L1 + k + ar2, o * L2 + ar2] = w2_np[o, c, k]
    b2_tiled = np.repeat(b2_np, L2)[None, :].astype(np.float32)            # (1, D2)

    # fc1 weight expanded over un-pooled columns: only rows at pooled-window starts
    # (o*L2 + POOL*p) are nonzero -> folds MaxPool stride selection + NCL flatten.
    wf1_exp = np.zeros((D2, H1), np.float32)
    for o in range(OC2):
        for p in range(L3):
            wf1_exp[o * L2 + POOL * p, :] = wf1_np[:, o * L3 + p]

    # fc2 transposed + zero-padded to 128 lanes for an unmasked lane-dense output store.
    wf2t_pad = np.zeros((H1, NC_PAD), np.float32)
    wf2t_pad[:, :NC] = wf2_np.T
    bf2_pad = np.zeros((1, NC_PAD), np.float32)
    bf2_pad[0, :NC] = np.asarray(bf2)[0]

    kernel_params = (
        jnp.asarray(w1_unf), jnp.asarray(b1_tiled), gamma, beta,
        jnp.asarray(sel_mean), jnp.asarray(sel_tile),
        jnp.asarray(w2_unf), jnp.asarray(b2_tiled),
        jnp.asarray(wf1_exp), bf1, jnp.asarray(wf2t_pad), jnp.asarray(bf2_pad))
    torch_params = (w1, b1, gamma, beta, w2, b2, wf1, bf1, wf2, bf2)
    return kernel_params, torch_params


def reference_forward(x, torch_params):
    """Independent pure-JAX reference of the PyTorch forward (for numerical validation)."""
    (w1, b1, gamma, beta, w2, b2, wf1, bf1, wf2, bf2) = torch_params
    dn = ('NCH', 'OIH', 'NCH')
    h = x.reshape(B, C)[:, None, :]                                      # (B, 1, C)
    h = jax.lax.conv_general_dilated(h, w1, (1,), 'VALID', dimension_numbers=dn)
    h = h + b1[0][None, :, None]
    mean = jnp.mean(h, axis=(0, 2), keepdims=True)
    var = jnp.mean((h - mean) ** 2, axis=(0, 2), keepdims=True)
    h = (h - mean) / jnp.sqrt(var + BN_EPS) * gamma[0][None, :, None] + beta[0][None, :, None]
    h = jax.lax.conv_general_dilated(h, w2, (1,), 'VALID', dimension_numbers=dn)
    h = h + b2[0][None, :, None]
    h = jax.lax.reduce_window(h, -jnp.inf, jax.lax.max, (1, 1, POOL), (1, 1, POOL), 'VALID')
    h = jnp.tanh(h)
    hf = h.reshape(B, F)
    hf = jnp.tanh(hf @ wf1.T + bf1[0])
    return hf @ wf2.T + bf2[0]


if __name__ == "__main__":
    key = jax.random.PRNGKey(0)
    pkey, xkey = jax.random.split(key)
    kernel_params, torch_params = init_params(pkey)
    x = jax.random.normal(xkey, (B, C, 1, 1), jnp.float32)   # same input shape the torch module sees

    out = m1dcnn_forward(x, kernel_params)
    out = jax.block_until_ready(out)

    ref = reference_forward(x, torch_params)
    assert out.shape == (B, NC), out.shape
    if not jnp.allclose(out, ref, atol=5e-4, rtol=2e-3):
        raise AssertionError(f"mismatch vs reference: max abs err = {float(jnp.max(jnp.abs(out - ref)))}")
    print("KERNEL_OK")
</pallas_src>

<mosaic_0001>
module attributes {stable_mosaic.version = 11 : i64} {
  func.func @m1dcnn_kernel(%arg0: memref<4x64xf32, #tpu.memory_space<vmem>>, %arg1: memref<64x1140xf32, #tpu.memory_space<vmem>>, %arg2: memref<1x1140xf32, #tpu.memory_space<vmem>>, %arg3: memref<1x20xf32, #tpu.memory_space<vmem>>, %arg4: memref<1x20xf32, #tpu.memory_space<vmem>>, %arg5: memref<1140x20xf32, #tpu.memory_space<vmem>>, %arg6: memref<20x1140xf32, #tpu.memory_space<vmem>>, %arg7: memref<1140x1000xf32, #tpu.memory_space<vmem>>, %arg8: memref<1x1000xf32, #tpu.memory_space<vmem>>, %arg9: memref<1000x100xf32, #tpu.memory_space<vmem>>, %arg10: memref<1x100xf32, #tpu.memory_space<vmem>>, %arg11: memref<100x128xf32, #tpu.memory_space<vmem>>, %arg12: memref<1x128xf32, #tpu.memory_space<vmem>>, %arg13: memref<4x128xf32, #tpu.memory_space<vmem>>) attributes {dimension_semantics = [], scalar_prefetch = 0 : i64, scratch_operands = 0 : i64, tpu.core_type = #tpu.core_type<tc>} {
    %c0 = arith.constant 0 : index
    %c0_0 = arith.constant 0 : index
    %0 = vector.load %arg0[%c0, %c0_0] : memref<4x64xf32, #tpu.memory_space<vmem>>, vector<4x64xf32>
    %c0_1 = arith.constant 0 : index
    %c0_2 = arith.constant 0 : index
    %1 = vector.load %arg1[%c0_1, %c0_2] : memref<64x1140xf32, #tpu.memory_space<vmem>>, vector<64x1140xf32>
    %cst = arith.constant dense<0.000000e+00> : vector<4x1140xf32>
    %2 = tpu.matmul %0, %1, %cst {dimension_numbers = #tpu.dot_dimension_numbers<[1], [0], [0], [1], [0, 0, 1, 1], [], []>} : vector<4x64xf32>, vector<64x1140xf32>, vector<4x1140xf32> -> vector<4x1140xf32>
    %c0_3 = arith.constant 0 : index
    %c0_4 = arith.constant 0 : index
    %3 = vector.load %arg2[%c0_3, %c0_4] : memref<1x1140xf32, #tpu.memory_space<vmem>>, vector<1x1140xf32>
    %4 = vector.broadcast %3 : vector<1x1140xf32> to vector<4x1140xf32>
    %5 = arith.addf %2, %4 : vector<4x1140xf32>
    %cst_5 = arith.constant dense<0.000000e+00> : vector<1140xf32>
    %6 = vector.multi_reduction <add>, %5, %cst_5 [0] : vector<4x1140xf32> to vector<1140xf32>
    %7 = vector.shape_cast %6 : vector<1140xf32> to vector<1x1140xf32>
    %8 = arith.mulf %5, %5 : vector<4x1140xf32>
    %cst_6 = arith.constant dense<0.000000e+00> : vector<1140xf32>
    %9 = vector.multi_reduction <add>, %8, %cst_6 [0] : vector<4x1140xf32> to vector<1140xf32>
    %10 = vector.shape_cast %9 : vector<1140xf32> to vector<1x1140xf32>
    %11 = tpu.concatenate %7, %10 in 0 : vector<1x1140xf32>, vector<1x1140xf32> -> vector<2x1140xf32>
    %c0_7 = arith.constant 0 : index
    %c0_8 = arith.constant 0 : index
    %12 = vector.load %arg5[%c0_7, %c0_8] : memref<1140x20xf32, #tpu.memory_space<vmem>>, vector<1140x20xf32>
    %cst_9 = arith.constant dense<0.000000e+00> : vector<2x20xf32>
    %13 = tpu.matmul %11, %12, %cst_9 {dimension_numbers = #tpu.dot_dimension_numbers<[1], [0], [0], [1], [0, 0, 1, 1], [], []>} : vector<2x1140xf32>, vector<1140x20xf32>, vector<2x20xf32> -> vector<2x20xf32>
    %14 = vector.extract_strided_slice %13 {offsets = [0, 0], sizes = [1, 20], strides = [1, 1]} : vector<2x20xf32> to vector<1x20xf32>
    %15 = vector.extract_strided_slice %13 {offsets = [1, 0], sizes = [1, 20], strides = [1, 1]} : vector<2x20xf32> to vector<1x20xf32>
    %16 = arith.mulf %14, %14 : vector<1x20xf32>
    %17 = arith.subf %15, %16 : vector<1x20xf32>
    %c0_10 = arith.constant 0 : index
    %c0_11 = arith.constant 0 : index
    %18 = vector.load %arg3[%c0_10, %c0_11] : memref<1x20xf32, #tpu.memory_space<vmem>>, vector<1x20xf32>
    %cst_12 = arith.constant 9.99999974E-6 : f32
    %19 = vector.broadcast %cst_12 : f32 to vector<1x20xf32>
    %20 = arith.addf %17, %19 : vector<1x20xf32>
    %21 = math.rsqrt %20 : vector<1x20xf32>
    %22 = arith.mulf %18, %21 : vector<1x20xf32>
    %c0_13 = arith.constant 0 : index
    %c0_14 = arith.constant 0 : index
    %23 = vector.load %arg4[%c0_13, %c0_14] : memref<1x20xf32, #tpu.memory_space<vmem>>, vector<1x20xf32>
    %24 = arith.mulf %14, %22 : vector<1x20xf32>
    %25 = arith.subf %23, %24 : vector<1x20xf32>
    %26 = tpu.concatenate %22, %25 in 0 : vector<1x20xf32>, vector<1x20xf32> -> vector<2x20xf32>
    %c0_15 = arith.constant 0 : index
    %c0_16 = arith.constant 0 : index
    %27 = vector.load %arg6[%c0_15, %c0_16] : memref<20x1140xf32, #tpu.memory_space<vmem>>, vector<20x1140xf32>
    %cst_17 = arith.constant dense<0.000000e+00> : vector<2x1140xf32>
    %28 = tpu.matmul %26, %27, %cst_17 {dimension_numbers = #tpu.dot_dimension_numbers<[1], [0], [0], [1], [0, 0, 1, 1], [], []>} : vector<2x20xf32>, vector<20x1140xf32>, vector<2x1140xf32> -> vector<2x1140xf32>
    %29 = vector.extract_strided_slice %28 {offsets = [0, 0], sizes = [1, 1140], strides = [1, 1]} : vector<2x1140xf32> to vector<1x1140xf32>
    %30 = vector.broadcast %29 : vector<1x1140xf32> to vector<4x1140xf32>
    %31 = arith.mulf %5, %30 : vector<4x1140xf32>
    %32 = vector.extract_strided_slice %28 {offsets = [1, 0], sizes = [1, 1140], strides = [1, 1]} : vector<2x1140xf32> to vector<1x1140xf32>
    %33 = vector.broadcast %32 : vector<1x1140xf32> to vector<4x1140xf32>
    %34 = arith.addf %31, %33 : vector<4x1140xf32>
    %c0_18 = arith.constant 0 : index
    %c0_19 = arith.constant 0 : index
    %35 = vector.load %arg7[%c0_18, %c0_19] : memref<1140x1000xf32, #tpu.memory_space<vmem>>, vector<1140x1000xf32>
    %cst_20 = arith.constant dense<0.000000e+00> : vector<4x1000xf32>
    %36 = tpu.matmul %34, %35, %cst_20 {dimension_numbers = #tpu.dot_dimension_numbers<[1], [0], [0], [1], [0, 0, 1, 1], [], []>} : vector<4x1140xf32>, vector<1140x1000xf32>, vector<4x1000xf32> -> vector<4x1000xf32>
    %c0_21 = arith.constant 0 : index
    %c0_22 = arith.constant 0 : index
    %37 = vector.load %arg8[%c0_21, %c0_22] : memref<1x1000xf32, #tpu.memory_space<vmem>>, vector<1x1000xf32>
    %38 = vector.broadcast %37 : vector<1x1000xf32> to vector<4x1000xf32>
    %39 = arith.addf %36, %38 : vector<4x1000xf32>
    %40 = vector.extract_strided_slice %39 {offsets = [0, 1], sizes = [4, 999], strides = [1, 1]} : vector<4x1000xf32> to vector<4x999xf32>
    %41 = vector.extract_strided_slice %39 {offsets = [0, 0], sizes = [4, 1], strides = [1, 1]} : vector<4x1000xf32> to vector<4x1xf32>
    %42 = tpu.concatenate %40, %41 in 1 : vector<4x999xf32>, vector<4x1xf32> -> vector<4x1000xf32>
    %43 = arith.maximumf %39, %42 : vector<4x1000xf32>
    %44 = math.tanh %43 : vector<4x1000xf32>
    %c0_23 = arith.constant 0 : index
    %c0_24 = arith.constant 0 : index
    %45 = vector.load %arg9[%c0_23, %c0_24] : memref<1000x100xf32, #tpu.memory_space<vmem>>, vector<1000x100xf32>
    %cst_25 = arith.constant dense<0.000000e+00> : vector<4x100xf32>
    %46 = tpu.matmul %44, %45, %cst_25 {dimension_numbers = #tpu.dot_dimension_numbers<[1], [0], [0], [1], [0, 0, 1, 1], [], []>} : vector<4x1000xf32>, vector<1000x100xf32>, vector<4x100xf32> -> vector<4x100xf32>
    %c0_26 = arith.constant 0 : index
    %c0_27 = arith.constant 0 : index
    %47 = vector.load %arg10[%c0_26, %c0_27] : memref<1x100xf32, #tpu.memory_space<vmem>>, vector<1x100xf32>
    %48 = vector.broadcast %47 : vector<1x100xf32> to vector<4x100xf32>
    %49 = arith.addf %46, %48 : vector<4x100xf32>
    %50 = math.tanh %49 : vector<4x100xf32>
    %c0_28 = arith.constant 0 : index
    %c0_29 = arith.constant 0 : index
    %51 = vector.load %arg11[%c0_28, %c0_29] : memref<100x128xf32, #tpu.memory_space<vmem>>, vector<100x128xf32>
    %cst_30 = arith.constant dense<0.000000e+00> : vector<4x128xf32>
    %52 = tpu.matmul %50, %51, %cst_30 {dimension_numbers = #tpu.dot_dimension_numbers<[1], [0], [0], [1], [0, 0, 1, 1], [], []>} : vector<4x100xf32>, vector<100x128xf32>, vector<4x128xf32> -> vector<4x128xf32>
    %c0_31 = arith.constant 0 : index
    %c0_32 = arith.constant 0 : index
    %53 = vector.load %arg12[%c0_31, %c0_32] : memref<1x128xf32, #tpu.memory_space<vmem>>, vector<1x128xf32>
    %54 = vector.broadcast %53 : vector<1x128xf32> to vector<4x128xf32>
    %55 = arith.addf %52, %54 : vector<4x128xf32>
    %c0_33 = arith.constant 0 : index
    %c0_34 = arith.constant 0 : index
    %56 = vector.load %arg13[%c0_33, %c0_34] : memref<4x128xf32, #tpu.memory_space<vmem>>, vector<4x128xf32>
    tpu.vector_store %arg13[%c0_33, %c0_34], %55 {strides = array<i32>} : memref<4x128xf32, #tpu.memory_space<vmem>>, vector<4x128xf32>,
    return
  }
}

</mosaic_0001>

<llo_original>
// kernel: m1dcnn_forward.1
$region0: #{m1dcnn_forward.1}
  #allocation0 [shape = 'u32[]', space=smem, size = 0x4, offset = 0x4, fixed_abs, tag = 'smem constant byte address 0x4 - core index']
  #allocation1 [shape = 'u32[144,128]{1,0:T(1,128)}', space=vmem, size = 0x12000, scoped, tag = 'internal scratch']
  %s0 = inlined_call_operand.vmem [shape: f32[4,64], index: 0, kind: input, shape index: {}]
  %s1 = inlined_call_operand.vmem [shape: f32[64,1140], index: 1, kind: input, shape index: {}]
  %s2 = inlined_call_operand.vmem [shape: f32[1,1140], index: 2, kind: input, shape index: {}]
  %s3 = inlined_call_operand.vmem [shape: f32[1,20], index: 3, kind: input, shape index: {}]
  %s4 = inlined_call_operand.vmem [shape: f32[1,20], index: 4, kind: input, shape index: {}]
  %s5 = inlined_call_operand.vmem [shape: f32[1140,20], index: 5, kind: input, shape index: {}]
  %s6 = inlined_call_operand.vmem [shape: f32[20,1140], index: 6, kind: input, shape index: {}]
  %s7 = inlined_call_operand.vmem [shape: f32[1140,1000], index: 7, kind: input, shape index: {}]
  %s8 = inlined_call_operand.vmem [shape: f32[1,1000], index: 8, kind: input, shape index: {}]
  %s9 = inlined_call_operand.vmem [shape: f32[1000,100], index: 9, kind: input, shape index: {}]
  %s10 = inlined_call_operand.vmem [shape: f32[1,100], index: 10, kind: input, shape index: {}]
  %s11 = inlined_call_operand.vmem [shape: f32[100,128], index: 11, kind: input, shape index: {}]
  %s12 = inlined_call_operand.vmem [shape: f32[1,128], index: 12, kind: input, shape index: {}]
  %s13 = inlined_call_operand.hbm [shape: f32[4,128], index: 13, kind: output, shape index: {}]
  %s14 = sld [smem:[#allocation0]]
  $region62: #{m1dcnn_forward.1} parent=0
    _
  %s16 = ssub.s32 1, %s14
  %s17 = scalar_select 0, %s16, %s14
  $region1: #{m1dcnn_forward.1} parent=0
    #allocation2 [shape = 'u8[2048]{0}', space=vmem, size = 0x800, scoped, tag = 'output window, operand 0, single buffered']
    #allocation3 [shape = 's32[1]{0}', space=sflag, size = 0x4, scoped, tag = 'scoped memory for m1dcnn_forward.1']
    %18 = vsyncpa [#allocation3], 0
    // Predicated region
    $region2: #{m1dcnn_forward.1} parent=1 // pred_check
      _
    $region3: #{m1dcnn_forward.1} parent=1 // pred_check_branch
      %20 = sbr.rel (0) target = $region5
    $region4: #{m1dcnn_forward.1} parent=1 // pred_region
      _
    $region5: #{m1dcnn_forward.1} parent=1 // pred_fallthru
      _
    // Predicated region
    $region6: #{m1dcnn_forward.1} parent=1 // pred_check
      _
    $region7: #{m1dcnn_forward.1} parent=1 // pred_check_branch
      %22 = sbr.rel (0) target = $region9
    $region8: #{m1dcnn_forward.1} parent=1 // pred_region
      _
    $region9: #{m1dcnn_forward.1} parent=1 // pred_fallthru
      _
    // Predicated region
    $region10: #{m1dcnn_forward.1} parent=1 // pred_check
      _
    $region11: #{m1dcnn_forward.1} parent=1 // pred_check_branch
      %24 = sbr.rel (0) target = $region13
    $region12: #{m1dcnn_forward.1} parent=1 // pred_region
      _
    $region13: #{m1dcnn_forward.1} parent=1 // pred_fallthru
      _
    // Predicated region
    $region14: #{m1dcnn_forward.1} parent=1 // pred_check
      _
    $region15: #{m1dcnn_forward.1} parent=1 // pred_check_branch
      %26 = sbr.rel (0) target = $region17
    $region16: #{m1dcnn_forward.1} parent=1 // pred_region
      _
    $region17: #{m1dcnn_forward.1} parent=1 // pred_fallthru
      _
    // Predicated region
    $region18: #{m1dcnn_forward.1} parent=1 // pred_check
      _
    $region19: #{m1dcnn_forward.1} parent=1 // pred_check_branch
      %28 = sbr.rel (0) target = $region21
    $region20: #{m1dcnn_forward.1} parent=1 // pred_region
      _
    $region21: #{m1dcnn_forward.1} parent=1 // pred_fallthru
      _
    // Predicated region
    $region22: #{m1dcnn_forward.1} parent=1 // pred_check
      _
    $region23: #{m1dcnn_forward.1} parent=1 // pred_check_branch
      %30 = sbr.rel (0) target = $region25
    $region24: #{m1dcnn_forward.1} parent=1 // pred_region
      _
    $region25: #{m1dcnn_forward.1} parent=1 // pred_fallthru
      _
    // Predicated region
    $region26: #{m1dcnn_forward.1} parent=1 // pred_check
      _
    $region27: #{m1dcnn_forward.1} parent=1 // pred_check_branch
      %32 = sbr.rel (0) target = $region29
    $region28: #{m1dcnn_forward.1} parent=1 // pred_region
      _
    $region29: #{m1dcnn_forward.1} parent=1 // pred_fallthru
      _
    // Predicated region
    $region30: #{m1dcnn_forward.1} parent=1 // pred_check
      _
    $region31: #{m1dcnn_forward.1} parent=1 // pred_check_branch
      %34 = sbr.rel (0) target = $region33
    $region32: #{m1dcnn_forward.1} parent=1 // pred_region
      _
    $region33: #{m1dcnn_forward.1} parent=1 // pred_fallthru
      _
    // Predicated region
    $region34: #{m1dcnn_forward.1} parent=1 // pred_check
      _
    $region35: #{m1dcnn_forward.1} parent=1 // pred_check_branch
      %36 = sbr.rel (0) target = $region37
    $region36: #{m1dcnn_forward.1} parent=1 // pred_region
      _
    $region37: #{m1dcnn_forward.1} parent=1 // pred_fallthru
      _
    // Predicated region
    $region38: #{m1dcnn_forward.1} parent=1 // pred_check
      _
    $region39: #{m1dcnn_forward.1} parent=1 // pred_check_branch
      %38 = sbr.rel (0) target = $region41
    $region40: #{m1dcnn_forward.1} parent=1 // pred_region
      _
    $region41: #{m1dcnn_forward.1} parent=1 // pred_fallthru
      _
    // Predicated region
    $region42: #{m1dcnn_forward.1} parent=1 // pred_check
      _
    $region43: #{m1dcnn_forward.1} parent=1 // pred_check_branch
      %40 = sbr.rel (0) target = $region45
    $region44: #{m1dcnn_forward.1} parent=1 // pred_region
      _
    $region45: #{m1dcnn_forward.1} parent=1 // pred_fallthru
      _
    // Predicated region
    $region46: #{m1dcnn_forward.1} parent=1 // pred_check
      _
    $region47: #{m1dcnn_forward.1} parent=1 // pred_check_branch
      %42 = sbr.rel (0) target = $region49
    $region48: #{m1dcnn_forward.1} parent=1 // pred_region
      _
    $region49: #{m1dcnn_forward.1} parent=1 // pred_fallthru
      _
    // Predicated region
    $region50: #{m1dcnn_forward.1} parent=1 // pred_check
      _
    $region51: #{m1dcnn_forward.1} parent=1 // pred_check_branch
      %44 = sbr.rel (0) target = $region53
    $region52: #{m1dcnn_forward.1} parent=1 // pred_region
      _
    $region53: #{m1dcnn_forward.1} parent=1 // pred_fallthru
      _
    %v45 = vld [vmem:[%s0] sm:$0xf]
    %v46 = vld [vmem:[%s1] sm:$0xff]
    %v47 = vld [vmem:[%s1 + $0x8] sm:$0xff]
    %v48 = vld [vmem:[%s1 + $0x10] sm:$0xff]
    %v49 = vld [vmem:[%s1 + $0x18] sm:$0xff]
    %v50 = vld [vmem:[%s1 + $0x20] sm:$0xff]
    %v51 = vld [vmem:[%s1 + $0x28] sm:$0xff]
    %v52 = vld [vmem:[%s1 + $0x30] sm:$0xff]
    %v53 = vld [vmem:[%s1 + $0x38] sm:$0xff]
    %v54 = vld [vmem:[%s1 + $0x40] sm:$0xff]
    %v55 = vld [vmem:[%s1 + $0x48] sm:$0xff]
    %v56 = vld [vmem:[%s1 + $0x50] sm:$0xff]
    %v57 = vld [vmem:[%s1 + $0x58] sm:$0xff]
    %v58 = vld [vmem:[%s1 + $0x60] sm:$0xff]
    %v59 = vld [vmem:[%s1 + $0x68] sm:$0xff]
    %v60 = vld [vmem:[%s1 + $0x70] sm:$0xff]
    %v61 = vld [vmem:[%s1 + $0x78] sm:$0xff]
    %v62 = vld [vmem:[%s1 + $0x80] sm:$0xff]
    %v63 = vld [vmem:[%s1 + $0x88] sm:$0xff]
    %v64 = vld [vmem:[%s1 + $0x90] sm:$0xff]
    %v65 = vld [vmem:[%s1 + $0x98] sm:$0xff]
    %v66 = vld [vmem:[%s1 + $0xa0] sm:$0xff]
    %v67 = vld [vmem:[%s1 + $0xa8] sm:$0xff]
    %v68 = vld [vmem:[%s1 + $0xb0] sm:$0xff]
    %v69 = vld [vmem:[%s1 + $0xb8] sm:$0xff]
    %v70 = vld [vmem:[%s1 + $0xc0] sm:$0xff]
    %v71 = vld [vmem:[%s1 + $0xc8] sm:$0xff]
    %v72 = vld [vmem:[%s1 + $0xd0] sm:$0xff]
    %v73 = vld [vmem:[%s1 + $0xd8] sm:$0xff]
    %v74 = vld [vmem:[%s1 + $0xe0] sm:$0xff]
    %v75 = vld [vmem:[%s1 + $0xe8] sm:$0xff]
    %v76 = vld [vmem:[%s1 + $0xf0] sm:$0xff]
    %v77 = vld [vmem:[%s1 + $0xf8] sm:$0xff]
    %v78 = vld [vmem:[%s1 + $0x100] sm:$0xff]
    %v79 = vld [vmem:[%s1 + $0x108] sm:$0xff]
    %v80 = vld [vmem:[%s1 + $0x110] sm:$0xff]
    %v81 = vld [vmem:[%s1 + $0x118] sm:$0xff]
    %v82 = vld [vmem:[%s1 + $0x120] sm:$0xff]
    %v83 = vld [vmem:[%s1 + $0x128] sm:$0xff]
    %v84 = vld [vmem:[%s1 + $0x130] sm:$0xff]
    %v85 = vld [vmem:[%s1 + $0x138] sm:$0xff]
    %v86 = vld [vmem:[%s1 + $0x140] sm:$0xff]
    %v87 = vld [vmem:[%s1 + $0x148] sm:$0xff]
    %v88 = vld [vmem:[%s1 + $0x150] sm:$0xff]
    %v89 = vld [vmem:[%s1 + $0x158] sm:$0xff]
    %v90 = vld [vmem:[%s1 + $0x160] sm:$0xff]
    %v91 = vld [vmem:[%s1 + $0x168] sm:$0xff]
    %v92 = vld [vmem:[%s1 + $0x170] sm:$0xff]
    %v93 = vld [vmem:[%s1 + $0x178] sm:$0xff]
    %v94 = vld [vmem:[%s1 + $0x180] sm:$0xff]
    %v95 = vld [vmem:[%s1 + $0x188] sm:$0xff]
    %v96 = vld [vmem:[%s1 + $0x190] sm:$0xff]
    %v97 = vld [vmem:[%s1 + $0x198] sm:$0xff]
    %v98 = vld [vmem:[%s1 + $0x1a0] sm:$0xff]
    %v99 = vld [vmem:[%s1 + $0x1a8] sm:$0xff]
    %v100 = vld [vmem:[%s1 + $0x1b0] sm:$0xff]
    %v101 = vld [vmem:[%s1 + $0x1b8] sm:$0xff]
    %v102 = vld [vmem:[%s1 + $0x1c0] sm:$0xff]
    %v103 = vld [vmem:[%s1 + $0x1c8] sm:$0xff]
    %v104 = vld [vmem:[%s1 + $0x1d0] sm:$0xff]
    %v105 = vld [vmem:[%s1 + $0x1d8] sm:$0xff]
    %v106 = vld [vmem:[%s1 + $0x1e0] sm:$0xff]
    %v107 = vld [vmem:[%s1 + $0x1e8] sm:$0xff]
    %v108 = vld [vmem:[%s1 + $0x1f0] sm:$0xff]
    %v109 = vld [vmem:[%s1 + $0x1f8] sm:$0xff]
    %v110 = vld [vmem:[%s1 + $0x200] sm:$0xff]
    %v111 = vld [vmem:[%s1 + $0x208] sm:$0xff]
    %v112 = vld [vmem:[%s1 + $0x210] sm:$0xff]
    %v113 = vld [vmem:[%s1 + $0x218] sm:$0xff]
    %v114 = vld [vmem:[%s1 + $0x220] sm:$0xff]
    %v115 = vld [vmem:[%s1 + $0x228] sm:$0xff]
    %v116 = vld [vmem:[%s1 + $0x230] sm:$0xff]
    %v117 = vld [vmem:[%s1 + $0x238] sm:$0xff]
    %v118 = vld [vmem:[%s2] sm:$0xff]
    %v119 = vld [vmem:[%s2 + $0x8] sm:$0x1]
    %v122 = vlaneseq
    %v123 = vshrl.u32 %v122, 7
    %v124 = vsub.s32 0, %v123
    %v125 = vrot.slane %v118, %v124
    %v126 = vlaneseq
    %v127 = vshrl.u32 %v126, 7
    %v128 = vsub.s32 1, %v127
    %v129 = vrot.slane %v118, %v128
    %v130 = vlaneseq
    %v131 = vshrl.u32 %v130, 7
    %v132 = vsub.s32 2, %v131
    %v133 = vrot.slane %v118, %v132
    %v134 = vlaneseq
    %v135 = vshrl.u32 %v134, 7
    %v136 = vsub.s32 3, %v135
    %v137 = vrot.slane %v118, %v136
    %v138 = vlaneseq
    %v139 = vshrl.u32 %v138, 7
    %v140 = vsub.s32 4, %v139
    %v141 = vrot.slane %v118, %v140
    %v142 = vlaneseq
    %v143 = vshrl.u32 %v142, 7
    %v144 = vsub.s32 5, %v143
    %v145 = vrot.slane %v118, %v144
    %v146 = vlaneseq
    %v147 = vshrl.u32 %v146, 7
    %v148 = vsub.s32 6, %v147
    %v149 = vrot.slane %v118, %v148
    %v150 = vlaneseq
    %v151 = vshrl.u32 %v150, 7
    %v152 = vsub.s32 7, %v151
    %v153 = vrot.slane %v118, %v152
    %v154 = vlaneseq
    %v155 = vshrl.u32 %v154, 7
    %v156 = vsub.s32 0, %v155
    %v157 = vrot.slane %v119, %v156
    %vm167 = vcmask 523264
    %v169 = vsel %vm167, %v45, 0
    %171 = vmatprep.subr.mxu0 0.0
    %172 = vmatpush1.msra.mxu0 0.0
    %173 = vmatprep.subr.mxu0 0.0
    %174 = vmatpush1.msra.mxu0 0.0
    %175 = vmatprep.subr.mxu0 0.0
    %176 = vmatpush1.msra.mxu0 0.0
    %177 = vmatprep.subr.mxu0 0.0
    %178 = vmatpush1.msra.mxu0 0.0
    %179 = vmatprep.subr.mxu0 0.0
    %180 = vmatpush1.msra.mxu0 0.0
    %181 = vmatprep.subr.mxu0 0.0
    %182 = vmatpush1.msra.mxu0 0.0
    %183 = vmatprep.subr.mxu0 0.0
    %184 = vmatpush1.msra.mxu0 0.0
    %185 = vmatprep.subr.mxu0 0.0
    %186 = vmatpush1.msra.mxu0 0.0
    %187 = vmatprep.subr.mxu0 %v110
    %188 = vmatpush1.msra.mxu0 %v109
    %189 = vmatprep.subr.mxu0 %v101
    %190 = vmatpush1.msra.mxu0 %v100
    %191 = vmatprep.subr.mxu0 %v92
    %192 = vmatpush1.msra.mxu0 %v91
    %193 = vmatprep.subr.mxu0 %v83
    %194 = vmatpush1.msra.mxu0 %v82
    %195 = vmatprep.subr.mxu0 %v74
    %196 = vmatpush1.msra.mxu0 %v73
    %197 = vmatprep.subr.mxu0 %v65
    %198 = vmatpush1.msra.mxu0 %v64
    %199 = vmatprep.subr.mxu0 %v56
    %200 = vmatpush1.msra.mxu0 %v55
    %201 = vmatprep.subr.mxu0 %v47
    %202 = vmatpush1.msra.mxu0 %v46
    %203 = vmatprep.subr.mxu0 0.0
    %204 = vmatpush2.msra.mxu0 0.0
    %205 = vmatprep.subr.mxu0 0.0
    %206 = vmatpush2.msra.mxu0 0.0
    %207 = vmatprep.subr.mxu0 0.0
    %208 = vmatpush2.msra.mxu0 0.0
    %209 = vmatprep.subr.mxu0 0.0
    %210 = vmatpush2.msra.mxu0 0.0
    %211 = vmatprep.subr.mxu0 0.0
    %212 = vmatpush2.msra.mxu0 0.0
    %213 = vmatprep.subr.mxu0 0.0
    %214 = vmatpush2.msra.mxu0 0.0
    %215 = vmatprep.subr.mxu0 0.0
    %216 = vmatpush2.msra.mxu0 0.0
    %217 = vmatprep.subr.mxu0 0.0
    %218 = vmatpush2.msra.mxu0 0.0
    %219 = vmatprep.subr.mxu0 0.0
    %220 = vmatpush2.msra.mxu0 0.0
    %221 = vmatprep.subr.mxu0 0.0
    %222 = vmatpush2.msra.mxu0 0.0
    %223 = vmatprep.subr.mxu0 0.0
    %224 = vmatpush2.msra.mxu0 0.0
    %225 = vmatprep.subr.mxu0 0.0
    %226 = vmatpush2.msra.mxu0 0.0
    %227 = vmatprep.subr.mxu0 0.0
    %228 = vmatpush2.msra.mxu0 0.0
    %229 = vmatprep.subr.mxu0 0.0
    %230 = vmatpush2.msra.mxu0 0.0
    %231 = vmatprep.subr.mxu0 0.0
    %232 = vmatpush2.msra.mxu0 0.0
    %233 = vmatprep.subr.mxu0 0.0
    %234 = vmatpush2.msra.mxu0 0.0
    %235 = vmatprep.mubr.f32.mxu0 0.0
    %236 = vmatmul.mubr.f32.gmra.mxu0 %v169
    %v237 = vpop.f32.mrf.mxu0
    %v238 = vadd.f32 %v125, %v237
    %v239 = vpop.f32.mrf.mxu0
    %v240 = vadd.f32 %v129, %v239
    %241 = vdwg.mxu0
    %242 = vmatprep.subr.mxu0 0.0
    %243 = vmatpush1.msra.mxu0 0.0
    %244 = vmatprep.subr.mxu0 0.0
    %245 = vmatpush1.msra.mxu0 0.0
    %246 = vmatprep.subr.mxu0 0.0
    %247 = vmatpush1.msra.mxu0 0.0
    %248 = vmatprep.subr.mxu0 0.0
    %249 = vmatpush1.msra.mxu0 0.0
    %250 = vmatprep.subr.mxu0 0.0
    %251 = vmatpush1.msra.mxu0 0.0
    %252 = vmatprep.subr.mxu0 0.0
    %253 = vmatpush1.msra.mxu0 0.0
    %254 = vmatprep.subr.mxu0 0.0
    %255 = vmatpush1.msra.mxu0 0.0
    %256 = vmatprep.subr.mxu0 0.0
    %257 = vmatpush1.msra.mxu0 0.0
    %258 = vmatprep.subr.mxu0 %v112
    %259 = vmatpush1.msra.mxu0 %v111
    %260 = vmatprep.subr.mxu0 %v103
    %261 = vmatpush1.msra.mxu0 %v102
    %262 = vmatprep.subr.mxu0 %v94
    %263 = vmatpush1.msra.mxu0 %v93
    %264 = vmatprep.subr.mxu0 %v85
    %265 = vmatpush1.msra.mxu0 %v84
    %266 = vmatprep.subr.mxu0 %v76
    %267 = vmatpush1.msra.mxu0 %v75
    %268 = vmatprep.subr.mxu0 %v67
    %269 = vmatpush1.msra.mxu0 %v66
    %270 = vmatprep.subr.mxu0 %v58
    %271 = vmatpush1.msra.mxu0 %v57
    %272 = vmatprep.subr.mxu0 %v49
    %273 = vmatpush1.msra.mxu0 %v48
    %274 = vmatprep.subr.mxu0 0.0
    %275 = vmatpush2.msra.mxu0 0.0
    %276 = vmatprep.subr.mxu0 0.0
    %277 = vmatpush2.msra.mxu0 0.0
    %278 = vmatprep.subr.mxu0 0.0
    %279 = vmatpush2.msra.mxu0 0.0
    %280 = vmatprep.subr.mxu0 0.0
    %281 = vmatpush2.msra.mxu0 0.0
    %282 = vmatprep.subr.mxu0 0.0
    %283 = vmatpush2.msra.mxu0 0.0
    %284 = vmatprep.subr.mxu0 0.0
    %285 = vmatpush2.msra.mxu0 0.0
    %286 = vmatprep.subr.mxu0 0.0
    %287 = vmatpush2.msra.mxu0 0.0
    %288 = vmatprep.subr.mxu0 0.0
    %289 = vmatpush2.msra.mxu0 0.0
    %290 = vmatprep.subr.mxu0 0.0
    %291 = vmatpush2.msra.mxu0 0.0
    %292 = vmatprep.subr.mxu0 0.0
    %293 = vmatpush2.msra.mxu0 0.0
    %294 = vmatprep.subr.mxu0 0.0
    %295 = vmatpush2.msra.mxu0 0.0
    %296 = vmatprep.subr.mxu0 0.0
    %297 = vmatpush2.msra.mxu0 0.0
    %298 = vmatprep.subr.mxu0 0.0
    %299 = vmatpush2.msra.mxu0 0.0
    %300 = vmatprep.subr.mxu0 0.0
    %301 = vmatpush2.msra.mxu0 0.0
    %302 = vmatprep.subr.mxu0 0.0
    %303 = vmatpush2.msra.mxu0 0.0
    %304 = vmatprep.subr.mxu0 0.0
    %305 = vmatpush2.msra.mxu0 0.0
    %306 = vmatprep.mubr.f32.mxu0 0.0
    %307 = vmatmul.mubr.f32.gmra.mxu0 %v169
    %v308 = vpop.f32.mrf.mxu0
    %v309 = vadd.f32 %v133, %v308
    %v310 = vpop.f32.mrf.mxu0
    %v311 = vadd.f32 %v137, %v310
    %312 = vdwg.mxu0
    %313 = vmatprep.subr.mxu0 0.0
    %314 = vmatpush1.msra.mxu0 0.0
    %315 = vmatprep.subr.mxu0 0.0
    %316 = vmatpush1.msra.mxu0 0.0
    %317 = vmatprep.subr.mxu0 0.0
    %318 = vmatpush1.msra.mxu0 0.0
    %319 = vmatprep.subr.mxu0 0.0
    %320 = vmatpush1.msra.mxu0 0.0
    %321 = vmatprep.subr.mxu0 0.0
    %322 = vmatpush1.msra.mxu0 0.0
    %323 = vmatprep.subr.mxu0 0.0
    %324 = vmatpush1.msra.mxu0 0.0
    %325 = vmatprep.subr.mxu0 0.0
    %326 = vmatpush1.msra.mxu0 0.0
    %327 = vmatprep.subr.mxu0 0.0
    %328 = vmatpush1.msra.mxu0 0.0
    %329 = vmatprep.subr.mxu0 %v114
    %330 = vmatpush1.msra.mxu0 %v113
    %331 = vmatprep.subr.mxu0 %v105
    %332 = vmatpush1.msra.mxu0 %v104
    %333 = vmatprep.subr.mxu0 %v96
    %334 = vmatpush1.msra.mxu0 %v95
    %335 = vmatprep.subr.mxu0 %v87
    %336 = vmatpush1.msra.mxu0 %v86
    %337 = vmatprep.subr.mxu0 %v78
    %338 = vmatpush1.msra.mxu0 %v77
    %339 = vmatprep.subr.mxu0 %v69
    %340 = vmatpush1.msra.mxu0 %v68
    %341 = vmatprep.subr.mxu0 %v60
    %342 = vmatpush1.msra.mxu0 %v59
    %343 = vmatprep.subr.mxu0 %v51
    %344 = vmatpush1.msra.mxu0 %v50
    %345 = vmatprep.subr.mxu0 0.0
    %346 = vmatpush2.msra.mxu0 0.0
    %347 = vmatprep.subr.mxu0 0.0
    %348 = vmatpush2.msra.mxu0 0.0
    %349 = vmatprep.subr.mxu0 0.0
    %350 = vmatpush2.msra.mxu0 0.0
    %351 = vmatprep.subr.mxu0 0.0
    %352 = vmatpush2.msra.mxu0 0.0
    %353 = vmatprep.subr.mxu0 0.0
    %354 = vmatpush2.msra.mxu0 0.0
    %355 = vmatprep.subr.mxu0 0.0
    %356 = vmatpush2.msra.mxu0 0.0
    %357 = vmatprep.subr.mxu0 0.0
    %358 = vmatpush2.msra.mxu0 0.0
    %359 = vmatprep.subr.mxu0 0.0
    %360 = vmatpush2.msra.mxu0 0.0
    %361 = vmatprep.subr.mxu0 0.0
    %362 = vmatpush2.msra.mxu0 0.0
    %363 = vmatprep.subr.mxu0 0.0
    %364 = vmatpush2.msra.mxu0 0.0
    %365 = vmatprep.subr.mxu0 0.0
    %366 = vmatpush2.msra.mxu0 0.0
    %367 = vmatprep.subr.mxu0 0.0
    %368 = vmatpush2.msra.mxu0 0.0
    %369 = vmatprep.subr.mxu0 0.0
    %370 = vmatpush2.msra.mxu0 0.0
    %371 = vmatprep.subr.mxu0 0.0
    %372 = vmatpush2.msra.mxu0 0.0
    %373 = vmatprep.subr.mxu0 0.0
    %374 = vmatpush2.msra.mxu0 0.0
    %375 = vmatprep.subr.mxu0 0.0
    %376 = vmatpush2.msra.mxu0 0.0
    %377 = vmatprep.mubr.f32.mxu0 0.0
    %378 = vmatmul.mubr.f32.gmra.mxu0 %v169
    %v379 = vpop.f32.mrf.mxu0
    %v380 = vadd.f32 %v141, %v379
    %v381 = vpop.f32.mrf.mxu0
    %v382 = vadd.f32 %v145, %v381
    %383 = vdwg.mxu0
    %384 = vmatprep.subr.mxu0 0.0
    %385 = vmatpush1.msra.mxu0 0.0
    %386 = vmatprep.subr.mxu0 0.0
    %387 = vmatpush1.msra.mxu0 0.0
    %388 = vmatprep.subr.mxu0 0.0
    %389 = vmatpush1.msra.mxu0 0.0
    %390 = vmatprep.subr.mxu0 0.0
    %391 = vmatpush1.msra.mxu0 0.0
    %392 = vmatprep.subr.mxu0 0.0
    %393 = vmatpush1.msra.mxu0 0.0
    %394 = vmatprep.subr.mxu0 0.0
    %395 = vmatpush1.msra.mxu0 0.0
    %396 = vmatprep.subr.mxu0 0.0
    %397 = vmatpush1.msra.mxu0 0.0
    %398 = vmatprep.subr.mxu0 0.0
    %399 = vmatpush1.msra.mxu0 0.0
    %400 = vmatprep.subr.mxu0 %v116
    %401 = vmatpush1.msra.mxu0 %v115
    %402 = vmatprep.subr.mxu0 %v107
    %403 = vmatpush1.msra.mxu0 %v106
    %404 = vmatprep.subr.mxu0 %v98
    %405 = vmatpush1.msra.mxu0 %v97
    %406 = vmatprep.subr.mxu0 %v89
    %407 = vmatpush1.msra.mxu0 %v88
    %408 = vmatprep.subr.mxu0 %v80
    %409 = vmatpush1.msra.mxu0 %v79
    %410 = vmatprep.subr.mxu0 %v71
    %411 = vmatpush1.msra.mxu0 %v70
    %412 = vmatprep.subr.mxu0 %v62
    %413 = vmatpush1.msra.mxu0 %v61
    %414 = vmatprep.subr.mxu0 %v53
    %415 = vmatpush1.msra.mxu0 %v52
    %416 = vmatprep.subr.mxu0 0.0
    %417 = vmatpush2.msra.mxu0 0.0
    %418 = vmatprep.subr.mxu0 0.0
    %419 = vmatpush2.msra.mxu0 0.0
    %420 = vmatprep.subr.mxu0 0.0
    %421 = vmatpush2.msra.mxu0 0.0
    %422 = vmatprep.subr.mxu0 0.0
    %423 = vmatpush2.msra.mxu0 0.0
    %424 = vmatprep.subr.mxu0 0.0
    %425 = vmatpush2.msra.mxu0 0.0
    %426 = vmatprep.subr.mxu0 0.0
    %427 = vmatpush2.msra.mxu0 0.0
    %428 = vmatprep.subr.mxu0 0.0
    %429 = vmatpush2.msra.mxu0 0.0
    %430 = vmatprep.subr.mxu0 0.0
    %431 = vmatpush2.msra.mxu0 0.0
    %432 = vmatprep.subr.mxu0 0.0
    %433 = vmatpush2.msra.mxu0 0.0
    %434 = vmatprep.subr.mxu0 0.0
    %435 = vmatpush2.msra.mxu0 0.0
    %436 = vmatprep.subr.mxu0 0.0
    %437 = vmatpush2.msra.mxu0 0.0
    %438 = vmatprep.subr.mxu0 0.0
    %439 = vmatpush2.msra.mxu0 0.0
    %440 = vmatprep.subr.mxu0 0.0
    %441 = vmatpush2.msra.mxu0 0.0
    %442 = vmatprep.subr.mxu0 0.0
    %443 = vmatpush2.msra.mxu0 0.0
    %444 = vmatprep.subr.mxu0 0.0
    %445 = vmatpush2.msra.mxu0 0.0
    %446 = vmatprep.subr.mxu0 0.0
    %447 = vmatpush2.msra.mxu0 0.0
    %448 = vmatprep.mubr.f32.mxu0 0.0
    %449 = vmatmul.mubr.f32.gmra.mxu0 %v169
    %v450 = vpop.f32.mrf.mxu0
    %v451 = vadd.f32 %v149, %v450
    %v452 = vpop.f32.mrf.mxu0
    %v453 = vadd.f32 %v153, %v452
    %454 = vdwg.mxu0
    %455 = vmatprep.subr.mxu0 0.0
    %456 = vmatpush1.msra.mxu0 0.0
    %457 = vmatprep.subr.mxu0 0.0
    %458 = vmatpush1.msra.mxu0 0.0
    %459 = vmatprep.subr.mxu0 0.0
    %460 = vmatpush1.msra.mxu0 0.0
    %461 = vmatprep.subr.mxu0 0.0
    %462 = vmatpush1.msra.mxu0 0.0
    %463 = vmatprep.subr.mxu0 0.0
    %464 = vmatpush1.msra.mxu0 0.0
    %465 = vmatprep.subr.mxu0 0.0
    %466 = vmatpush1.msra.mxu0 0.0
    %467 = vmatprep.subr.mxu0 0.0
    %468 = vmatpush1.msra.mxu0 0.0
    %469 = vmatprep.subr.mxu0 0.0
    %470 = vmatpush1.msra.mxu0 0.0
    %471 = vmatprep.subr.mxu0 0.0
    %472 = vmatpush1.msra.mxu0 %v117
    %473 = vmatprep.subr.mxu0 0.0
    %474 = vmatpush1.msra.mxu0 %v108
    %475 = vmatprep.subr.mxu0 0.0
    %476 = vmatpush1.msra.mxu0 %v99
    %477 = vmatprep.subr.mxu0 0.0
    %478 = vmatpush1.msra.mxu0 %v90
    %479 = vmatprep.subr.mxu0 0.0
    %480 = vmatpush1.msra.mxu0 %v81
    %481 = vmatprep.subr.mxu0 0.0
    %482 = vmatpush1.msra.mxu0 %v72
    %483 = vmatprep.subr.mxu0 0.0
    %484 = vmatpush1.msra.mxu0 %v63
    %485 = vmatprep.subr.mxu0 0.0
    %486 = vmatpush1.msra.mxu0 %v54
    %487 = vmatprep.subr.mxu0 0.0
    %488 = vmatpush2.msra.mxu0 0.0
    %489 = vmatprep.subr.mxu0 0.0
    %490 = vmatpush2.msra.mxu0 0.0
    %491 = vmatprep.subr.mxu0 0.0
    %492 = vmatpush2.msra.mxu0 0.0
    %493 = vmatprep.subr.mxu0 0.0
    %494 = vmatpush2.msra.mxu0 0.0
    %495 = vmatprep.subr.mxu0 0.0
    %496 = vmatpush2.msra.mxu0 0.0
    %497 = vmatprep.subr.mxu0 0.0
    %498 = vmatpush2.msra.mxu0 0.0
    %499 = vmatprep.subr.mxu0 0.0
    %500 = vmatpush2.msra.mxu0 0.0
    %501 = vmatprep.subr.mxu0 0.0
    %502 = vmatpush2.msra.mxu0 0.0
    %503 = vmatprep.subr.mxu0 0.0
    %504 = vmatpush2.msra.mxu0 0.0
    %505 = vmatprep.subr.mxu0 0.0
    %506 = vmatpush2.msra.mxu0 0.0
    %507 = vmatprep.subr.mxu0 0.0
    %508 = vmatpush2.msra.mxu0 0.0
    %509 = vmatprep.subr.mxu0 0.0
    %510 = vmatpush2.msra.mxu0 0.0
    %511 = vmatprep.subr.mxu0 0.0
    %512 = vmatpush2.msra.mxu0 0.0
    %513 = vmatprep.subr.mxu0 0.0
    %514 = vmatpush2.msra.mxu0 0.0
    %515 = vmatprep.subr.mxu0 0.0
    %516 = vmatpush2.msra.mxu0 0.0
    %517 = vmatprep.subr.mxu0 0.0
    %518 = vmatpush2.msra.mxu0 0.0
    %519 = vmatprep.mubr.f32.mxu0 0.0
    %520 = vmatmul.mubr.f32.gmra.mxu0 %v169
    %v521 = vpop.f32.mrf.mxu0
    %v522 = vadd.f32 %v157, %v521
    %v523 = vpop.f32.mrf.mxu0
    %524 = vdwg.mxu0
    %vm525 = vcmask 1043456
    %v526 = vsel %vm525, %v238, 0.0
    %v527 = vrot.slane %v526, 4
    %v528 = vadd.f32 %v526, %v527
    %v529 = vrot.slane %v528, 2
    %v530 = vadd.f32 %v528, %v529
    %v531 = vrot.slane %v530, 1
    %v532 = vadd.f32 %v530, %v531
    %v533 = vsel %vm525, %v240, 0.0
    %v534 = vrot.slane %v533, 4
    %v535 = vadd.f32 %v533, %v534
    %v536 = vrot.slane %v535, 2
    %v537 = vadd.f32 %v535, %v536
    %v538 = vrot.slane %v537, 1
    %v539 = vadd.f32 %v537, %v538
    %v540 = vsel %vm525, %v309, 0.0
    %v541 = vrot.slane %v540, 4
    %v542 = vadd.f32 %v540, %v541
    %v543 = vrot.slane %v542, 2
    %v544 = vadd.f32 %v542, %v543
    %v545 = vrot.slane %v544, 1
    %v546 = vadd.f32 %v544, %v545
    %v547 = vsel %vm525, %v311, 0.0
    %v548 = vrot.slane %v547, 4
    %v549 = vadd.f32 %v547, %v548
    %v550 = vrot.slane %v549, 2
    %v551 = vadd.f32 %v549, %v550
    %v552 = vrot.slane %v551, 1
    %v553 = vadd.f32 %v551, %v552
    %v554 = vsel %vm525, %v380, 0.0
    %v555 = vrot.slane %v554, 4
    %v556 = vadd.f32 %v554, %v555
    %v557 = vrot.slane %v556, 2
    %v558 = vadd.f32 %v556, %v557
    %v559 = vrot.slane %v558, 1
    %v560 = vadd.f32 %v558, %v559
    %v561 = vsel %vm525, %v382, 0.0
    %v562 = vrot.slane %v561, 4
    %v563 = vadd.f32 %v561, %v562
    %v564 = vrot.slane %v563, 2
    %v565 = vadd.f32 %v563, %v564
    %v566 = vrot.slane %v565, 1
    %v567 = vadd.f32 %v565, %v566
    %v568 = vsel %vm525, %v451, 0.0
    %v569 = vrot.slane %v568, 4
    %v570 = vadd.f32 %v568, %v569
    %v571 = vrot.slane %v570, 2
    %v572 = vadd.f32 %v570, %v571
    %v573 = vrot.slane %v572, 1
    %v574 = vadd.f32 %v572, %v573
    %v575 = vsel %vm525, %v453, 0.0
    %v576 = vrot.slane %v575, 4
    %v577 = vadd.f32 %v575, %v576
    %v578 = vrot.slane %v577, 2
    %v579 = vadd.f32 %v577, %v578
    %v580 = vrot.slane %v579, 1
    %v581 = vadd.f32 %v579, %v580
    %vm582 = vcmask 945152
    %v583 = vsel %vm582, %v522, 0.0
    %v584 = vrot.slane %v583, 4
    %v585 = vadd.f32 %v583, %v584
    %v586 = vrot.slane %v585, 2
    %v587 = vadd.f32 %v585, %v586
    %v588 = vrot.slane %v587, 1
    %v589 = vadd.f32 %v587, %v588
    %v590 = vmul.f32 %v238, %v238
    %v591 = vmul.f32 %v240, %v240
    %v592 = vmul.f32 %v309, %v309
    %v593 = vmul.f32 %v311, %v311
    %v594 = vmul.f32 %v380, %v380
    %v595 = vmul.f32 %v382, %v382
    %v596 = vmul.f32 %v451, %v451
    %v597 = vmul.f32 %v453, %v453
    %v598 = vmul.f32 %v522, %v522
    %v599 = vsel %vm525, %v590, 0.0
    %v600 = vrot.slane %v599, 4
    %v601 = vadd.f32 %v599, %v600
    %v602 = vrot.slane %v601, 2
    %v603 = vadd.f32 %v601, %v602
    %v604 = vrot.slane %v603, 1
    %v605 = vadd.f32 %v603, %v604
    %v606 = vsel %vm525, %v591, 0.0
    %v607 = vrot.slane %v606, 4
    %v608 = vadd.f32 %v606, %v607
    %v609 = vrot.slane %v608, 2
    %v610 = vadd.f32 %v608, %v609
    %v611 = vrot.slane %v610, 1
    %v612 = vadd.f32 %v610, %v611
    %v613 = vsel %vm525, %v592, 0.0
    %v614 = vrot.slane %v613, 4
    %v615 = vadd.f32 %v613, %v614
    %v616 = vrot.slane %v615, 2
    %v617 = vadd.f32 %v615, %v616
    %v618 = vrot.slane %v617, 1
    %v619 = vadd.f32 %v617, %v618
    %v620 = vsel %vm525, %v593, 0.0
    %v621 = vrot.slane %v620, 4
    %v622 = vadd.f32 %v620, %v621
    %v623 = vrot.slane %v622, 2
    %v624 = vadd.f32 %v622, %v623
    %v625 = vrot.slane %v624, 1
    %v626 = vadd.f32 %v624, %v625
    %v627 = vsel %vm525, %v594, 0.0
    %v628 = vrot.slane %v627, 4
    %v629 = vadd.f32 %v627, %v628
    %v630 = vrot.slane %v629, 2
    %v631 = vadd.f32 %v629, %v630
    %v632 = vrot.slane %v631, 1
    %v633 = vadd.f32 %v631, %v632
    %v634 = vsel %vm525, %v595, 0.0
    %v635 = vrot.slane %v634, 4
    %v636 = vadd.f32 %v634, %v635
    %v637 = vrot.slane %v636, 2
    %v638 = vadd.f32 %v636, %v637
    %v639 = vrot.slane %v638, 1
    %v640 = vadd.f32 %v638, %v639
    %v641 = vsel %vm525, %v596, 0.0
    %v642 = vrot.slane %v641, 4
    %v643 = vadd.f32 %v641, %v642
    %v644 = vrot.slane %v643, 2
    %v645 = vadd.f32 %v643, %v644
    %v646 = vrot.slane %v645, 1
    %v647 = vadd.f32 %v645, %v646
    %v648 = vsel %vm525, %v597, 0.0
    %v649 = vrot.slane %v648, 4
    %v650 = vadd.f32 %v648, %v649
    %v651 = vrot.slane %v650, 2
    %v652 = vadd.f32 %v650, %v651
    %v653 = vrot.slane %v652, 1
    %v654 = vadd.f32 %v652, %v653
    %v655 = vsel %vm582, %v598, 0.0
    %v656 = vrot.slane %v655, 4
    %v657 = vadd.f32 %v655, %v656
    %v658 = vrot.slane %v657, 2
    %v659 = vadd.f32 %v657, %v658
    %v660 = vrot.slane %v659, 1
    %v661 = vadd.f32 %v659, %v660
    %vm662 = vcmask 1040384
    %v663 = vsel %vm662, %v532, %v605
    %v664 = vsel %vm662, %v539, %v612
    %v665 = vsel %vm662, %v546, %v619
    %v666 = vsel %vm662, %v553, %v626
    %v667 = vsel %vm662, %v560, %v633
    %v668 = vsel %vm662, %v567, %v640
    %v669 = vsel %vm662, %v574, %v647
    %v670 = vsel %vm662, %v581, %v654
    %v671 = vsel %vm662, %v589, %v661
    %v672 = vld [vmem:[%s5] sm:$0xff]
    %v673 = vld [vmem:[%s5 + $0x8] sm:$0xff]
    %v674 = vld [vmem:[%s5 + $0x10] sm:$0xff]
    %v675 = vld [vmem:[%s5 + $0x18] sm:$0xff]
    %v676 = vld [vmem:[%s5 + $0x20] sm:$0xff]
    %v677 = vld [vmem:[%s5 + $0x28] sm:$0xff]
    %v678 = vld [vmem:[%s5 + $0x30] sm:$0xff]
    %v679 = vld [vmem:[%s5 + $0x38] sm:$0xff]
    %v680 = vld [vmem:[%s5 + $0x40] sm:$0xff]
    %v681 = vld [vmem:[%s5 + $0x48] sm:$0xff]
    %v682 = vld [vmem:[%s5 + $0x50] sm:$0xff]
    %v683 = vld [vmem:[%s5 + $0x58] sm:$0xff]
    %v684 = vld [vmem:[%s5 + $0x60] sm:$0xff]
    %v685 = vld [vmem:[%s5 + $0x68] sm:$0xff]
    %v686 = vld [vmem:[%s5 + $0x70] sm:$0xff]
    %v687 = vld [vmem:[%s5 + $0x78] sm:$0xff]
    %v688 = vld [vmem:[%s5 + $0x80] sm:$0xff]
    %v689 = vld [vmem:[%s5 + $0x88] sm:$0xff]
    %v690 = vld [vmem:[%s5 + $0x90] sm:$0xff]
    %v691 = vld [vmem:[%s5 + $0x98] sm:$0xff]
    %v692 = vld [vmem:[%s5 + $0xa0] sm:$0xff]
    %v693 = vld [vmem:[%s5 + $0xa8] sm:$0xff]
    %v694 = vld [vmem:[%s5 + $0xb0] sm:$0xff]
    %v695 = vld [vmem:[%s5 + $0xb8] sm:$0xff]
    %v696 = vld [vmem:[%s5 + $0xc0] sm:$0xff]
    %v697 = vld [vmem:[%s5 + $0xc8] sm:$0xff]
    %v698 = vld [vmem:[%s5 + $0xd0] sm:$0xff]
    %v699 = vld [vmem:[%s5 + $0xd8] sm:$0xff]
    %v700 = vld [vmem:[%s5 + $0xe0] sm:$0xff]
    %v701 = vld [vmem:[%s5 + $0xe8] sm:$0xff]
    %v702 = vld [vmem:[%s5 + $0xf0] sm:$0xff]
    %v703 = vld [vmem:[%s5 + $0xf8] sm:$0xff]
    %v704 = vld [vmem:[%s5 + $0x100] sm:$0xff]
    %v705 = vld [vmem:[%s5 + $0x108] sm:$0xff]
    %v706 = vld [vmem:[%s5 + $0x110] sm:$0xff]
    %v707 = vld [vmem:[%s5 + $0x118] sm:$0xff]
    %v708 = vld [vmem:[%s5 + $0x120] sm:$0xff]
    %v709 = vld [vmem:[%s5 + $0x128] sm:$0xff]
    %v710 = vld [vmem:[%s5 + $0x130] sm:$0xff]
    %v711 = vld [vmem:[%s5 + $0x138] sm:$0xff]
    %v712 = vld [vmem:[%s5 + $0x140] sm:$0xff]
    %v713 = vld [vmem:[%s5 + $0x148] sm:$0xff]
    %v714 = vld [vmem:[%s5 + $0x150] sm:$0xff]
    %v715 = vld [vmem:[%s5 + $0x158] sm:$0xff]
    %v716 = vld [vmem:[%s5 + $0x160] sm:$0xff]
    %v717 = vld [vmem:[%s5 + $0x168] sm:$0xff]
    %v718 = vld [vmem:[%s5 + $0x170] sm:$0xff]
    %v719 = vld [vmem:[%s5 + $0x178] sm:$0xff]
    %v720 = vld [vmem:[%s5 + $0x180] sm:$0xff]
    %v721 = vld [vmem:[%s5 + $0x188] sm:$0xff]
    %v722 = vld [vmem:[%s5 + $0x190] sm:$0xff]
    %v723 = vld [vmem:[%s5 + $0x198] sm:$0xff]
    %v724 = vld [vmem:[%s5 + $0x1a0] sm:$0xff]
    %v725 = vld [vmem:[%s5 + $0x1a8] sm:$0xff]
    %v726 = vld [vmem:[%s5 + $0x1b0] sm:$0xff]
    %v727 = vld [vmem:[%s5 + $0x1b8] sm:$0xff]
    %v728 = vld [vmem:[%s5 + $0x1c0] sm:$0xff]
    %v729 = vld [vmem:[%s5 + $0x1c8] sm:$0xff]
    %v730 = vld [vmem:[%s5 + $0x1d0] sm:$0xff]
    %v731 = vld [vmem:[%s5 + $0x1d8] sm:$0xff]
    %v732 = vld [vmem:[%s5 + $0x1e0] sm:$0xff]
    %v733 = vld [vmem:[%s5 + $0x1e8] sm:$0xff]
    %v734 = vld [vmem:[%s5 + $0x1f0] sm:$0xff]
    %v735 = vld [vmem:[%s5 + $0x1f8] sm:$0xff]
    %v736 = vld [vmem:[%s5 + $0x200] sm:$0xff]
    %v737 = vld [vmem:[%s5 + $0x208] sm:$0xff]
    %v738 = vld [vmem:[%s5 + $0x210] sm:$0xff]
    %v739 = vld [vmem:[%s5 + $0x218] sm:$0xff]
    %v740 = vld [vmem:[%s5 + $0x220] sm:$0xff]
    %v741 = vld [vmem:[%s5 + $0x228] sm:$0xff]
    %v742 = vld [vmem:[%s5 + $0x230] sm:$0xff]
    %v743 = vld [vmem:[%s5 + $0x238] sm:$0xff]
    %v744 = vld [vmem:[%s5 + $0x240] sm:$0xff]
    %v745 = vld [vmem:[%s5 + $0x248] sm:$0xff]
    %v746 = vld [vmem:[%s5 + $0x250] sm:$0xff]
    %v747 = vld [vmem:[%s5 + $0x258] sm:$0xff]
    %v748 = vld [vmem:[%s5 + $0x260] sm:$0xff]
    %v749 = vld [vmem:[%s5 + $0x268] sm:$0xff]
    %v750 = vld [vmem:[%s5 + $0x270] sm:$0xff]
    %v751 = vld [vmem:[%s5 + $0x278] sm:$0xff]
    %v752 = vld [vmem:[%s5 + $0x280] sm:$0xff]
    %v753 = vld [vmem:[%s5 + $0x288] sm:$0xff]
    %v754 = vld [vmem:[%s5 + $0x290] sm:$0xff]
    %v755 = vld [vmem:[%s5 + $0x298] sm:$0xff]
    %v756 = vld [vmem:[%s5 + $0x2a0] sm:$0xff]
    %v757 = vld [vmem:[%s5 + $0x2a8] sm:$0xff]
    %v758 = vld [vmem:[%s5 + $0x2b0] sm:$0xff]
    %v759 = vld [vmem:[%s5 + $0x2b8] sm:$0xff]
    %v760 = vld [vmem:[%s5 + $0x2c0] sm:$0xff]
    %v761 = vld [vmem:[%s5 + $0x2c8] sm:$0xff]
    %v762 = vld [vmem:[%s5 + $0x2d0] sm:$0xff]
    %v763 = vld [vmem:[%s5 + $0x2d8] sm:$0xff]
    %v764 = vld [vmem:[%s5 + $0x2e0] sm:$0xff]
    %v765 = vld [vmem:[%s5 + $0x2e8] sm:$0xff]
    %v766 = vld [vmem:[%s5 + $0x2f0] sm:$0xff]
    %v767 = vld [vmem:[%s5 + $0x2f8] sm:$0xff]
    %v768 = vld [vmem:[%s5 + $0x300] sm:$0xff]
    %v769 = vld [vmem:[%s5 + $0x308] sm:$0xff]
    %v770 = vld [vmem:[%s5 + $0x310] sm:$0xff]
    %v771 = vld [vmem:[%s5 + $0x318] sm:$0xff]
    %v772 = vld [vmem:[%s5 + $0x320] sm:$0xff]
    %v773 = vld [vmem:[%s5 + $0x328] sm:$0xff]
    %v774 = vld [vmem:[%s5 + $0x330] sm:$0xff]
    %v775 = vld [vmem:[%s5 + $0x338] sm:$0xff]
    %v776 = vld [vmem:[%s5 + $0x340] sm:$0xff]
    %v777 = vld [vmem:[%s5 + $0x348] sm:$0xff]
    %v778 = vld [vmem:[%s5 + $0x350] sm:$0xff]
    %v779 = vld [vmem:[%s5 + $0x358] sm:$0xff]
    %v780 = vld [vmem:[%s5 + $0x360] sm:$0xff]
    %v781 = vld [vmem:[%s5 + $0x368] sm:$0xff]
    %v782 = vld [vmem:[%s5 + $0x370] sm:$0xff]
    %v783 = vld [vmem:[%s5 + $0x378] sm:$0xff]
    %v784 = vld [vmem:[%s5 + $0x380] sm:$0xff]
    %v785 = vld [vmem:[%s5 + $0x388] sm:$0xff]
    %v786 = vld [vmem:[%s5 + $0x390] sm:$0xff]
    %v787 = vld [vmem:[%s5 + $0x398] sm:$0xff]
    %v788 = vld [vmem:[%s5 + $0x3a0] sm:$0xff]
    %v789 = vld [vmem:[%s5 + $0x3a8] sm:$0xff]
    %v790 = vld [vmem:[%s5 + $0x3b0] sm:$0xff]
    %v791 = vld [vmem:[%s5 + $0x3b8] sm:$0xff]
    %v792 = vld [vmem:[%s5 + $0x3c0] sm:$0xff]
    %v793 = vld [vmem:[%s5 + $0x3c8] sm:$0xff]
    %v794 = vld [vmem:[%s5 + $0x3d0] sm:$0xff]
    %v795 = vld [vmem:[%s5 + $0x3d8] sm:$0xff]
    %v796 = vld [vmem:[%s5 + $0x3e0] sm:$0xff]
    %v797 = vld [vmem:[%s5 + $0x3e8] sm:$0xff]
    %v798 = vld [vmem:[%s5 + $0x3f0] sm:$0xff]
    %v799 = vld [vmem:[%s5 + $0x3f8] sm:$0xff]
    %v800 = vld [vmem:[%s5 + $0x400] sm:$0xff]
    %v801 = vld [vmem:[%s5 + $0x408] sm:$0xff]
    %v802 = vld [vmem:[%s5 + $0x410] sm:$0xff]
    %v803 = vld [vmem:[%s5 + $0x418] sm:$0xff]
    %v804 = vld [vmem:[%s5 + $0x420] sm:$0xff]
    %v805 = vld [vmem:[%s5 + $0x428] sm:$0xff]
    %v806 = vld [vmem:[%s5 + $0x430] sm:$0xff]
    %v807 = vld [vmem:[%s5 + $0x438] sm:$0xff]
    %v808 = vld [vmem:[%s5 + $0x440] sm:$0xff]
    %v809 = vld [vmem:[%s5 + $0x448] sm:$0xff]
    %v810 = vld [vmem:[%s5 + $0x450] sm:$0xff]
    %v811 = vld [vmem:[%s5 + $0x458] sm:$0xff]
    %v812 = vld [vmem:[%s5 + $0x460] sm:$0xff]
    %v813 = vld [vmem:[%s5 + $0x468] sm:$0xff]
    %v814 = vld [vmem:[%s5 + $0x470] sm:$0xf]
    %vm815 = vcmask 949248
    %v817 = vsel %vm815, %v671, 0
    %v820 = vsel %vm525, %v814, 0
    %822 = vmatprep.subr.mxu0 0.0
    %823 = vmatpush1.msra.mxu0 %v687
    %824 = vmatprep.subr.mxu0 0.0
    %825 = vmatpush1.msra.mxu0 %v686
    %826 = vmatprep.subr.mxu0 0.0
    %827 = vmatpush1.msra.mxu0 %v685
    %828 = vmatprep.subr.mxu0 0.0
    %829 = vmatpush1.msra.mxu0 %v684
    %830 = vmatprep.subr.mxu0 0.0
    %831 = vmatpush1.msra.mxu0 %v683
    %832 = vmatprep.subr.mxu0 0.0
    %833 = vmatpush1.msra.mxu0 %v682
    %834 = vmatprep.subr.mxu0 0.0
    %835 = vmatpush1.msra.mxu0 %v681
    %836 = vmatprep.subr.mxu0 0.0
    %837 = vmatpush1.msra.mxu0 %v680
    %838 = vmatprep.subr.mxu0 0.0
    %839 = vmatpush1.msra.mxu0 %v679
    %840 = vmatprep.subr.mxu0 0.0
    %841 = vmatpush1.msra.mxu0 %v678
    %842 = vmatprep.subr.mxu0 0.0
    %843 = vmatpush1.msra.mxu0 %v677
    %844 = vmatprep.subr.mxu0 0.0
    %845 = vmatpush1.msra.mxu0 %v676
    %846 = vmatprep.subr.mxu0 0.0
    %847 = vmatpush1.msra.mxu0 %v675
    %848 = vmatprep.subr.mxu0 0.0
    %849 = vmatpush1.msra.mxu0 %v674
    %850 = vmatprep.subr.mxu0 0.0
    %851 = vmatpush1.msra.mxu0 %v673
    %852 = vmatprep.subr.mxu0 0.0
    %853 = vmatpush1.msra.mxu0 %v672
    %854 = vmatprep.subr.mxu0 0.0
    %855 = vmatpush2.msra.mxu0 %v703
    %856 = vmatprep.subr.mxu0 0.0
    %857 = vmatpush2.msra.mxu0 %v702
    %858 = vmatprep.subr.mxu0 0.0
    %859 = vmatpush2.msra.mxu0 %v701
    %860 = vmatprep.subr.mxu0 0.0
    %861 = vmatpush2.msra.mxu0 %v700
    %862 = vmatprep.subr.mxu0 0.0
    %863 = vmatpush2.msra.mxu0 %v699
    %864 = vmatprep.subr.mxu0 0.0
    %865 = vmatpush2.msra.mxu0 %v698
    %866 = vmatprep.subr.mxu0 0.0
    %867 = vmatpush2.msra.mxu0 %v697
    %868 = vmatprep.subr.mxu0 0.0
    %869 = vmatpush2.msra.mxu0 %v696
    %870 = vmatprep.subr.mxu0 0.0
    %871 = vmatpush2.msra.mxu0 %v695
    %872 = vmatprep.subr.mxu0 0.0
    %873 = vmatpush2.msra.mxu0 %v694
    %874 = vmatprep.subr.mxu0 0.0
    %875 = vmatpush2.msra.mxu0 %v693
    %876 = vmatprep.subr.mxu0 0.0
    %877 = vmatpush2.msra.mxu0 %v692
    %878 = vmatprep.subr.mxu0 0.0
    %879 = vmatpush2.msra.mxu0 %v691
    %880 = vmatprep.subr.mxu0 0.0
    %881 = vmatpush2.msra.mxu0 %v690
    %882 = vmatprep.subr.mxu0 0.0
    %883 = vmatpush2.msra.mxu0 %v689
    %884 = vmatprep.subr.mxu0 0.0
    %885 = vmatpush2.msra.mxu0 %v688
    %886 = vmatprep.mubr.f32.mxu0 %v664
    %887 = vmatmul.mubr.f32.gmra.mxu0 %v663
    %v888 = vpop.f32.mrf.mxu0
    %v889 = vadd.f32 0.0, %v888
    %v890 = vpop.f32.mrf.mxu0
    %891 = vdwg.mxu0
    %892 = vmatprep.subr.mxu0 0.0
    %893 = vmatpush1.msra.mxu0 %v719
    %894 = vmatprep.subr.mxu0 0.0
    %895 = vmatpush1.msra.mxu0 %v718
    %896 = vmatprep.subr.mxu0 0.0
    %897 = vmatpush1.msra.mxu0 %v717
    %898 = vmatprep.subr.mxu0 0.0
    %899 = vmatpush1.msra.mxu0 %v716
    %900 = vmatprep.subr.mxu0 0.0
    %901 = vmatpush1.msra.mxu0 %v715
    %902 = vmatprep.subr.mxu0 0.0
    %903 = vmatpush1.msra.mxu0 %v714
    %904 = vmatprep.subr.mxu0 0.0
    %905 = vmatpush1.msra.mxu0 %v713
    %906 = vmatprep.subr.mxu0 0.0
    %907 = vmatpush1.msra.mxu0 %v712
    %908 = vmatprep.subr.mxu0 0.0
    %909 = vmatpush1.msra.mxu0 %v711
    %910 = vmatprep.subr.mxu0 0.0
    %911 = vmatpush1.msra.mxu0 %v710
    %912 = vmatprep.subr.mxu0 0.0
    %913 = vmatpush1.msra.mxu0 %v709
    %914 = vmatprep.subr.mxu0 0.0
    %915 = vmatpush1.msra.mxu0 %v708
    %916 = vmatprep.subr.mxu0 0.0
    %917 = vmatpush1.msra.mxu0 %v707
    %918 = vmatprep.subr.mxu0 0.0
    %919 = vmatpush1.msra.mxu0 %v706
    %920 = vmatprep.subr.mxu0 0.0
    %921 = vmatpush1.msra.mxu0 %v705
    %922 = vmatprep.subr.mxu0 0.0
    %923 = vmatpush1.msra.mxu0 %v704
    %924 = vmatprep.subr.mxu0 0.0
    %925 = vmatpush2.msra.mxu0 %v735
    %926 = vmatprep.subr.mxu0 0.0
    %927 = vmatpush2.msra.mxu0 %v734
    %928 = vmatprep.subr.mxu0 0.0
    %929 = vmatpush2.msra.mxu0 %v733
    %930 = vmatprep.subr.mxu0 0.0
    %931 = vmatpush2.msra.mxu0 %v732
    %932 = vmatprep.subr.mxu0 0.0
    %933 = vmatpush2.msra.mxu0 %v731
    %934 = vmatprep.subr.mxu0 0.0
    %935 = vmatpush2.msra.mxu0 %v730
    %936 = vmatprep.subr.mxu0 0.0
    %937 = vmatpush2.msra.mxu0 %v729
    %938 = vmatprep.subr.mxu0 0.0
    %939 = vmatpush2.msra.mxu0 %v728
    %940 = vmatprep.subr.mxu0 0.0
    %941 = vmatpush2.msra.mxu0 %v727
    %942 = vmatprep.subr.mxu0 0.0
    %943 = vmatpush2.msra.mxu0 %v726
    %944 = vmatprep.subr.mxu0 0.0
    %945 = vmatpush2.msra.mxu0 %v725
    %946 = vmatprep.subr.mxu0 0.0
    %947 = vmatpush2.msra.mxu0 %v724
    %948 = vmatprep.subr.mxu0 0.0
    %949 = vmatpush2.msra.mxu0 %v723
    %950 = vmatprep.subr.mxu0 0.0
    %951 = vmatpush2.msra.mxu0 %v722
    %952 = vmatprep.subr.mxu0 0.0
    %953 = vmatpush2.msra.mxu0 %v721
    %954 = vmatprep.subr.mxu0 0.0
    %955 = vmatpush2.msra.mxu0 %v720
    %956 = vmatprep.mubr.f32.mxu0 %v666
    %957 = vmatmul.mubr.f32.gmra.mxu0 %v665
    %v958 = vpop.f32.mrf.mxu0
    %v959 = vadd.f32 %v889, %v958
    %v960 = vpop.f32.mrf.mxu0
    %961 = vdwg.mxu0
    %962 = vmatprep.subr.mxu0 0.0
    %963 = vmatpush1.msra.mxu0 %v751
    %964 = vmatprep.subr.mxu0 0.0
    %965 = vmatpush1.msra.mxu0 %v750
    %966 = vmatprep.subr.mxu0 0.0
    %967 = vmatpush1.msra.mxu0 %v749
    %968 = vmatprep.subr.mxu0 0.0
    %969 = vmatpush1.msra.mxu0 %v748
    %970 = vmatprep.subr.mxu0 0.0
    %971 = vmatpush1.msra.mxu0 %v747
    %972 = vmatprep.subr.mxu0 0.0
    %973 = vmatpush1.msra.mxu0 %v746
    %974 = vmatprep.subr.mxu0 0.0
    %975 = vmatpush1.msra.mxu0 %v745
    %976 = vmatprep.subr.mxu0 0.0
    %977 = vmatpush1.msra.mxu0 %v744
    %978 = vmatprep.subr.mxu0 0.0
    %979 = vmatpush1.msra.mxu0 %v743
    %980 = vmatprep.subr.mxu0 0.0
    %981 = vmatpush1.msra.mxu0 %v742
    %982 = vmatprep.subr.mxu0 0.0
    %983 = vmatpush1.msra.mxu0 %v741
    %984 = vmatprep.subr.mxu0 0.0
    %985 = vmatpush1.msra.mxu0 %v740
    %986 = vmatprep.subr.mxu0 0.0
    %987 = vmatpush1.msra.mxu0 %v739
    %988 = vmatprep.subr.mxu0 0.0
    %989 = vmatpush1.msra.mxu0 %v738
    %990 = vmatprep.subr.mxu0 0.0
    %991 = vmatpush1.msra.mxu0 %v737
    %992 = vmatprep.subr.mxu0 0.0
    %993 = vmatpush1.msra.mxu0 %v736
    %994 = vmatprep.subr.mxu0 0.0
    %995 = vmatpush2.msra.mxu0 %v767
    %996 = vmatprep.subr.mxu0 0.0
    %997 = vmatpush2.msra.mxu0 %v766
    %998 = vmatprep.subr.mxu0 0.0
    %999 = vmatpush2.msra.mxu0 %v765
    %1000 = vmatprep.subr.mxu0 0.0
    %1001 = vmatpush2.msra.mxu0 %v764
    %1002 = vmatprep.subr.mxu0 0.0
    %1003 = vmatpush2.msra.mxu0 %v763
    %1004 = vmatprep.subr.mxu0 0.0
    %1005 = vmatpush2.msra.mxu0 %v762
    %1006 = vmatprep.subr.mxu0 0.0
    %1007 = vmatpush2.msra.mxu0 %v761
    %1008 = vmatprep.subr.mxu0 0.0
    %1009 = vmatpush2.msra.mxu0 %v760
    %1010 = vmatprep.subr.mxu0 0.0
    %1011 = vmatpush2.msra.mxu0 %v759
    %1012 = vmatprep.subr.mxu0 0.0
    %1013 = vmatpush2.msra.mxu0 %v758
    %1014 = vmatprep.subr.mxu0 0.0
    %1015 = vmatpush2.msra.mxu0 %v757
    %1016 = vmatprep.subr.mxu0 0.0
    %1017 = vmatpush2.msra.mxu0 %v756
    %1018 = vmatprep.subr.mxu0 0.0
    %1019 = vmatpush2.msra.mxu0 %v755
    %1020 = vmatprep.subr.mxu0 0.0
    %1021 = vmatpush2.msra.mxu0 %v754
    %1022 = vmatprep.subr.mxu0 0.0
    %1023 = vmatpush2.msra.mxu0 %v753
    %1024 = vmatprep.subr.mxu0 0.0
    %1025 = vmatpush2.msra.mxu0 %v752
    %1026 = vmatprep.mubr.f32.mxu0 %v668
    %1027 = vmatmul.mubr.f32.gmra.mxu0 %v667
    %v1028 = vpop.f32.mrf.mxu0
    %v1029 = vadd.f32 %v959, %v1028
    %v1030 = vpop.f32.mrf.mxu0
    %1031 = vdwg.mxu0
    %1032 = vmatprep.subr.mxu0 0.0
    %1033 = vmatpush1.msra.mxu0 %v783
    %1034 = vmatprep.subr.mxu0 0.0
    %1035 = vmatpush1.msra.mxu0 %v782
    %1036 = vmatprep.subr.mxu0 0.0
    %1037 = vmatpush1.msra.mxu0 %v781
    %1038 = vmatprep.subr.mxu0 0.0
    %1039 = vmatpush1.msra.mxu0 %v780
    %1040 = vmatprep.subr.mxu0 0.0
    %1041 = vmatpush1.msra.mxu0 %v779
    %1042 = vmatprep.subr.mxu0 0.0
    %1043 = vmatpush1.msra.mxu0 %v778
    %1044 = vmatprep.subr.mxu0 0.0
    %1045 = vmatpush1.msra.mxu0 %v777
    %1046 = vmatprep.subr.mxu0 0.0
    %1047 = vmatpush1.msra.mxu0 %v776
    %1048 = vmatprep.subr.mxu0 0.0
    %1049 = vmatpush1.msra.mxu0 %v775
    %1050 = vmatprep.subr.mxu0 0.0
    %1051 = vmatpush1.msra.mxu0 %v774
    %1052 = vmatprep.subr.mxu0 0.0
    %1053 = vmatpush1.msra.mxu0 %v773
    %1054 = vmatprep.subr.mxu0 0.0
    %1055 = vmatpush1.msra.mxu0 %v772
    %1056 = vmatprep.subr.mxu0 0.0
    %1057 = vmatpush1.msra.mxu0 %v771
    %1058 = vmatprep.subr.mxu0 0.0
    %1059 = vmatpush1.msra.mxu0 %v770
    %1060 = vmatprep.subr.mxu0 0.0
    %1061 = vmatpush1.msra.mxu0 %v769
    %1062 = vmatprep.subr.mxu0 0.0
    %1063 = vmatpush1.msra.mxu0 %v768
    %1064 = vmatprep.subr.mxu0 0.0
    %1065 = vmatpush2.msra.mxu0 %v799
    %1066 = vmatprep.subr.mxu0 0.0
    %1067 = vmatpush2.msra.mxu0 %v798
    %1068 = vmatprep.subr.mxu0 0.0
    %1069 = vmatpush2.msra.mxu0 %v797
    %1070 = vmatprep.subr.mxu0 0.0
    %1071 = vmatpush2.msra.mxu0 %v796
    %1072 = vmatprep.subr.mxu0 0.0
    %1073 = vmatpush2.msra.mxu0 %v795
    %1074 = vmatprep.subr.mxu0 0.0
    %1075 = vmatpush2.msra.mxu0 %v794
    %1076 = vmatprep.subr.mxu0 0.0
    %1077 = vmatpush2.msra.mxu0 %v793
    %1078 = vmatprep.subr.mxu0 0.0
    %1079 = vmatpush2.msra.mxu0 %v792
    %1080 = vmatprep.subr.mxu0 0.0
    %1081 = vmatpush2.msra.mxu0 %v791
    %1082 = vmatprep.subr.mxu0 0.0
    %1083 = vmatpush2.msra.mxu0 %v790
    %1084 = vmatprep.subr.mxu0 0.0
    %1085 = vmatpush2.msra.mxu0 %v789
    %1086 = vmatprep.subr.mxu0 0.0
    %1087 = vmatpush2.msra.mxu0 %v788
    %1088 = vmatprep.subr.mxu0 0.0
    %1089 = vmatpush2.msra.mxu0 %v787
    %1090 = vmatprep.subr.mxu0 0.0
    %1091 = vmatpush2.msra.mxu0 %v786
    %1092 = vmatprep.subr.mxu0 0.0
    %1093 = vmatpush2.msra.mxu0 %v785
    %1094 = vmatprep.subr.mxu0 0.0
    %1095 = vmatpush2.msra.mxu0 %v784
    %1096 = vmatprep.mubr.f32.mxu0 %v670
    %1097 = vmatmul.mubr.f32.gmra.mxu0 %v669
    %v1098 = vpop.f32.mrf.mxu0
    %v1099 = vadd.f32 %v1029, %v1098
    %v1100 = vpop.f32.mrf.mxu0
    %1101 = vdwg.mxu0
    %1102 = vmatprep.subr.mxu0 0.0
    %1103 = vmatpush1.msra.mxu0 0.0
    %1104 = vmatprep.subr.mxu0 0.0
    %1105 = vmatpush1.msra.mxu0 %v820
    %1106 = vmatprep.subr.mxu0 0.0
    %1107 = vmatpush1.msra.mxu0 %v813
    %1108 = vmatprep.subr.mxu0 0.0
    %1109 = vmatpush1.msra.mxu0 %v812
    %1110 = vmatprep.subr.mxu0 0.0
    %1111 = vmatpush1.msra.mxu0 %v811
    %1112 = vmatprep.subr.mxu0 0.0
    %1113 = vmatpush1.msra.mxu0 %v810
    %1114 = vmatprep.subr.mxu0 0.0
    %1115 = vmatpush1.msra.mxu0 %v809
    %1116 = vmatprep.subr.mxu0 0.0
    %1117 = vmatpush1.msra.mxu0 %v808
    %1118 = vmatprep.subr.mxu0 0.0
    %1119 = vmatpush1.msra.mxu0 %v807
    %1120 = vmatprep.subr.mxu0 0.0
    %1121 = vmatpush1.msra.mxu0 %v806
    %1122 = vmatprep.subr.mxu0 0.0
    %1123 = vmatpush1.msra.mxu0 %v805
    %1124 = vmatprep.subr.mxu0 0.0
    %1125 = vmatpush1.msra.mxu0 %v804
    %1126 = vmatprep.subr.mxu0 0.0
    %1127 = vmatpush1.msra.mxu0 %v803
    %1128 = vmatprep.subr.mxu0 0.0
    %1129 = vmatpush1.msra.mxu0 %v802
    %1130 = vmatprep.subr.mxu0 0.0
    %1131 = vmatpush1.msra.mxu0 %v801
    %1132 = vmatprep.subr.mxu0 0.0
    %1133 = vmatpush1.msra.mxu0 %v800
    %1134 = vmatprep.subr.mxu0 0.0
    %1135 = vmatpush2.msra.mxu0 0.0
    %1136 = vmatprep.subr.mxu0 0.0
    %1137 = vmatpush2.msra.mxu0 0.0
    %1138 = vmatprep.subr.mxu0 0.0
    %1139 = vmatpush2.msra.mxu0 0.0
    %1140 = vmatprep.subr.mxu0 0.0
    %1141 = vmatpush2.msra.mxu0 0.0
    %1142 = vmatprep.subr.mxu0 0.0
    %1143 = vmatpush2.msra.mxu0 0.0
    %1144 = vmatprep.subr.mxu0 0.0
    %1145 = vmatpush2.msra.mxu0 0.0
    %1146 = vmatprep.subr.mxu0 0.0
    %1147 = vmatpush2.msra.mxu0 0.0
    %1148 = vmatprep.subr.mxu0 0.0
    %1149 = vmatpush2.msra.mxu0 0.0
    %1150 = vmatprep.subr.mxu0 0.0
    %1151 = vmatpush2.msra.mxu0 0.0
    %1152 = vmatprep.subr.mxu0 0.0
    %1153 = vmatpush2.msra.mxu0 0.0
    %1154 = vmatprep.subr.mxu0 0.0
    %1155 = vmatpush2.msra.mxu0 0.0
    %1156 = vmatprep.subr.mxu0 0.0
    %1157 = vmatpush2.msra.mxu0 0.0
    %1158 = vmatprep.subr.mxu0 0.0
    %1159 = vmatpush2.msra.mxu0 0.0
    %1160 = vmatprep.subr.mxu0 0.0
    %1161 = vmatpush2.msra.mxu0 0.0
    %1162 = vmatprep.subr.mxu0 0.0
    %1163 = vmatpush2.msra.mxu0 0.0
    %1164 = vmatprep.subr.mxu0 0.0
    %1165 = vmatpush2.msra.mxu0 0.0
    %1166 = vmatprep.mubr.f32.mxu0 0.0
    %1167 = vmatmul.mubr.f32.gmra.mxu0 %v817
    %v1168 = vpop.f32.mrf.mxu0
    %v1169 = vadd.f32 %v1099, %v1168
    %v1170 = vpop.f32.mrf.mxu0
    %1171 = vdwg.mxu0
    %v1172 = vmul.f32 %v1169, %v1169
    %v1174 = vrot.slane %v1172, 7
    %v1176 = vsub.f32 %v1169, %v1174
    %v1177 = vld [vmem:[%s3] sm:$0x1]
    %v1178 = vadd.f32 %v1176, 1e-05
    %v1179 = vrsqrt.pop %v1178
    %v1182 = vunpack.c.l.s4 1966171168
    %v1183 = vunpack.c.0.s8 %v1182
    %v1184 = vlaneseq
    %v1185 = vshrl.u32 %v1184, 7
    %v1186 = vsub.s32 %v1183, %v1185
    %v1187 = vrot.slane %v1179, %v1186
    %v1188 = vcombine.high %v1187, %v1187
    %v1190 = vunpack.c.l.s4 1966171168
    %v1191 = vunpack.c.0.s8 %v1190
    %v1192 = vlaneseq
    %v1193 = vshrl.u32 %v1192, 7
    %v1194 = vsub.s32 %v1191, %v1193
    %v1195 = vrot.slane %v1188, %v1194
    %v1197 = vmul.f32 %v1177, %v1195
    %v1198 = vld [vmem:[%s4] sm:$0x1]
    %v1199 = vmul.f32 %v1169, %v1197
    %v1200 = vsub.f32 %v1198, %v1199
    %v1202 = vlaneseq
    %v1203 = vshrl.u32 %v1202, 7
    %v1204 = vsub.s32 0, %v1203
    %v1205 = vrot.slane %v1200, %v1204
    %v1207 = vsel %vm662, %v1197, %v1205
    %v1208 = vld [vmem:[%s6] sm:$0xff]
    %v1209 = vld [vmem:[%s6 + $0x8] sm:$0xff]
    %v1210 = vld [vmem:[%s6 + $0x10] sm:$0xff]
    %v1211 = vld [vmem:[%s6 + $0x18] sm:$0xff]
    %v1212 = vld [vmem:[%s6 + $0x20] sm:$0xff]
    %v1213 = vld [vmem:[%s6 + $0x28] sm:$0xff]
    %v1214 = vld [vmem:[%s6 + $0x30] sm:$0xff]
    %v1215 = vld [vmem:[%s6 + $0x38] sm:$0xff]
    %v1216 = vld [vmem:[%s6 + $0x40] sm:$0xff]
    %v1217 = vld [vmem:[%s6 + $0x48] sm:$0xff]
    %v1218 = vld [vmem:[%s6 + $0x50] sm:$0xff]
    %v1219 = vld [vmem:[%s6 + $0x58] sm:$0xff]
    %v1220 = vld [vmem:[%s6 + $0x60] sm:$0xff]
    %v1221 = vld [vmem:[%s6 + $0x68] sm:$0xff]
    %v1222 = vld [vmem:[%s6 + $0x70] sm:$0xff]
    %v1223 = vld [vmem:[%s6 + $0x78] sm:$0xff]
    %v1224 = vld [vmem:[%s6 + $0x80] sm:$0xff]
    %v1225 = vld [vmem:[%s6 + $0x88] sm:$0xff]
    %v1226 = vld [vmem:[%s6 + $0x90] sm:$0xf]
    %v1227 = vld [vmem:[%s6 + $0x98] sm:$0xf]
    %v1228 = vld [vmem:[%s6 + $0xa0] sm:$0xf]
    %v1229 = vld [vmem:[%s6 + $0xa8] sm:$0xf]
    %v1230 = vld [vmem:[%s6 + $0xb0] sm:$0xf]
    %v1231 = vld [vmem:[%s6 + $0xb8] sm:$0xf]
    %v1232 = vld [vmem:[%s6 + $0xc0] sm:$0xf]
    %v1233 = vld [vmem:[%s6 + $0xc8] sm:$0xf]
    %v1234 = vld [vmem:[%s6 + $0xd0] sm:$0xf]
    %vm1235 = vcmask 162816
    %v1237 = vsel %vm1235, %v1207, 0
    %v1240 = vsel %vm525, %v1226, 0
    %v1243 = vsel %vm525, %v1227, 0
    %v1246 = vsel %vm525, %v1228, 0
    %v1249 = vsel %vm525, %v1229, 0
    %v1252 = vsel %vm525, %v1230, 0
    %v1255 = vsel %vm525, %v1231, 0
    %v1258 = vsel %vm525, %v1232, 0
    %v1261 = vsel %vm525, %v1233, 0
    %v1264 = vsel %vm525, %v1234, 0
    %1266 = vmatprep.subr.mxu0 0.0
    %1267 = vmatpush1.msra.mxu0 0.0
    %1268 = vmatprep.subr.mxu0 0.0
    %1269 = vmatpush1.msra.mxu0 0.0
    %1270 = vmatprep.subr.mxu0 0.0
    %1271 = vmatpush1.msra.mxu0 0.0
    %1272 = vmatprep.subr.mxu0 0.0
    %1273 = vmatpush1.msra.mxu0 0.0
    %1274 = vmatprep.subr.mxu0 0.0
    %1275 = vmatpush1.msra.mxu0 0.0
    %1276 = vmatprep.subr.mxu0 0.0
    %1277 = vmatpush1.msra.mxu0 0.0
    %1278 = vmatprep.subr.mxu0 0.0
    %1279 = vmatpush1.msra.mxu0 0.0
    %1280 = vmatprep.subr.mxu0 0.0
    %1281 = vmatpush1.msra.mxu0 0.0
    %1282 = vmatprep.subr.mxu0 0.0
    %1283 = vmatpush1.msra.mxu0 0.0
    %1284 = vmatprep.subr.mxu0 0.0
    %1285 = vmatpush1.msra.mxu0 0.0
    %1286 = vmatprep.subr.mxu0 0.0
    %1287 = vmatpush1.msra.mxu0 0.0
    %1288 = vmatprep.subr.mxu0 0.0
    %1289 = vmatpush1.msra.mxu0 0.0
    %1290 = vmatprep.subr.mxu0 0.0
    %1291 = vmatpush1.msra.mxu0 0.0
    %1292 = vmatprep.subr.mxu0 %v1243
    %1293 = vmatpush1.msra.mxu0 %v1240
    %1294 = vmatprep.subr.mxu0 %v1218
    %1295 = vmatpush1.msra.mxu0 %v1217
    %1296 = vmatprep.subr.mxu0 %v1209
    %1297 = vmatpush1.msra.mxu0 %v1208
    %1298 = vmatprep.subr.mxu0 0.0
    %1299 = vmatpush2.msra.mxu0 0.0
    %1300 = vmatprep.subr.mxu0 0.0
    %1301 = vmatpush2.msra.mxu0 0.0
    %1302 = vmatprep.subr.mxu0 0.0
    %1303 = vmatpush2.msra.mxu0 0.0
    %1304 = vmatprep.subr.mxu0 0.0
    %1305 = vmatpush2.msra.mxu0 0.0
    %1306 = vmatprep.subr.mxu0 0.0
    %1307 = vmatpush2.msra.mxu0 0.0
    %1308 = vmatprep.subr.mxu0 0.0
    %1309 = vmatpush2.msra.mxu0 0.0
    %1310 = vmatprep.subr.mxu0 0.0
    %1311 = vmatpush2.msra.mxu0 0.0
    %1312 = vmatprep.subr.mxu0 0.0
    %1313 = vmatpush2.msra.mxu0 0.0
    %1314 = vmatprep.subr.mxu0 0.0
    %1315 = vmatpush2.msra.mxu0 0.0
    %1316 = vmatprep.subr.mxu0 0.0
    %1317 = vmatpush2.msra.mxu0 0.0
    %1318 = vmatprep.subr.mxu0 0.0
    %1319 = vmatpush2.msra.mxu0 0.0
    %1320 = vmatprep.subr.mxu0 0.0
    %1321 = vmatpush2.msra.mxu0 0.0
    %1322 = vmatprep.subr.mxu0 0.0
    %1323 = vmatpush2.msra.mxu0 0.0
    %1324 = vmatprep.subr.mxu0 0.0
    %1325 = vmatpush2.msra.mxu0 0.0
    %1326 = vmatprep.subr.mxu0 0.0
    %1327 = vmatpush2.msra.mxu0 0.0
    %1328 = vmatprep.subr.mxu0 0.0
    %1329 = vmatpush2.msra.mxu0 0.0
    %1330 = vmatprep.mubr.f32.mxu0 0.0
    %1331 = vmatmul.mubr.f32.gmra.mxu0 %v1237
    %v1332 = vpop.f32.mrf.mxu0
    %v1333 = vadd.f32 0.0, %v1332
    %v1334 = vpop.f32.mrf.mxu0
    %v1335 = vadd.f32 0.0, %v1334
    %1336 = vdwg.mxu0
    %1337 = vmatprep.subr.mxu0 0.0
    %1338 = vmatpush1.msra.mxu0 0.0
    %1339 = vmatprep.subr.mxu0 0.0
    %1340 = vmatpush1.msra.mxu0 0.0
    %1341 = vmatprep.subr.mxu0 0.0
    %1342 = vmatpush1.msra.mxu0 0.0
    %1343 = vmatprep.subr.mxu0 0.0
    %1344 = vmatpush1.msra.mxu0 0.0
    %1345 = vmatprep.subr.mxu0 0.0
    %1346 = vmatpush1.msra.mxu0 0.0
    %1347 = vmatprep.subr.mxu0 0.0
    %1348 = vmatpush1.msra.mxu0 0.0
    %1349 = vmatprep.subr.mxu0 0.0
    %1350 = vmatpush1.msra.mxu0 0.0
    %1351 = vmatprep.subr.mxu0 0.0
    %1352 = vmatpush1.msra.mxu0 0.0
    %1353 = vmatprep.subr.mxu0 0.0
    %1354 = vmatpush1.msra.mxu0 0.0
    %1355 = vmatprep.subr.mxu0 0.0
    %1356 = vmatpush1.msra.mxu0 0.0
    %1357 = vmatprep.subr.mxu0 0.0
    %1358 = vmatpush1.msra.mxu0 0.0
    %1359 = vmatprep.subr.mxu0 0.0
    %1360 = vmatpush1.msra.mxu0 0.0
    %1361 = vmatprep.subr.mxu0 0.0
    %1362 = vmatpush1.msra.mxu0 0.0
    %1363 = vmatprep.subr.mxu0 %v1249
    %1364 = vmatpush1.msra.mxu0 %v1246
    %1365 = vmatprep.subr.mxu0 %v1220
    %1366 = vmatpush1.msra.mxu0 %v1219
    %1367 = vmatprep.subr.mxu0 %v1211
    %1368 = vmatpush1.msra.mxu0 %v1210
    %1369 = vmatprep.subr.mxu0 0.0
    %1370 = vmatpush2.msra.mxu0 0.0
    %1371 = vmatprep.subr.mxu0 0.0
    %1372 = vmatpush2.msra.mxu0 0.0
    %1373 = vmatprep.subr.mxu0 0.0
    %1374 = vmatpush2.msra.mxu0 0.0
    %1375 = vmatprep.subr.mxu0 0.0
    %1376 = vmatpush2.msra.mxu0 0.0
    %1377 = vmatprep.subr.mxu0 0.0
    %1378 = vmatpush2.msra.mxu0 0.0
    %1379 = vmatprep.subr.mxu0 0.0
    %1380 = vmatpush2.msra.mxu0 0.0
    %1381 = vmatprep.subr.mxu0 0.0
    %1382 = vmatpush2.msra.mxu0 0.0
    %1383 = vmatprep.subr.mxu0 0.0
    %1384 = vmatpush2.msra.mxu0 0.0
    %1385 = vmatprep.subr.mxu0 0.0
    %1386 = vmatpush2.msra.mxu0 0.0
    %1387 = vmatprep.subr.mxu0 0.0
    %1388 = vmatpush2.msra.mxu0 0.0
    %1389 = vmatprep.subr.mxu0 0.0
    %1390 = vmatpush2.msra.mxu0 0.0
    %1391 = vmatprep.subr.mxu0 0.0
    %1392 = vmatpush2.msra.mxu0 0.0
    %1393 = vmatprep.subr.mxu0 0.0
    %1394 = vmatpush2.msra.mxu0 0.0
    %1395 = vmatprep.subr.mxu0 0.0
    %1396 = vmatpush2.msra.mxu0 0.0
    %1397 = vmatprep.subr.mxu0 0.0
    %1398 = vmatpush2.msra.mxu0 0.0
    %1399 = vmatprep.subr.mxu0 0.0
    %1400 = vmatpush2.msra.mxu0 0.0
    %1401 = vmatprep.mubr.f32.mxu0 0.0
    %1402 = vmatmul.mubr.f32.gmra.mxu0 %v1237
    %v1403 = vpop.f32.mrf.mxu0
    %v1404 = vadd.f32 0.0, %v1403
    %v1405 = vpop.f32.mrf.mxu0
    %v1406 = vadd.f32 0.0, %v1405
    %1407 = vdwg.mxu0
    %1408 = vmatprep.subr.mxu0 0.0
    %1409 = vmatpush1.msra.mxu0 0.0
    %1410 = vmatprep.subr.mxu0 0.0
    %1411 = vmatpush1.msra.mxu0 0.0
    %1412 = vmatprep.subr.mxu0 0.0
    %1413 = vmatpush1.msra.mxu0 0.0
    %1414 = vmatprep.subr.mxu0 0.0
    %1415 = vmatpush1.msra.mxu0 0.0
    %1416 = vmatprep.subr.mxu0 0.0
    %1417 = vmatpush1.msra.mxu0 0.0
    %1418 = vmatprep.subr.mxu0 0.0
    %1419 = vmatpush1.msra.mxu0 0.0
    %1420 = vmatprep.subr.mxu0 0.0
    %1421 = vmatpush1.msra.mxu0 0.0
    %1422 = vmatprep.subr.mxu0 0.0
    %1423 = vmatpush1.msra.mxu0 0.0
    %1424 = vmatprep.subr.mxu0 0.0
    %1425 = vmatpush1.msra.mxu0 0.0
    %1426 = vmatprep.subr.mxu0 0.0
    %1427 = vmatpush1.msra.mxu0 0.0
    %1428 = vmatprep.subr.mxu0 0.0
    %1429 = vmatpush1.msra.mxu0 0.0
    %1430 = vmatprep.subr.mxu0 0.0
    %1431 = vmatpush1.msra.mxu0 0.0
    %1432 = vmatprep.subr.mxu0 0.0
    %1433 = vmatpush1.msra.mxu0 0.0
    %1434 = vmatprep.subr.mxu0 %v1255
    %1435 = vmatpush1.msra.mxu0 %v1252
    %1436 = vmatprep.subr.mxu0 %v1222
    %1437 = vmatpush1.msra.mxu0 %v1221
    %1438 = vmatprep.subr.mxu0 %v1213
    %1439 = vmatpush1.msra.mxu0 %v1212
    %1440 = vmatprep.subr.mxu0 0.0
    %1441 = vmatpush2.msra.mxu0 0.0
    %1442 = vmatprep.subr.mxu0 0.0
    %1443 = vmatpush2.msra.mxu0 0.0
    %1444 = vmatprep.subr.mxu0 0.0
    %1445 = vmatpush2.msra.mxu0 0.0
    %1446 = vmatprep.subr.mxu0 0.0
    %1447 = vmatpush2.msra.mxu0 0.0
    %1448 = vmatprep.subr.mxu0 0.0
    %1449 = vmatpush2.msra.mxu0 0.0
    %1450 = vmatprep.subr.mxu0 0.0
    %1451 = vmatpush2.msra.mxu0 0.0
    %1452 = vmatprep.subr.mxu0 0.0
    %1453 = vmatpush2.msra.mxu0 0.0
    %1454 = vmatprep.subr.mxu0 0.0
    %1455 = vmatpush2.msra.mxu0 0.0
    %1456 = vmatprep.subr.mxu0 0.0
    %1457 = vmatpush2.msra.mxu0 0.0
    %1458 = vmatprep.subr.mxu0 0.0
    %1459 = vmatpush2.msra.mxu0 0.0
    %1460 = vmatprep.subr.mxu0 0.0
    %1461 = vmatpush2.msra.mxu0 0.0
    %1462 = vmatprep.subr.mxu0 0.0
    %1463 = vmatpush2.msra.mxu0 0.0
    %1464 = vmatprep.subr.mxu0 0.0
    %1465 = vmatpush2.msra.mxu0 0.0
    %1466 = vmatprep.subr.mxu0 0.0
    %1467 = vmatpush2.msra.mxu0 0.0
    %1468 = vmatprep.subr.mxu0 0.0
    %1469 = vmatpush2.msra.mxu0 0.0
    %1470 = vmatprep.subr.mxu0 0.0
    %1471 = vmatpush2.msra.mxu0 0.0
    %1472 = vmatprep.mubr.f32.mxu0 0.0
    %1473 = vmatmul.mubr.f32.gmra.mxu0 %v1237
    %v1474 = vpop.f32.mrf.mxu0
    %v1475 = vadd.f32 0.0, %v1474
    %v1476 = vpop.f32.mrf.mxu0
    %v1477 = vadd.f32 0.0, %v1476
    %1478 = vdwg.mxu0
    %1479 = vmatprep.subr.mxu0 0.0
    %1480 = vmatpush1.msra.mxu0 0.0
    %1481 = vmatprep.subr.mxu0 0.0
    %1482 = vmatpush1.msra.mxu0 0.0
    %1483 = vmatprep.subr.mxu0 0.0
    %1484 = vmatpush1.msra.mxu0 0.0
    %1485 = vmatprep.subr.mxu0 0.0
    %1486 = vmatpush1.msra.mxu0 0.0
    %1487 = vmatprep.subr.mxu0 0.0
    %1488 = vmatpush1.msra.mxu0 0.0
    %1489 = vmatprep.subr.mxu0 0.0
    %1490 = vmatpush1.msra.mxu0 0.0
    %1491 = vmatprep.subr.mxu0 0.0
    %1492 = vmatpush1.msra.mxu0 0.0
    %1493 = vmatprep.subr.mxu0 0.0
    %1494 = vmatpush1.msra.mxu0 0.0
    %1495 = vmatprep.subr.mxu0 0.0
    %1496 = vmatpush1.msra.mxu0 0.0
    %1497 = vmatprep.subr.mxu0 0.0
    %1498 = vmatpush1.msra.mxu0 0.0
    %1499 = vmatprep.subr.mxu0 0.0
    %1500 = vmatpush1.msra.mxu0 0.0
    %1501 = vmatprep.subr.mxu0 0.0
    %1502 = vmatpush1.msra.mxu0 0.0
    %1503 = vmatprep.subr.mxu0 0.0
    %1504 = vmatpush1.msra.mxu0 0.0
    %1505 = vmatprep.subr.mxu0 %v1261
    %1506 = vmatpush1.msra.mxu0 %v1258
    %1507 = vmatprep.subr.mxu0 %v1224
    %1508 = vmatpush1.msra.mxu0 %v1223
    %1509 = vmatprep.subr.mxu0 %v1215
    %1510 = vmatpush1.msra.mxu0 %v1214
    %1511 = vmatprep.subr.mxu0 0.0
    %1512 = vmatpush2.msra.mxu0 0.0
    %1513 = vmatprep.subr.mxu0 0.0
    %1514 = vmatpush2.msra.mxu0 0.0
    %1515 = vmatprep.subr.mxu0 0.0
    %1516 = vmatpush2.msra.mxu0 0.0
    %1517 = vmatprep.subr.mxu0 0.0
    %1518 = vmatpush2.msra.mxu0 0.0
    %1519 = vmatprep.subr.mxu0 0.0
    %1520 = vmatpush2.msra.mxu0 0.0
    %1521 = vmatprep.subr.mxu0 0.0
    %1522 = vmatpush2.msra.mxu0 0.0
    %1523 = vmatprep.subr.mxu0 0.0
    %1524 = vmatpush2.msra.mxu0 0.0
    %1525 = vmatprep.subr.mxu0 0.0
    %1526 = vmatpush2.msra.mxu0 0.0
    %1527 = vmatprep.subr.mxu0 0.0
    %1528 = vmatpush2.msra.mxu0 0.0
    %1529 = vmatprep.subr.mxu0 0.0
    %1530 = vmatpush2.msra.mxu0 0.0
    %1531 = vmatprep.subr.mxu0 0.0
    %1532 = vmatpush2.msra.mxu0 0.0
    %1533 = vmatprep.subr.mxu0 0.0
    %1534 = vmatpush2.msra.mxu0 0.0
    %1535 = vmatprep.subr.mxu0 0.0
    %1536 = vmatpush2.msra.mxu0 0.0
    %1537 = vmatprep.subr.mxu0 0.0
    %1538 = vmatpush2.msra.mxu0 0.0
    %1539 = vmatprep.subr.mxu0 0.0
    %1540 = vmatpush2.msra.mxu0 0.0
    %1541 = vmatprep.subr.mxu0 0.0
    %1542 = vmatpush2.msra.mxu0 0.0
    %1543 = vmatprep.mubr.f32.mxu0 0.0
    %1544 = vmatmul.mubr.f32.gmra.mxu0 %v1237
    %v1545 = vpop.f32.mrf.mxu0
    %v1546 = vadd.f32 0.0, %v1545
    %v1547 = vpop.f32.mrf.mxu0
    %v1548 = vadd.f32 0.0, %v1547
    %1549 = vdwg.mxu0
    %1550 = vmatprep.subr.mxu0 0.0
    %1551 = vmatpush1.msra.mxu0 0.0
    %1552 = vmatprep.subr.mxu0 0.0
    %1553 = vmatpush1.msra.mxu0 0.0
    %1554 = vmatprep.subr.mxu0 0.0
    %1555 = vmatpush1.msra.mxu0 0.0
    %1556 = vmatprep.subr.mxu0 0.0
    %1557 = vmatpush1.msra.mxu0 0.0
    %1558 = vmatprep.subr.mxu0 0.0
    %1559 = vmatpush1.msra.mxu0 0.0
    %1560 = vmatprep.subr.mxu0 0.0
    %1561 = vmatpush1.msra.mxu0 0.0
    %1562 = vmatprep.subr.mxu0 0.0
    %1563 = vmatpush1.msra.mxu0 0.0
    %1564 = vmatprep.subr.mxu0 0.0
    %1565 = vmatpush1.msra.mxu0 0.0
    %1566 = vmatprep.subr.mxu0 0.0
    %1567 = vmatpush1.msra.mxu0 0.0
    %1568 = vmatprep.subr.mxu0 0.0
    %1569 = vmatpush1.msra.mxu0 0.0
    %1570 = vmatprep.subr.mxu0 0.0
    %1571 = vmatpush1.msra.mxu0 0.0
    %1572 = vmatprep.subr.mxu0 0.0
    %1573 = vmatpush1.msra.mxu0 0.0
    %1574 = vmatprep.subr.mxu0 0.0
    %1575 = vmatpush1.msra.mxu0 0.0
    %1576 = vmatprep.subr.mxu0 0.0
    %1577 = vmatpush1.msra.mxu0 %v1264
    %1578 = vmatprep.subr.mxu0 0.0
    %1579 = vmatpush1.msra.mxu0 %v1225
    %1580 = vmatprep.subr.mxu0 0.0
    %1581 = vmatpush1.msra.mxu0 %v1216
    %1582 = vmatprep.subr.mxu0 0.0
    %1583 = vmatpush2.msra.mxu0 0.0
    %1584 = vmatprep.subr.mxu0 0.0
    %1585 = vmatpush2.msra.mxu0 0.0
    %1586 = vmatprep.subr.mxu0 0.0
    %1587 = vmatpush2.msra.mxu0 0.0
    %1588 = vmatprep.subr.mxu0 0.0
    %1589 = vmatpush2.msra.mxu0 0.0
    %1590 = vmatprep.subr.mxu0 0.0
    %1591 = vmatpush2.msra.mxu0 0.0
    %1592 = vmatprep.subr.mxu0 0.0
    %1593 = vmatpush2.msra.mxu0 0.0
    %1594 = vmatprep.subr.mxu0 0.0
    %1595 = vmatpush2.msra.mxu0 0.0
    %1596 = vmatprep.subr.mxu0 0.0
    %1597 = vmatpush2.msra.mxu0 0.0
    %1598 = vmatprep.subr.mxu0 0.0
    %1599 = vmatpush2.msra.mxu0 0.0
    %1600 = vmatprep.subr.mxu0 0.0
    %1601 = vmatpush2.msra.mxu0 0.0
    %1602 = vmatprep.subr.mxu0 0.0
    %1603 = vmatpush2.msra.mxu0 0.0
    %1604 = vmatprep.subr.mxu0 0.0
    %1605 = vmatpush2.msra.mxu0 0.0
    %1606 = vmatprep.subr.mxu0 0.0
    %1607 = vmatpush2.msra.mxu0 0.0
    %1608 = vmatprep.subr.mxu0 0.0
    %1609 = vmatpush2.msra.mxu0 0.0
    %1610 = vmatprep.subr.mxu0 0.0
    %1611 = vmatpush2.msra.mxu0 0.0
    %1612 = vmatprep.subr.mxu0 0.0
    %1613 = vmatpush2.msra.mxu0 0.0
    %1614 = vmatprep.mubr.f32.mxu0 0.0
    %1615 = vmatmul.mubr.f32.gmra.mxu0 %v1237
    %v1616 = vpop.f32.mrf.mxu0
    %v1617 = vadd.f32 0.0, %v1616
    %v1618 = vpop.f32.mrf.mxu0
    %1619 = vdwg.mxu0
    %v1620 = vlaneseq
    %v1621 = vshrl.u32 %v1620, 7
    %v1622 = vsub.s32 0, %v1621
    %v1623 = vrot.slane %v1333, %v1622
    %v1624 = vlaneseq
    %v1625 = vshrl.u32 %v1624, 7
    %v1626 = vsub.s32 0, %v1625
    %v1627 = vrot.slane %v1335, %v1626
    %v1628 = vlaneseq
    %v1629 = vshrl.u32 %v1628, 7
    %v1630 = vsub.s32 0, %v1629
    %v1631 = vrot.slane %v1404, %v1630
    %v1632 = vlaneseq
    %v1633 = vshrl.u32 %v1632, 7
    %v1634 = vsub.s32 0, %v1633
    %v1635 = vrot.slane %v1406, %v1634
    %v1636 = vlaneseq
    %v1637 = vshrl.u32 %v1636, 7
    %v1638 = vsub.s32 0, %v1637
    %v1639 = vrot.slane %v1475, %v1638
    %v1640 = vlaneseq
    %v1641 = vshrl.u32 %v1640, 7
    %v1642 = vsub.s32 0, %v1641
    %v1643 = vrot.slane %v1477, %v1642
    %v1644 = vlaneseq
    %v1645 = vshrl.u32 %v1644, 7
    %v1646 = vsub.s32 0, %v1645
    %v1647 = vrot.slane %v1546, %v1646
    %v1648 = vlaneseq
    %v1649 = vshrl.u32 %v1648, 7
    %v1650 = vsub.s32 0, %v1649
    %v1651 = vrot.slane %v1548, %v1650
    %v1652 = vlaneseq
    %v1653 = vshrl.u32 %v1652, 7
    %v1654 = vsub.s32 0, %v1653
    %v1655 = vrot.slane %v1617, %v1654
    %v1656 = vmul.f32 %v238, %v1623
    %v1657 = vmul.f32 %v240, %v1627
    %v1658 = vmul.f32 %v309, %v1631
    %v1659 = vmul.f32 %v311, %v1635
    %v1660 = vmul.f32 %v380, %v1639
    %v1661 = vmul.f32 %v382, %v1643
    %v1662 = vmul.f32 %v451, %v1647
    %v1663 = vmul.f32 %v453, %v1651
    %v1664 = vmul.f32 %v522, %v1655
    %v1665 = vlaneseq
    %v1666 = vshrl.u32 %v1665, 7
    %v1667 = vsub.s32 1, %v1666
    %v1668 = vrot.slane %v1333, %v1667
    %v1669 = vlaneseq
    %v1670 = vshrl.u32 %v1669, 7
    %v1671 = vsub.s32 1, %v1670
    %v1672 = vrot.slane %v1335, %v1671
    %v1673 = vlaneseq
    %v1674 = vshrl.u32 %v1673, 7
    %v1675 = vsub.s32 1, %v1674
    %v1676 = vrot.slane %v1404, %v1675
    %v1677 = vlaneseq
    %v1678 = vshrl.u32 %v1677, 7
    %v1679 = vsub.s32 1, %v1678
    %v1680 = vrot.slane %v1406, %v1679
    %v1681 = vlaneseq
    %v1682 = vshrl.u32 %v1681, 7
    %v1683 = vsub.s32 1, %v1682
    %v1684 = vrot.slane %v1475, %v1683
    %v1685 = vlaneseq
    %v1686 = vshrl.u32 %v1685, 7
    %v1687 = vsub.s32 1, %v1686
    %v1688 = vrot.slane %v1477, %v1687
    %v1689 = vlaneseq
    %v1690 = vshrl.u32 %v1689, 7
    %v1691 = vsub.s32 1, %v1690
    %v1692 = vrot.slane %v1546, %v1691
    %v1693 = vlaneseq
    %v1694 = vshrl.u32 %v1693, 7
    %v1695 = vsub.s32 1, %v1694
    %v1696 = vrot.slane %v1548, %v1695
    %v1697 = vlaneseq
    %v1698 = vshrl.u32 %v1697, 7
    %v1699 = vsub.s32 1, %v1698
    %v1700 = vrot.slane %v1617, %v1699
    %v1701 = vadd.f32 %v1656, %v1668
    %v1702 = vadd.f32 %v1657, %v1672
    %v1703 = vadd.f32 %v1658, %v1676
    %v1704 = vadd.f32 %v1659, %v1680
    %v1705 = vadd.f32 %v1660, %v1684
    %v1706 = vadd.f32 %v1661, %v1688
    %v1707 = vadd.f32 %v1662, %v1692
    %v1708 = vadd.f32 %v1663, %v1696
    %v1709 = vadd.f32 %v1664, %v1700
    %v1710 = vld [vmem:[%s7] sm:$0xff]
    %v1711 = vld [vmem:[%s7 + $0x8] sm:$0xff]
    %v1712 = vld [vmem:[%s7 + $0x10] sm:$0xff]
    %v1713 = vld [vmem:[%s7 + $0x18] sm:$0xff]
    %v1714 = vld [vmem:[%s7 + $0x20] sm:$0xff]
    %v1715 = vld [vmem:[%s7 + $0x28] sm:$0xff]
    %v1716 = vld [vmem:[%s7 + $0x30] sm:$0xff]
    %v1717 = vld [vmem:[%s7 + $0x38] sm:$0xff]
    %v1718 = vld [vmem:[%s7 + $0x40] sm:$0xff]
    %v1719 = vld [vmem:[%s7 + $0x48] sm:$0xff]
    %v1720 = vld [vmem:[%s7 + $0x50] sm:$0xff]
    %v1721 = vld [vmem:[%s7 + $0x58] sm:$0xff]
    %v1722 = vld [vmem:[%s7 + $0x60] sm:$0xff]
    %v1723 = vld [vmem:[%s7 + $0x68] sm:$0xff]
    %v1724 = vld [vmem:[%s7 + $0x70] sm:$0xff]
    %v1725 = vld [vmem:[%s7 + $0x78] sm:$0xff]
    %v1726 = vld [vmem:[%s7 + $0x80] sm:$0xff]
    %v1727 = vld [vmem:[%s7 + $0x88] sm:$0xff]
    %v1728 = vld [vmem:[%s7 + $0x90] sm:$0xff]
    %v1729 = vld [vmem:[%s7 + $0x98] sm:$0xff]
    %v1730 = vld [vmem:[%s7 + $0xa0] sm:$0xff]
    %v1731 = vld [vmem:[%s7 + $0xa8] sm:$0xff]
    %v1732 = vld [vmem:[%s7 + $0xb0] sm:$0xff]
    %v1733 = vld [vmem:[%s7 + $0xb8] sm:$0xff]
    %v1734 = vld [vmem:[%s7 + $0xc0] sm:$0xff]
    %v1735 = vld [vmem:[%s7 + $0xc8] sm:$0xff]
    %v1736 = vld [vmem:[%s7 + $0xd0] sm:$0xff]
    %v1737 = vld [vmem:[%s7 + $0xd8] sm:$0xff]
    %v1738 = vld [vmem:[%s7 + $0xe0] sm:$0xff]
    %v1739 = vld [vmem:[%s7 + $0xe8] sm:$0xff]
    %v1740 = vld [vmem:[%s7 + $0xf0] sm:$0xff]
    %v1741 = vld [vmem:[%s7 + $0xf8] sm:$0xff]
    %v1742 = vld [vmem:[%s7 + $0x100] sm:$0xff]
    %v1743 = vld [vmem:[%s7 + $0x108] sm:$0xff]
    %v1744 = vld [vmem:[%s7 + $0x110] sm:$0xff]
    %v1745 = vld [vmem:[%s7 + $0x118] sm:$0xff]
    %v1746 = vld [vmem:[%s7 + $0x120] sm:$0xff]
    %v1747 = vld [vmem:[%s7 + $0x128] sm:$0xff]
    %v1748 = vld [vmem:[%s7 + $0x130] sm:$0xff]
    %v1749 = vld [vmem:[%s7 + $0x138] sm:$0xff]
    %v1750 = vld [vmem:[%s7 + $0x140] sm:$0xff]
    %v1751 = vld [vmem:[%s7 + $0x148] sm:$0xff]
    %v1752 = vld [vmem:[%s7 + $0x150] sm:$0xff]
    %v1753 = vld [vmem:[%s7 + $0x158] sm:$0xff]
    %v1754 = vld [vmem:[%s7 + $0x160] sm:$0xff]
    %v1755 = vld [vmem:[%s7 + $0x168] sm:$0xff]
    %v1756 = vld [vmem:[%s7 + $0x170] sm:$0xff]
    %v1757 = vld [vmem:[%s7 + $0x178] sm:$0xff]
    %v1758 = vld [vmem:[%s7 + $0x180] sm:$0xff]
    %v1759 = vld [vmem:[%s7 + $0x188] sm:$0xff]
    %v1760 = vld [vmem:[%s7 + $0x190] sm:$0xff]
    %v1761 = vld [vmem:[%s7 + $0x198] sm:$0xff]
    %v1762 = vld [vmem:[%s7 + $0x1a0] sm:$0xff]
    %v1763 = vld [vmem:[%s7 + $0x1a8] sm:$0xff]
    %v1764 = vld [vmem:[%s7 + $0x1b0] sm:$0xff]
    %v1765 = vld [vmem:[%s7 + $0x1b8] sm:$0xff]
    %v1766 = vld [vmem:[%s7 + $0x1c0] sm:$0xff]
    %v1767 = vld [vmem:[%s7 + $0x1c8] sm:$0xff]
    %v1768 = vld [vmem:[%s7 + $0x1d0] sm:$0xff]
    %v1769 = vld [vmem:[%s7 + $0x1d8] sm:$0xff]
    %v1770 = vld [vmem:[%s7 + $0x1e0] sm:$0xff]
    %v1771 = vld [vmem:[%s7 + $0x1e8] sm:$0xff]
    %v1772 = vld [vmem:[%s7 + $0x1f0] sm:$0xff]
    %v1773 = vld [vmem:[%s7 + $0x1f8] sm:$0xff]
    %v1774 = vld [vmem:[%s7 + $0x200] sm:$0xff]
    %v1775 = vld [vmem:[%s7 + $0x208] sm:$0xff]
    %v1776 = vld [vmem:[%s7 + $0x210] sm:$0xff]
    %v1777 = vld [vmem:[%s7 + $0x218] sm:$0xff]
    %v1778 = vld [vmem:[%s7 + $0x220] sm:$0xff]
    %v1779 = vld [vmem:[%s7 + $0x228] sm:$0xff]
    %v1780 = vld [vmem:[%s7 + $0x230] sm:$0xff]
    %v1781 = vld [vmem:[%s7 + $0x238] sm:$0xff]
    %v1782 = vld [vmem:[%s7 + $0x240] sm:$0xff]
    %v1783 = vld [vmem:[%s7 + $0x248] sm:$0xff]
    %v1784 = vld [vmem:[%s7 + $0x250] sm:$0xff]
    %v1785 = vld [vmem:[%s7 + $0x258] sm:$0xff]
    %v1786 = vld [vmem:[%s7 + $0x260] sm:$0xff]
    %v1787 = vld [vmem:[%s7 + $0x268] sm:$0xff]
    %v1788 = vld [vmem:[%s7 + $0x270] sm:$0xff]
    %v1789 = vld [vmem:[%s7 + $0x278] sm:$0xff]
    %v1790 = vld [vmem:[%s7 + $0x280] sm:$0xff]
    %v1791 = vld [vmem:[%s7 + $0x288] sm:$0xff]
    %v1792 = vld [vmem:[%s7 + $0x290] sm:$0xff]
    %v1793 = vld [vmem:[%s7 + $0x298] sm:$0xff]
    %v1794 = vld [vmem:[%s7 + $0x2a0] sm:$0xff]
    %v1795 = vld [vmem:[%s7 + $0x2a8] sm:$0xff]
    %v1796 = vld [vmem:[%s7 + $0x2b0] sm:$0xff]
    %v1797 = vld [vmem:[%s7 + $0x2b8] sm:$0xff]
    %v1798 = vld [vmem:[%s7 + $0x2c0] sm:$0xff]
    %v1799 = vld [vmem:[%s7 + $0x2c8] sm:$0xff]
    %v1800 = vld [vmem:[%s7 + $0x2d0] sm:$0xff]
    %v1801 = vld [vmem:[%s7 + $0x2d8] sm:$0xff]
    %v1802 = vld [vmem:[%s7 + $0x2e0] sm:$0xff]
    %v1803 = vld [vmem:[%s7 + $0x2e8] sm:$0xff]
    %v1804 = vld [vmem:[%s7 + $0x2f0] sm:$0xff]
    %v1805 = vld [vmem:[%s7 + $0x2f8] sm:$0xff]
    %v1806 = vld [vmem:[%s7 + $0x300] sm:$0xff]
    %v1807 = vld [vmem:[%s7 + $0x308] sm:$0xff]
    %v1808 = vld [vmem:[%s7 + $0x310] sm:$0xff]
    %v1809 = vld [vmem:[%s7 + $0x318] sm:$0xff]
    %v1810 = vld [vmem:[%s7 + $0x320] sm:$0xff]
    %v1811 = vld [vmem:[%s7 + $0x328] sm:$0xff]
    %v1812 = vld [vmem:[%s7 + $0x330] sm:$0xff]
    %v1813 = vld [vmem:[%s7 + $0x338] sm:$0xff]
    %v1814 = vld [vmem:[%s7 + $0x340] sm:$0xff]
    %v1815 = vld [vmem:[%s7 + $0x348] sm:$0xff]
    %v1816 = vld [vmem:[%s7 + $0x350] sm:$0xff]
    %v1817 = vld [vmem:[%s7 + $0x358] sm:$0xff]
    %v1818 = vld [vmem:[%s7 + $0x360] sm:$0xff]
    %v1819 = vld [vmem:[%s7 + $0x368] sm:$0xff]
    %v1820 = vld [vmem:[%s7 + $0x370] sm:$0xff]
    %v1821 = vld [vmem:[%s7 + $0x378] sm:$0xff]
    %v1822 = vld [vmem:[%s7 + $0x380] sm:$0xff]
    %v1823 = vld [vmem:[%s7 + $0x388] sm:$0xff]
    %v1824 = vld [vmem:[%s7 + $0x390] sm:$0xff]
    %v1825 = vld [vmem:[%s7 + $0x398] sm:$0xff]
    %v1826 = vld [vmem:[%s7 + $0x3a0] sm:$0xff]
    %v1827 = vld [vmem:[%s7 + $0x3a8] sm:$0xff]
    %v1828 = vld [vmem:[%s7 + $0x3b0] sm:$0xff]
    %v1829 = vld [vmem:[%s7 + $0x3b8] sm:$0xff]
    %v1830 = vld [vmem:[%s7 + $0x3c0] sm:$0xff]
    %v1831 = vld [vmem:[%s7 + $0x3c8] sm:$0xff]
    %v1832 = vld [vmem:[%s7 + $0x3d0] sm:$0xff]
    %v1833 = vld [vmem:[%s7 + $0x3d8] sm:$0xff]
    %v1834 = vld [vmem:[%s7 + $0x3e0] sm:$0xff]
    %v1835 = vld [vmem:[%s7 + $0x3e8] sm:$0xff]
    %v1836 = vld [vmem:[%s7 + $0x3f0] sm:$0xff]
    %v1837 = vld [vmem:[%s7 + $0x3f8] sm:$0xff]
    %v1838 = vld [vmem:[%s7 + $0x400] sm:$0xff]
    %v1839 = vld [vmem:[%s7 + $0x408] sm:$0xff]
    %v1840 = vld [vmem:[%s7 + $0x410] sm:$0xff]
    %v1841 = vld [vmem:[%s7 + $0x418] sm:$0xff]
    %v1842 = vld [vmem:[%s7 + $0x420] sm:$0xff]
    %v1843 = vld [vmem:[%s7 + $0x428] sm:$0xff]
    %v1844 = vld [vmem:[%s7 + $0x430] sm:$0xff]
    %v1845 = vld [vmem:[%s7 + $0x438] sm:$0xff]
    %v1846 = vld [vmem:[%s7 + $0x440] sm:$0xff]
    %v1847 = vld [vmem:[%s7 + $0x448] sm:$0xff]
    %v1848 = vld [vmem:[%s7 + $0x450] sm:$0xff]
    %v1849 = vld [vmem:[%s7 + $0x458] sm:$0xff]
    %v1850 = vld [vmem:[%s7 + $0x460] sm:$0xff]
    %v1851 = vld [vmem:[%s7 + $0x468] sm:$0xff]
    %v1852 = vld [vmem:[%s7 + $0x470] sm:$0xff]
    %v1853 = vld [vmem:[%s7 + $0x478] sm:$0xff]
    %v1854 = vld [vmem:[%s7 + $0x480] sm:$0xff]
    %v1855 = vld [vmem:[%s7 + $0x488] sm:$0xff]
    %v1856 = vld [vmem:[%s7 + $0x490] sm:$0xff]
    %v1857 = vld [vmem:[%s7 + $0x498] sm:$0xff]
    %v1858 = vld [vmem:[%s7 + $0x4a0] sm:$0xff]
    %v1859 = vld [vmem:[%s7 + $0x4a8] sm:$0xff]
    %v1860 = vld [vmem:[%s7 + $0x4b0] sm:$0xff]
    %v1861 = vld [vmem:[%s7 + $0x4b8] sm:$0xff]
    %v1862 = vld [vmem:[%s7 + $0x4c0] sm:$0xff]
    %v1863 = vld [vmem:[%s7 + $0x4c8] sm:$0xff]
    %v1864 = vld [vmem:[%s7 + $0x4d0] sm:$0xff]
    %v1865 = vld [vmem:[%s7 + $0x4d8] sm:$0xff]
    %v1866 = vld [vmem:[%s7 + $0x4e0] sm:$0xff]
    %v1867 = vld [vmem:[%s7 + $0x4e8] sm:$0xff]
    %v1868 = vld [vmem:[%s7 + $0x4f0] sm:$0xff]
    %v1869 = vld [vmem:[%s7 + $0x4f8] sm:$0xff]
    %v1870 = vld [vmem:[%s7 + $0x500] sm:$0xff]
    %v1871 = vld [vmem:[%s7 + $0x508] sm:$0xff]
    %v1872 = vld [vmem:[%s7 + $0x510] sm:$0xff]
    %v1873 = vld [vmem:[%s7 + $0x518] sm:$0xff]
    %v1874 = vld [vmem:[%s7 + $0x520] sm:$0xff]
    %v1875 = vld [vmem:[%s7 + $0x528] sm:$0xff]
    %v1876 = vld [vmem:[%s7 + $0x530] sm:$0xff]
    %v1877 = vld [vmem:[%s7 + $0x538] sm:$0xff]
    %v1878 = vld [vmem:[%s7 + $0x540] sm:$0xff]
    %v1879 = vld [vmem:[%s7 + $0x548] sm:$0xff]
    %v1880 = vld [vmem:[%s7 + $0x550] sm:$0xff]
    %v1881 = vld [vmem:[%s7 + $0x558] sm:$0xff]
    %v1882 = vld [vmem:[%s7 + $0x560] sm:$0xff]
    %v1883 = vld [vmem:[%s7 + $0x568] sm:$0xff]
    %v1884 = vld [vmem:[%s7 + $0x570] sm:$0xff]
    %v1885 = vld [vmem:[%s7 + $0x578] sm:$0xff]
    %v1886 = vld [vmem:[%s7 + $0x580] sm:$0xff]
    %v1887 = vld [vmem:[%s7 + $0x588] sm:$0xff]
    %v1888 = vld [vmem:[%s7 + $0x590] sm:$0xff]
    %v1889 = vld [vmem:[%s7 + $0x598] sm:$0xff]
    %v1890 = vld [vmem:[%s7 + $0x5a0] sm:$0xff]
    %v1891 = vld [vmem:[%s7 + $0x5a8] sm:$0xff]
    %v1892 = vld [vmem:[%s7 + $0x5b0] sm:$0xff]
    %v1893 = vld [vmem:[%s7 + $0x5b8] sm:$0xff]
    %v1894 = vld [vmem:[%s7 + $0x5c0] sm:$0xff]
    %v1895 = vld [vmem:[%s7 + $0x5c8] sm:$0xff]
    %v1896 = vld [vmem:[%s7 + $0x5d0] sm:$0xff]
    %v1897 = vld [vmem:[%s7 + $0x5d8] sm:$0xff]
    %v1898 = vld [vmem:[%s7 + $0x5e0] sm:$0xff]
    %v1899 = vld [vmem:[%s7 + $0x5e8] sm:$0xff]
    %v1900 = vld [vmem:[%s7 + $0x5f0] sm:$0xff]
    %v1901 = vld [vmem:[%s7 + $0x5f8] sm:$0xff]
    %v1902 = vld [vmem:[%s7 + $0x600] sm:$0xff]
    %v1903 = vld [vmem:[%s7 + $0x608] sm:$0xff]
    %v1904 = vld [vmem:[%s7 + $0x610] sm:$0xff]
    %v1905 = vld [vmem:[%s7 + $0x618] sm:$0xff]
    %v1906 = vld [vmem:[%s7 + $0x620] sm:$0xff]
    %v1907 = vld [vmem:[%s7 + $0x628] sm:$0xff]
    %v1908 = vld [vmem:[%s7 + $0x630] sm:$0xff]
    %v1909 = vld [vmem:[%s7 + $0x638] sm:$0xff]
    %v1910 = vld [vmem:[%s7 + $0x640] sm:$0xff]
    %v1911 = vld [vmem:[%s7 + $0x648] sm:$0xff]
    %v1912 = vld [vmem:[%s7 + $0x650] sm:$0xff]
    %v1913 = vld [vmem:[%s7 + $0x658] sm:$0xff]
    %v1914 = vld [vmem:[%s7 + $0x660] sm:$0xff]
    %v1915 = vld [vmem:[%s7 + $0x668] sm:$0xff]
    %v1916 = vld [vmem:[%s7 + $0x670] sm:$0xff]
    %v1917 = vld [vmem:[%s7 + $0x678] sm:$0xff]
    %v1918 = vld [vmem:[%s7 + $0x680] sm:$0xff]
    %v1919 = vld [vmem:[%s7 + $0x688] sm:$0xff]
    %v1920 = vld [vmem:[%s7 + $0x690] sm:$0xff]
    %v1921 = vld [vmem:[%s7 + $0x698] sm:$0xff]
    %v1922 = vld [vmem:[%s7 + $0x6a0] sm:$0xff]
    %v1923 = vld [vmem:[%s7 + $0x6a8] sm:$0xff]
    %v1924 = vld [vmem:[%s7 + $0x6b0] sm:$0xff]
    %v1925 = vld [vmem:[%s7 + $0x6b8] sm:$0xff]
    %v1926 = vld [vmem:[%s7 + $0x6c0] sm:$0xff]
    %v1927 = vld [vmem:[%s7 + $0x6c8] sm:$0xff]
    %v1928 = vld [vmem:[%s7 + $0x6d0] sm:$0xff]
    %v1929 = vld [vmem:[%s7 + $0x6d8] sm:$0xff]
    %v1930 = vld [vmem:[%s7 + $0x6e0] sm:$0xff]
    %v1931 = vld [vmem:[%s7 + $0x6e8] sm:$0xff]
    %v1932 = vld [vmem:[%s7 + $0x6f0] sm:$0xff]
    %v1933 = vld [vmem:[%s7 + $0x6f8] sm:$0xff]
    %v1934 = vld [vmem:[%s7 + $0x700] sm:$0xff]
    %v1935 = vld [vmem:[%s7 + $0x708] sm:$0xff]
    %v1936 = vld [vmem:[%s7 + $0x710] sm:$0xff]
    %v1937 = vld [vmem:[%s7 + $0x718] sm:$0xff]
    %v1938 = vld [vmem:[%s7 + $0x720] sm:$0xff]
    %v1939 = vld [vmem:[%s7 + $0x728] sm:$0xff]
    %v1940 = vld [vmem:[%s7 + $0x730] sm:$0xff]
    %v1941 = vld [vmem:[%s7 + $0x738] sm:$0xff]
    %v1942 = vld [vmem:[%s7 + $0x740] sm:$0xff]
    %v1943 = vld [vmem:[%s7 + $0x748] sm:$0xff]
    %v1944 = vld [vmem:[%s7 + $0x750] sm:$0xff]
    %v1945 = vld [vmem:[%s7 + $0x758] sm:$0xff]
    %v1946 = vld [vmem:[%s7 + $0x760] sm:$0xff]
    %v1947 = vld [vmem:[%s7 + $0x768] sm:$0xff]
    %v1948 = vld [vmem:[%s7 + $0x770] sm:$0xff]
    %v1949 = vld [vmem:[%s7 + $0x778] sm:$0xff]
    %v1950 = vld [vmem:[%s7 + $0x780] sm:$0xff]
    %v1951 = vld [vmem:[%s7 + $0x788] sm:$0xff]
    %v1952 = vld [vmem:[%s7 + $0x790] sm:$0xff]
    %v1953 = vld [vmem:[%s7 + $0x798] sm:$0xff]
    %v1954 = vld [vmem:[%s7 + $0x7a0] sm:$0xff]
    %v1955 = vld [vmem:[%s7 + $0x7a8] sm:$0xff]
    %v1956 = vld [vmem:[%s7 + $0x7b0] sm:$0xff]
    %v1957 = vld [vmem:[%s7 + $0x7b8] sm:$0xff]
    %v1958 = vld [vmem:[%s7 + $0x7c0] sm:$0xff]
    %v1959 = vld [vmem:[%s7 + $0x7c8] sm:$0xff]
    %v1960 = vld [vmem:[%s7 + $0x7d0] sm:$0xff]
    %v1961 = vld [vmem:[%s7 + $0x7d8] sm:$0xff]
    %v1962 = vld [vmem:[%s7 + $0x7e0] sm:$0xff]
    %v1963 = vld [vmem:[%s7 + $0x7e8] sm:$0xff]
    %v1964 = vld [vmem:[%s7 + $0x7f0] sm:$0xff]
    %v1965 = vld [vmem:[%s7 + $0x7f8] sm:$0xff]
    %v1966 = vld [vmem:[%s7 + $0x800] sm:$0xff]
    %v1967 = vld [vmem:[%s7 + $0x808] sm:$0xff]
    %v1968 = vld [vmem:[%s7 + $0x810] sm:$0xff]
    %v1969 = vld [vmem:[%s7 + $0x818] sm:$0xff]
    %v1970 = vld [vmem:[%s7 + $0x820] sm:$0xff]
    %v1971 = vld [vmem:[%s7 + $0x828] sm:$0xff]
    %v1972 = vld [vmem:[%s7 + $0x830] sm:$0xff]
    %v1973 = vld [vmem:[%s7 + $0x838] sm:$0xff]
    %v1974 = vld [vmem:[%s7 + $0x840] sm:$0xff]
    %v1975 = vld [vmem:[%s7 + $0x848] sm:$0xff]
    %v1976 = vld [vmem:[%s7 + $0x850] sm:$0xff]
    %v1977 = vld [vmem:[%s7 + $0x858] sm:$0xff]
    %v1978 = vld [vmem:[%s7 + $0x860] sm:$0xff]
    %v1979 = vld [vmem:[%s7 + $0x868] sm:$0xff]
    %v1980 = vld [vmem:[%s7 + $0x870] sm:$0xff]
    %v1981 = vld [vmem:[%s7 + $0x878] sm:$0xff]
    %v1982 = vld [vmem:[%s7 + $0x880] sm:$0xff]
    %v1983 = vld [vmem:[%s7 + $0x888] sm:$0xff]
    %v1984 = vld [vmem:[%s7 + $0x890] sm:$0xff]
    %v1985 = vld [vmem:[%s7 + $0x898] sm:$0xff]
    %v1986 = vld [vmem:[%s7 + $0x8a0] sm:$0xff]
    %v1987 = vld [vmem:[%s7 + $0x8a8] sm:$0xff]
    %v1988 = vld [vmem:[%s7 + $0x8b0] sm:$0xff]
    %v1989 = vld [vmem:[%s7 + $0x8b8] sm:$0xff]
    %v1990 = vld [vmem:[%s7 + $0x8c0] sm:$0xff]
    %v1991 = vld [vmem:[%s7 + $0x8c8] sm:$0xff]
    %v1992 = vld [vmem:[%s7 + $0x8d0] sm:$0xff]
    %v1993 = vld [vmem:[%s7 + $0x8d8] sm:$0xff]
    %v1994 = vld [vmem:[%s7 + $0x8e0] sm:$0xff]
    %v1995 = vld [vmem:[%s7 + $0x8e8] sm:$0xff]
    %v1996 = vld [vmem:[%s7 + $0x8f0] sm:$0xff]
    %v1997 = vld [vmem:[%s7 + $0x8f8] sm:$0xff]
    %v1998 = vld [vmem:[%s7 + $0x900] sm:$0xff]
    %v1999 = vld [vmem:[%s7 + $0x908] sm:$0xff]
    %v2000 = vld [vmem:[%s7 + $0x910] sm:$0xff]
    %v2001 = vld [vmem:[%s7 + $0x918] sm:$0xff]
    %v2002 = vld [vmem:[%s7 + $0x920] sm:$0xff]
    %v2003 = vld [vmem:[%s7 + $0x928] sm:$0xff]
    %v2004 = vld [vmem:[%s7 + $0x930] sm:$0xff]
    %v2005 = vld [vmem:[%s7 + $0x938] sm:$0xff]
    %v2006 = vld [vmem:[%s7 + $0x940] sm:$0xff]
    %v2007 = vld [vmem:[%s7 + $0x948] sm:$0xff]
    %v2008 = vld [vmem:[%s7 + $0x950] sm:$0xff]
    %v2009 = vld [vmem:[%s7 + $0x958] sm:$0xff]
    %v2010 = vld [vmem:[%s7 + $0x960] sm:$0xff]
    %v2011 = vld [vmem:[%s7 + $0x968] sm:$0xff]
    %v2012 = vld [vmem:[%s7 + $0x970] sm:$0xff]
    %v2013 = vld [vmem:[%s7 + $0x978] sm:$0xff]
    %v2014 = vld [vmem:[%s7 + $0x980] sm:$0xff]
    %v2015 = vld [vmem:[%s7 + $0x988] sm:$0xff]
    %v2016 = vld [vmem:[%s7 + $0x990] sm:$0xff]
    %v2017 = vld [vmem:[%s7 + $0x998] sm:$0xff]
    %v2018 = vld [vmem:[%s7 + $0x9a0] sm:$0xff]
    %v2019 = vld [vmem:[%s7 + $0x9a8] sm:$0xff]
    %v2020 = vld [vmem:[%s7 + $0x9b0] sm:$0xff]
    %v2021 = vld [vmem:[%s7 + $0x9b8] sm:$0xff]
    %v2022 = vld [vmem:[%s7 + $0x9c0] sm:$0xff]
    %v2023 = vld [vmem:[%s7 + $0x9c8] sm:$0xff]
    %v2024 = vld [vmem:[%s7 + $0x9d0] sm:$0xff]
    %v2025 = vld [vmem:[%s7 + $0x9d8] sm:$0xff]
    %v2026 = vld [vmem:[%s7 + $0x9e0] sm:$0xff]
    %v2027 = vld [vmem:[%s7 + $0x9e8] sm:$0xff]
    %v2028 = vld [vmem:[%s7 + $0x9f0] sm:$0xff]
    %v2029 = vld [vmem:[%s7 + $0x9f8] sm:$0xff]
    %v2030 = vld [vmem:[%s7 + $0xa00] sm:$0xff]
    %v2031 = vld [vmem:[%s7 + $0xa08] sm:$0xff]
    %v2032 = vld [vmem:[%s7 + $0xa10] sm:$0xff]
    %v2033 = vld [vmem:[%s7 + $0xa18] sm:$0xff]
    %v2034 = vld [vmem:[%s7 + $0xa20] sm:$0xff]
    %v2035 = vld [vmem:[%s7 + $0xa28] sm:$0xff]
    %v2036 = vld [vmem:[%s7 + $0xa30] sm:$0xff]
    %v2037 = vld [vmem:[%s7 + $0xa38] sm:$0xff]
    %v2038 = vld [vmem:[%s7 + $0xa40] sm:$0xff]
    %v2039 = vld [vmem:[%s7 + $0xa48] sm:$0xff]
    %v2040 = vld [vmem:[%s7 + $0xa50] sm:$0xff]
    %v2041 = vld [vmem:[%s7 + $0xa58] sm:$0xff]
    %v2042 = vld [vmem:[%s7 + $0xa60] sm:$0xff]
    %v2043 = vld [vmem:[%s7 + $0xa68] sm:$0xff]
    %v2044 = vld [vmem:[%s7 + $0xa70] sm:$0xff]
    %v2045 = vld [vmem:[%s7 + $0xa78] sm:$0xff]
    %v2046 = vld [vmem:[%s7 + $0xa80] sm:$0xff]
    %v2047 = vld [vmem:[%s7 + $0xa88] sm:$0xff]
    %v2048 = vld [vmem:[%s7 + $0xa90] sm:$0xff]
    %v2049 = vld [vmem:[%s7 + $0xa98] sm:$0xff]
    %v2050 = vld [vmem:[%s7 + $0xaa0] sm:$0xff]
    %v2051 = vld [vmem:[%s7 + $0xaa8] sm:$0xff]
    %v2052 = vld [vmem:[%s7 + $0xab0] sm:$0xff]
    %v2053 = vld [vmem:[%s7 + $0xab8] sm:$0xff]
    %v2054 = vld [vmem:[%s7 + $0xac0] sm:$0xff]
    %v2055 = vld [vmem:[%s7 + $0xac8] sm:$0xff]
    %v2056 = vld [vmem:[%s7 + $0xad0] sm:$0xff]
    %v2057 = vld [vmem:[%s7 + $0xad8] sm:$0xff]
    %v2058 = vld [vmem:[%s7 + $0xae0] sm:$0xff]
    %v2059 = vld [vmem:[%s7 + $0xae8] sm:$0xff]
    %v2060 = vld [vmem:[%s7 + $0xaf0] sm:$0xff]
    %v2061 = vld [vmem:[%s7 + $0xaf8] sm:$0xff]
    %v2062 = vld [vmem:[%s7 + $0xb00] sm:$0xff]
    %v2063 = vld [vmem:[%s7 + $0xb08] sm:$0xff]
    %v2064 = vld [vmem:[%s7 + $0xb10] sm:$0xff]
    %v2065 = vld [vmem:[%s7 + $0xb18] sm:$0xff]
    %v2066 = vld [vmem:[%s7 + $0xb20] sm:$0xff]
    %v2067 = vld [vmem:[%s7 + $0xb28] sm:$0xff]
    %v2068 = vld [vmem:[%s7 + $0xb30] sm:$0xff]
    %v2069 = vld [vmem:[%s7 + $0xb38] sm:$0xff]
    %v2070 = vld [vmem:[%s7 + $0xb40] sm:$0xff]
    %v2071 = vld [vmem:[%s7 + $0xb48] sm:$0xff]
    %v2072 = vld [vmem:[%s7 + $0xb50] sm:$0xff]
    %v2073 = vld [vmem:[%s7 + $0xb58] sm:$0xff]
    %v2074 = vld [vmem:[%s7 + $0xb60] sm:$0xff]
    %v2075 = vld [vmem:[%s7 + $0xb68] sm:$0xff]
    %v2076 = vld [vmem:[%s7 + $0xb70] sm:$0xff]
    %v2077 = vld [vmem:[%s7 + $0xb78] sm:$0xff]
    %v2078 = vld [vmem:[%s7 + $0xb80] sm:$0xff]
    %v2079 = vld [vmem:[%s7 + $0xb88] sm:$0xff]
    %v2080 = vld [vmem:[%s7 + $0xb90] sm:$0xff]
    %v2081 = vld [vmem:[%s7 + $0xb98] sm:$0xff]
    %v2082 = vld [vmem:[%s7 + $0xba0] sm:$0xff]
    %v2083 = vld [vmem:[%s7 + $0xba8] sm:$0xff]
    %v2084 = vld [vmem:[%s7 + $0xbb0] sm:$0xff]
    %v2085 = vld [vmem:[%s7 + $0xbb8] sm:$0xff]
    %v2086 = vld [vmem:[%s7 + $0xbc0] sm:$0xff]
    %v2087 = vld [vmem:[%s7 + $0xbc8] sm:$0xff]
    %v2088 = vld [vmem:[%s7 + $0xbd0] sm:$0xff]
    %v2089 = vld [vmem:[%s7 + $0xbd8] sm:$0xff]
    %v2090 = vld [vmem:[%s7 + $0xbe0] sm:$0xff]
    %v2091 = vld [vmem:[%s7 + $0xbe8] sm:$0xff]
    %v2092 = vld [vmem:[%s7 + $0xbf0] sm:$0xff]
    %v2093 = vld [vmem:[%s7 + $0xbf8] sm:$0xff]
    %v2094 = vld [vmem:[%s7 + $0xc00] sm:$0xff]
    %v2095 = vld [vmem:[%s7 + $0xc08] sm:$0xff]
    %v2096 = vld [vmem:[%s7 + $0xc10] sm:$0xff]
    %v2097 = vld [vmem:[%s7 + $0xc18] sm:$0xff]
    %v2098 = vld [vmem:[%s7 + $0xc20] sm:$0xff]
    %v2099 = vld [vmem:[%s7 + $0xc28] sm:$0xff]
    %v2100 = vld [vmem:[%s7 + $0xc30] sm:$0xff]
    %v2101 = vld [vmem:[%s7 + $0xc38] sm:$0xff]
    %v2102 = vld [vmem:[%s7 + $0xc40] sm:$0xff]
    %v2103 = vld [vmem:[%s7 + $0xc48] sm:$0xff]
    %v2104 = vld [vmem:[%s7 + $0xc50] sm:$0xff]
    %v2105 = vld [vmem:[%s7 + $0xc58] sm:$0xff]
    %v2106 = vld [vmem:[%s7 + $0xc60] sm:$0xff]
    %v2107 = vld [vmem:[%s7 + $0xc68] sm:$0xff]
    %v2108 = vld [vmem:[%s7 + $0xc70] sm:$0xff]
    %v2109 = vld [vmem:[%s7 + $0xc78] sm:$0xff]
    %v2110 = vld [vmem:[%s7 + $0xc80] sm:$0xff]
    %v2111 = vld [vmem:[%s7 + $0xc88] sm:$0xff]
    %v2112 = vld [vmem:[%s7 + $0xc90] sm:$0xff]
    %v2113 = vld [vmem:[%s7 + $0xc98] sm:$0xff]
    %v2114 = vld [vmem:[%s7 + $0xca0] sm:$0xff]
    %v2115 = vld [vmem:[%s7 + $0xca8] sm:$0xff]
    %v2116 = vld [vmem:[%s7 + $0xcb0] sm:$0xff]
    %v2117 = vld [vmem:[%s7 + $0xcb8] sm:$0xff]
    %v2118 = vld [vmem:[%s7 + $0xcc0] sm:$0xff]
    %v2119 = vld [vmem:[%s7 + $0xcc8] sm:$0xff]
    %v2120 = vld [vmem:[%s7 + $0xcd0] sm:$0xff]
    %v2121 = vld [vmem:[%s7 + $0xcd8] sm:$0xff]
    %v2122 = vld [vmem:[%s7 + $0xce0] sm:$0xff]
    %v2123 = vld [vmem:[%s7 + $0xce8] sm:$0xff]
    %v2124 = vld [vmem:[%s7 + $0xcf0] sm:$0xff]
    %v2125 = vld [vmem:[%s7 + $0xcf8] sm:$0xff]
    %v2126 = vld [vmem:[%s7 + $0xd00] sm:$0xff]
    %v2127 = vld [vmem:[%s7 + $0xd08] sm:$0xff]
    %v2128 = vld [vmem:[%s7 + $0xd10] sm:$0xff]
    %v2129 = vld [vmem:[%s7 + $0xd18] sm:$0xff]
    %v2130 = vld [vmem:[%s7 + $0xd20] sm:$0xff]
    %v2131 = vld [vmem:[%s7 + $0xd28] sm:$0xff]
    %v2132 = vld [vmem:[%s7 + $0xd30] sm:$0xff]
    %v2133 = vld [vmem:[%s7 + $0xd38] sm:$0xff]
    %v2134 = vld [vmem:[%s7 + $0xd40] sm:$0xff]
    %v2135 = vld [vmem:[%s7 + $0xd48] sm:$0xff]
    %v2136 = vld [vmem:[%s7 + $0xd50] sm:$0xff]
    %v2137 = vld [vmem:[%s7 + $0xd58] sm:$0xff]
    %v2138 = vld [vmem:[%s7 + $0xd60] sm:$0xff]
    %v2139 = vld [vmem:[%s7 + $0xd68] sm:$0xff]
    %v2140 = vld [vmem:[%s7 + $0xd70] sm:$0xff]
    %v2141 = vld [vmem:[%s7 + $0xd78] sm:$0xff]
    %v2142 = vld [vmem:[%s7 + $0xd80] sm:$0xff]
    %v2143 = vld [vmem:[%s7 + $0xd88] sm:$0xff]
    %v2144 = vld [vmem:[%s7 + $0xd90] sm:$0xff]
    %v2145 = vld [vmem:[%s7 + $0xd98] sm:$0xff]
    %v2146 = vld [vmem:[%s7 + $0xda0] sm:$0xff]
    %v2147 = vld [vmem:[%s7 + $0xda8] sm:$0xff]
    %v2148 = vld [vmem:[%s7 + $0xdb0] sm:$0xff]
    %v2149 = vld [vmem:[%s7 + $0xdb8] sm:$0xff]
    %v2150 = vld [vmem:[%s7 + $0xdc0] sm:$0xff]
    %v2151 = vld [vmem:[%s7 + $0xdc8] sm:$0xff]
    %v2152 = vld [vmem:[%s7 + $0xdd0] sm:$0xff]
    %v2153 = vld [vmem:[%s7 + $0xdd8] sm:$0xff]
    %v2154 = vld [vmem:[%s7 + $0xde0] sm:$0xff]
    %v2155 = vld [vmem:[%s7 + $0xde8] sm:$0xff]
    %v2156 = vld [vmem:[%s7 + $0xdf0] sm:$0xff]
    %v2157 = vld [vmem:[%s7 + $0xdf8] sm:$0xff]
    %v2158 = vld [vmem:[%s7 + $0xe00] sm:$0xff]
    %v2159 = vld [vmem:[%s7 + $0xe08] sm:$0xff]
    %v2160 = vld [vmem:[%s7 + $0xe10] sm:$0xff]
    %v2161 = vld [vmem:[%s7 + $0xe18] sm:$0xff]
    %v2162 = vld [vmem:[%s7 + $0xe20] sm:$0xff]
    %v2163 = vld [vmem:[%s7 + $0xe28] sm:$0xff]
    %v2164 = vld [vmem:[%s7 + $0xe30] sm:$0xff]
    %v2165 = vld [vmem:[%s7 + $0xe38] sm:$0xff]
    %v2166 = vld [vmem:[%s7 + $0xe40] sm:$0xff]
    %v2167 = vld [vmem:[%s7 + $0xe48] sm:$0xff]
    %v2168 = vld [vmem:[%s7 + $0xe50] sm:$0xff]
    %v2169 = vld [vmem:[%s7 + $0xe58] sm:$0xff]
    %v2170 = vld [vmem:[%s7 + $0xe60] sm:$0xff]
    %v2171 = vld [vmem:[%s7 + $0xe68] sm:$0xff]
    %v2172 = vld [vmem:[%s7 + $0xe70] sm:$0xff]
    %v2173 = vld [vmem:[%s7 + $0xe78] sm:$0xff]
    %v2174 = vld [vmem:[%s7 + $0xe80] sm:$0xff]
    %v2175 = vld [vmem:[%s7 + $0xe88] sm:$0xff]
    %v2176 = vld [vmem:[%s7 + $0xe90] sm:$0xff]
    %v2177 = vld [vmem:[%s7 + $0xe98] sm:$0xff]
    %v2178 = vld [vmem:[%s7 + $0xea0] sm:$0xff]
    %v2179 = vld [vmem:[%s7 + $0xea8] sm:$0xff]
    %v2180 = vld [vmem:[%s7 + $0xeb0] sm:$0xff]
    %v2181 = vld [vmem:[%s7 + $0xeb8] sm:$0xff]
    %v2182 = vld [vmem:[%s7 + $0xec0] sm:$0xff]
    %v2183 = vld [vmem:[%s7 + $0xec8] sm:$0xff]
    %v2184 = vld [vmem:[%s7 + $0xed0] sm:$0xff]
    %v2185 = vld [vmem:[%s7 + $0xed8] sm:$0xff]
    %v2186 = vld [vmem:[%s7 + $0xee0] sm:$0xff]
    %v2187 = vld [vmem:[%s7 + $0xee8] sm:$0xff]
    %v2188 = vld [vmem:[%s7 + $0xef0] sm:$0xff]
    %v2189 = vld [vmem:[%s7 + $0xef8] sm:$0xff]
    %v2190 = vld [vmem:[%s7 + $0xf00] sm:$0xff]
    %v2191 = vld [vmem:[%s7 + $0xf08] sm:$0xff]
    %v2192 = vld [vmem:[%s7 + $0xf10] sm:$0xff]
    %v2193 = vld [vmem:[%s7 + $0xf18] sm:$0xff]
    %v2194 = vld [vmem:[%s7 + $0xf20] sm:$0xff]
    %v2195 = vld [vmem:[%s7 + $0xf28] sm:$0xff]
    %v2196 = vld [vmem:[%s7 + $0xf30] sm:$0xff]
    %v2197 = vld [vmem:[%s7 + $0xf38] sm:$0xff]
    %v2198 = vld [vmem:[%s7 + $0xf40] sm:$0xff]
    %v2199 = vld [vmem:[%s7 + $0xf48] sm:$0xff]
    %v2200 = vld [vmem:[%s7 + $0xf50] sm:$0xff]
    %v2201 = vld [vmem:[%s7 + $0xf58] sm:$0xff]
    %v2202 = vld [vmem:[%s7 + $0xf60] sm:$0xff]
    %v2203 = vld [vmem:[%s7 + $0xf68] sm:$0xff]
    %v2204 = vld [vmem:[%s7 + $0xf70] sm:$0xff]
    %v2205 = vld [vmem:[%s7 + $0xf78] sm:$0xff]
    %v2206 = vld [vmem:[%s7 + $0xf80] sm:$0xff]
    %v2207 = vld [vmem:[%s7 + $0xf88] sm:$0xff]
    %v2208 = vld [vmem:[%s7 + $0xf90] sm:$0xff]
    %v2209 = vld [vmem:[%s7 + $0xf98] sm:$0xff]
    %v2210 = vld [vmem:[%s7 + $0xfa0] sm:$0xff]
    %v2211 = vld [vmem:[%s7 + $0xfa8] sm:$0xff]
    %v2212 = vld [vmem:[%s7 + $0xfb0] sm:$0xff]
    %v2213 = vld [vmem:[%s7 + $0xfb8] sm:$0xff]
    %v2214 = vld [vmem:[%s7 + $0xfc0] sm:$0xff]
    %v2215 = vld [vmem:[%s7 + $0xfc8] sm:$0xff]
    %v2216 = vld [vmem:[%s7 + $0xfd0] sm:$0xff]
    %v2217 = vld [vmem:[%s7 + $0xfd8] sm:$0xff]
    %v2218 = vld [vmem:[%s7 + $0xfe0] sm:$0xff]
    %v2219 = vld [vmem:[%s7 + $0xfe8] sm:$0xff]
    %v2220 = vld [vmem:[%s7 + $0xff0] sm:$0xff]
    %v2221 = vld [vmem:[%s7 + $0xff8] sm:$0xff]
    %v2222 = vld [vmem:[%s7 + $0x1000] sm:$0xff]
    %v2223 = vld [vmem:[%s7 + $0x1008] sm:$0xff]
    %v2224 = vld [vmem:[%s7 + $0x1010] sm:$0xff]
    %v2225 = vld [vmem:[%s7 + $0x1018] sm:$0xff]
    %v2226 = vld [vmem:[%s7 + $0x1020] sm:$0xff]
    %v2227 = vld [vmem:[%s7 + $0x1028] sm:$0xff]
    %v2228 = vld [vmem:[%s7 + $0x1030] sm:$0xff]
    %v2229 = vld [vmem:[%s7 + $0x1038] sm:$0xff]
    %v2230 = vld [vmem:[%s7 + $0x1040] sm:$0xff]
    %v2231 = vld [vmem:[%s7 + $0x1048] sm:$0xff]
    %v2232 = vld [vmem:[%s7 + $0x1050] sm:$0xff]
    %v2233 = vld [vmem:[%s7 + $0x1058] sm:$0xff]
    %v2234 = vld [vmem:[%s7 + $0x1060] sm:$0xff]
    %v2235 = vld [vmem:[%s7 + $0x1068] sm:$0xff]
    %v2236 = vld [vmem:[%s7 + $0x1070] sm:$0xff]
    %v2237 = vld [vmem:[%s7 + $0x1078] sm:$0xff]
    %v2238 = vld [vmem:[%s7 + $0x1080] sm:$0xff]
    %v2239 = vld [vmem:[%s7 + $0x1088] sm:$0xff]
    %v2240 = vld [vmem:[%s7 + $0x1090] sm:$0xff]
    %v2241 = vld [vmem:[%s7 + $0x1098] sm:$0xff]
    %v2242 = vld [vmem:[%s7 + $0x10a0] sm:$0xff]
    %v2243 = vld [vmem:[%s7 + $0x10a8] sm:$0xff]
    %v2244 = vld [vmem:[%s7 + $0x10b0] sm:$0xff]
    %v2245 = vld [vmem:[%s7 + $0x10b8] sm:$0xff]
    %v2246 = vld [vmem:[%s7 + $0x10c0] sm:$0xff]
    %v2247 = vld [vmem:[%s7 + $0x10c8] sm:$0xff]
    %v2248 = vld [vmem:[%s7 + $0x10d0] sm:$0xff]
    %v2249 = vld [vmem:[%s7 + $0x10d8] sm:$0xff]
    %v2250 = vld [vmem:[%s7 + $0x10e0] sm:$0xff]
    %v2251 = vld [vmem:[%s7 + $0x10e8] sm:$0xff]
    %v2252 = vld [vmem:[%s7 + $0x10f0] sm:$0xff]
    %v2253 = vld [vmem:[%s7 + $0x10f8] sm:$0xff]
    %v2254 = vld [vmem:[%s7 + $0x1100] sm:$0xff]
    %v2255 = vld [vmem:[%s7 + $0x1108] sm:$0xff]
    %v2256 = vld [vmem:[%s7 + $0x1110] sm:$0xff]
    %v2257 = vld [vmem:[%s7 + $0x1118] sm:$0xff]
    %v2258 = vld [vmem:[%s7 + $0x1120] sm:$0xff]
    %v2259 = vld [vmem:[%s7 + $0x1128] sm:$0xff]
    %v2260 = vld [vmem:[%s7 + $0x1130] sm:$0xff]
    %v2261 = vld [vmem:[%s7 + $0x1138] sm:$0xff]
    %v2262 = vld [vmem:[%s7 + $0x1140] sm:$0xff]
    %v2263 = vld [vmem:[%s7 + $0x1148] sm:$0xff]
    %v2264 = vld [vmem:[%s7 + $0x1150] sm:$0xff]
    %v2265 = vld [vmem:[%s7 + $0x1158] sm:$0xff]
    %v2266 = vld [vmem:[%s7 + $0x1160] sm:$0xff]
    %v2267 = vld [vmem:[%s7 + $0x1168] sm:$0xff]
    %v2268 = vld [vmem:[%s7 + $0x1170] sm:$0xff]
    %v2269 = vld [vmem:[%s7 + $0x1178] sm:$0xff]
    %v2270 = vld [vmem:[%s7 + $0x1180] sm:$0xff]
    %v2271 = vld [vmem:[%s7 + $0x1188] sm:$0xff]
    %v2272 = vld [vmem:[%s7 + $0x1190] sm:$0xff]
    %v2273 = vld [vmem:[%s7 + $0x1198] sm:$0xff]
    %v2274 = vld [vmem:[%s7 + $0x11a0] sm:$0xff]
    %v2275 = vld [vmem:[%s7 + $0x11a8] sm:$0xff]
    %v2276 = vld [vmem:[%s7 + $0x11b0] sm:$0xff]
    %v2277 = vld [vmem:[%s7 + $0x11b8] sm:$0xff]
    %v2278 = vld [vmem:[%s7 + $0x11c0] sm:$0xff]
    %v2279 = vld [vmem:[%s7 + $0x11c8] sm:$0xff]
    %v2280 = vld [vmem:[%s7 + $0x11d0] sm:$0xff]
    %v2281 = vld [vmem:[%s7 + $0x11d8] sm:$0xff]
    %v2282 = vld [vmem:[%s7 + $0x11e0] sm:$0xff]
    %v2283 = vld [vmem:[%s7 + $0x11e8] sm:$0xff]
    %v2284 = vld [vmem:[%s7 + $0x11f0] sm:$0xff]
    %v2285 = vld [vmem:[%s7 + $0x11f8] sm:$0xff]
    %v2286 = vld [vmem:[%s7 + $0x1200] sm:$0xff]
    %v2287 = vld [vmem:[%s7 + $0x1208] sm:$0xff]
    %v2288 = vld [vmem:[%s7 + $0x1210] sm:$0xff]
    %v2289 = vld [vmem:[%s7 + $0x1218] sm:$0xff]
    %v2290 = vld [vmem:[%s7 + $0x1220] sm:$0xff]
    %v2291 = vld [vmem:[%s7 + $0x1228] sm:$0xff]
    %v2292 = vld [vmem:[%s7 + $0x1230] sm:$0xff]
    %v2293 = vld [vmem:[%s7 + $0x1238] sm:$0xff]
    %v2294 = vld [vmem:[%s7 + $0x1240] sm:$0xff]
    %v2295 = vld [vmem:[%s7 + $0x1248] sm:$0xff]
    %v2296 = vld [vmem:[%s7 + $0x1250] sm:$0xff]
    %v2297 = vld [vmem:[%s7 + $0x1258] sm:$0xff]
    %v2298 = vld [vmem:[%s7 + $0x1260] sm:$0xff]
    %v2299 = vld [vmem:[%s7 + $0x1268] sm:$0xff]
    %v2300 = vld [vmem:[%s7 + $0x1270] sm:$0xff]
    %v2301 = vld [vmem:[%s7 + $0x1278] sm:$0xff]
    %v2302 = vld [vmem:[%s7 + $0x1280] sm:$0xff]
    %v2303 = vld [vmem:[%s7 + $0x1288] sm:$0xff]
    %v2304 = vld [vmem:[%s7 + $0x1290] sm:$0xff]
    %v2305 = vld [vmem:[%s7 + $0x1298] sm:$0xff]
    %v2306 = vld [vmem:[%s7 + $0x12a0] sm:$0xff]
    %v2307 = vld [vmem:[%s7 + $0x12a8] sm:$0xff]
    %v2308 = vld [vmem:[%s7 + $0x12b0] sm:$0xff]
    %v2309 = vld [vmem:[%s7 + $0x12b8] sm:$0xff]
    %v2310 = vld [vmem:[%s7 + $0x12c0] sm:$0xff]
    %v2311 = vld [vmem:[%s7 + $0x12c8] sm:$0xff]
    %v2312 = vld [vmem:[%s7 + $0x12d0] sm:$0xff]
    %v2313 = vld [vmem:[%s7 + $0x12d8] sm:$0xff]
    %v2314 = vld [vmem:[%s7 + $0x12e0] sm:$0xff]
    %v2315 = vld [vmem:[%s7 + $0x12e8] sm:$0xff]
    %v2316 = vld [vmem:[%s7 + $0x12f0] sm:$0xff]
    %v2317 = vld [vmem:[%s7 + $0x12f8] sm:$0xff]
    %v2318 = vld [vmem:[%s7 + $0x1300] sm:$0xff]
    %v2319 = vld [vmem:[%s7 + $0x1308] sm:$0xff]
    %v2320 = vld [vmem:[%s7 + $0x1310] sm:$0xff]
    %v2321 = vld [vmem:[%s7 + $0x1318] sm:$0xff]
    %v2322 = vld [vmem:[%s7 + $0x1320] sm:$0xff]
    %v2323 = vld [vmem:[%s7 + $0x1328] sm:$0xff]
    %v2324 = vld [vmem:[%s7 + $0x1330] sm:$0xff]
    %v2325 = vld [vmem:[%s7 + $0x1338] sm:$0xff]
    %v2326 = vld [vmem:[%s7 + $0x1340] sm:$0xff]
    %v2327 = vld [vmem:[%s7 + $0x1348] sm:$0xff]
    %v2328 = vld [vmem:[%s7 + $0x1350] sm:$0xff]
    %v2329 = vld [vmem:[%s7 + $0x1358] sm:$0xff]
    %v2330 = vld [vmem:[%s7 + $0x1360] sm:$0xff]
    %v2331 = vld [vmem:[%s7 + $0x1368] sm:$0xff]
    %v2332 = vld [vmem:[%s7 + $0x1370] sm:$0xff]
    %v2333 = vld [vmem:[%s7 + $0x1378] sm:$0xff]
    %v2334 = vld [vmem:[%s7 + $0x1380] sm:$0xff]
    %v2335 = vld [vmem:[%s7 + $0x1388] sm:$0xff]
    %v2336 = vld [vmem:[%s7 + $0x1390] sm:$0xff]
    %v2337 = vld [vmem:[%s7 + $0x1398] sm:$0xff]
    %v2338 = vld [vmem:[%s7 + $0x13a0] sm:$0xff]
    %v2339 = vld [vmem:[%s7 + $0x13a8] sm:$0xff]
    %v2340 = vld [vmem:[%s7 + $0x13b0] sm:$0xff]
    %v2341 = vld [vmem:[%s7 + $0x13b8] sm:$0xff]
    %v2342 = vld [vmem:[%s7 + $0x13c0] sm:$0xff]
    %v2343 = vld [vmem:[%s7 + $0x13c8] sm:$0xff]
    %v2344 = vld [vmem:[%s7 + $0x13d0] sm:$0xff]
    %v2345 = vld [vmem:[%s7 + $0x13d8] sm:$0xff]
    %v2346 = vld [vmem:[%s7 + $0x13e0] sm:$0xff]
    %v2347 = vld [vmem:[%s7 + $0x13e8] sm:$0xff]
    %v2348 = vld [vmem:[%s7 + $0x13f0] sm:$0xff]
    %v2349 = vld [vmem:[%s7 + $0x13f8] sm:$0xff]
    %v2350 = vld [vmem:[%s7 + $0x1400] sm:$0xff]
    %v2351 = vld [vmem:[%s7 + $0x1408] sm:$0xff]
    %v2352 = vld [vmem:[%s7 + $0x1410] sm:$0xff]
    %v2353 = vld [vmem:[%s7 + $0x1418] sm:$0xff]
    %v2354 = vld [vmem:[%s7 + $0x1420] sm:$0xff]
    %v2355 = vld [vmem:[%s7 + $0x1428] sm:$0xff]
    %v2356 = vld [vmem:[%s7 + $0x1430] sm:$0xff]
    %v2357 = vld [vmem:[%s7 + $0x1438] sm:$0xff]
    %v2358 = vld [vmem:[%s7 + $0x1440] sm:$0xff]
    %v2359 = vld [vmem:[%s7 + $0x1448] sm:$0xff]
    %v2360 = vld [vmem:[%s7 + $0x1450] sm:$0xff]
    %v2361 = vld [vmem:[%s7 + $0x1458] sm:$0xff]
    %v2362 = vld [vmem:[%s7 + $0x1460] sm:$0xff]
    %v2363 = vld [vmem:[%s7 + $0x1468] sm:$0xff]
    %v2364 = vld [vmem:[%s7 + $0x1470] sm:$0xff]
    %v2365 = vld [vmem:[%s7 + $0x1478] sm:$0xff]
    %v2366 = vld [vmem:[%s7 + $0x1480] sm:$0xff]
    %v2367 = vld [vmem:[%s7 + $0x1488] sm:$0xff]
    %v2368 = vld [vmem:[%s7 + $0x1490] sm:$0xff]
    %v2369 = vld [vmem:[%s7 + $0x1498] sm:$0xff]
    %v2370 = vld [vmem:[%s7 + $0x14a0] sm:$0xff]
    %v2371 = vld [vmem:[%s7 + $0x14a8] sm:$0xff]
    %v2372 = vld [vmem:[%s7 + $0x14b0] sm:$0xff]
    %v2373 = vld [vmem:[%s7 + $0x14b8] sm:$0xff]
    %v2374 = vld [vmem:[%s7 + $0x14c0] sm:$0xff]
    %v2375 = vld [vmem:[%s7 + $0x14c8] sm:$0xff]
    %v2376 = vld [vmem:[%s7 + $0x14d0] sm:$0xff]
    %v2377 = vld [vmem:[%s7 + $0x14d8] sm:$0xff]
    %v2378 = vld [vmem:[%s7 + $0x14e0] sm:$0xff]
    %v2379 = vld [vmem:[%s7 + $0x14e8] sm:$0xff]
    %v2380 = vld [vmem:[%s7 + $0x14f0] sm:$0xff]
    %v2381 = vld [vmem:[%s7 + $0x14f8] sm:$0xff]
    %v2382 = vld [vmem:[%s7 + $0x1500] sm:$0xff]
    %v2383 = vld [vmem:[%s7 + $0x1508] sm:$0xff]
    %v2384 = vld [vmem:[%s7 + $0x1510] sm:$0xff]
    %v2385 = vld [vmem:[%s7 + $0x1518] sm:$0xff]
    %v2386 = vld [vmem:[%s7 + $0x1520] sm:$0xff]
    %v2387 = vld [vmem:[%s7 + $0x1528] sm:$0xff]
    %v2388 = vld [vmem:[%s7 + $0x1530] sm:$0xff]
    %v2389 = vld [vmem:[%s7 + $0x1538] sm:$0xff]
    %v2390 = vld [vmem:[%s7 + $0x1540] sm:$0xff]
    %v2391 = vld [vmem:[%s7 + $0x1548] sm:$0xff]
    %v2392 = vld [vmem:[%s7 + $0x1550] sm:$0xff]
    %v2393 = vld [vmem:[%s7 + $0x1558] sm:$0xff]
    %v2394 = vld [vmem:[%s7 + $0x1560] sm:$0xff]
    %v2395 = vld [vmem:[%s7 + $0x1568] sm:$0xff]
    %v2396 = vld [vmem:[%s7 + $0x1570] sm:$0xff]
    %v2397 = vld [vmem:[%s7 + $0x1578] sm:$0xff]
    %v2398 = vld [vmem:[%s7 + $0x1580] sm:$0xff]
    %v2399 = vld [vmem:[%s7 + $0x1588] sm:$0xff]
    %v2400 = vld [vmem:[%s7 + $0x1590] sm:$0xff]
    %v2401 = vld [vmem:[%s7 + $0x1598] sm:$0xff]
    %v2402 = vld [vmem:[%s7 + $0x15a0] sm:$0xff]
    %v2403 = vld [vmem:[%s7 + $0x15a8] sm:$0xff]
    %v2404 = vld [vmem:[%s7 + $0x15b0] sm:$0xff]
    %v2405 = vld [vmem:[%s7 + $0x15b8] sm:$0xff]
    %v2406 = vld [vmem:[%s7 + $0x15c0] sm:$0xff]
    %v2407 = vld [vmem:[%s7 + $0x15c8] sm:$0xff]
    %v2408 = vld [vmem:[%s7 + $0x15d0] sm:$0xff]
    %v2409 = vld [vmem:[%s7 + $0x15d8] sm:$0xff]
    %v2410 = vld [vmem:[%s7 + $0x15e0] sm:$0xff]
    %v2411 = vld [vmem:[%s7 + $0x15e8] sm:$0xff]
    %v2412 = vld [vmem:[%s7 + $0x15f0] sm:$0xff]
    %v2413 = vld [vmem:[%s7 + $0x15f8] sm:$0xff]
    %v2414 = vld [vmem:[%s7 + $0x1600] sm:$0xff]
    %v2415 = vld [vmem:[%s7 + $0x1608] sm:$0xff]
    %v2416 = vld [vmem:[%s7 + $0x1610] sm:$0xff]
    %v2417 = vld [vmem:[%s7 + $0x1618] sm:$0xff]
    %v2418 = vld [vmem:[%s7 + $0x1620] sm:$0xff]
    %v2419 = vld [vmem:[%s7 + $0x1628] sm:$0xff]
    %v2420 = vld [vmem:[%s7 + $0x1630] sm:$0xff]
    %v2421 = vld [vmem:[%s7 + $0x1638] sm:$0xff]
    %v2422 = vld [vmem:[%s7 + $0x1640] sm:$0xff]
    %v2423 = vld [vmem:[%s7 + $0x1648] sm:$0xff]
    %v2424 = vld [vmem:[%s7 + $0x1650] sm:$0xff]
    %v2425 = vld [vmem:[%s7 + $0x1658] sm:$0xff]
    %v2426 = vld [vmem:[%s7 + $0x1660] sm:$0xff]
    %v2427 = vld [vmem:[%s7 + $0x1668] sm:$0xff]
    %v2428 = vld [vmem:[%s7 + $0x1670] sm:$0xff]
    %v2429 = vld [vmem:[%s7 + $0x1678] sm:$0xff]
    %v2430 = vld [vmem:[%s7 + $0x1680] sm:$0xff]
    %v2431 = vld [vmem:[%s7 + $0x1688] sm:$0xff]
    %v2432 = vld [vmem:[%s7 + $0x1690] sm:$0xff]
    %v2433 = vld [vmem:[%s7 + $0x1698] sm:$0xff]
    %v2434 = vld [vmem:[%s7 + $0x16a0] sm:$0xff]
    %v2435 = vld [vmem:[%s7 + $0x16a8] sm:$0xff]
    %v2436 = vld [vmem:[%s7 + $0x16b0] sm:$0xff]
    %v2437 = vld [vmem:[%s7 + $0x16b8] sm:$0xff]
    %v2438 = vld [vmem:[%s7 + $0x16c0] sm:$0xff]
    %v2439 = vld [vmem:[%s7 + $0x16c8] sm:$0xff]
    %v2440 = vld [vmem:[%s7 + $0x16d0] sm:$0xff]
    %v2441 = vld [vmem:[%s7 + $0x16d8] sm:$0xff]
    %v2442 = vld [vmem:[%s7 + $0x16e0] sm:$0xff]
    %v2443 = vld [vmem:[%s7 + $0x16e8] sm:$0xff]
    %v2444 = vld [vmem:[%s7 + $0x16f0] sm:$0xff]
    %v2445 = vld [vmem:[%s7 + $0x16f8] sm:$0xff]
    %v2446 = vld [vmem:[%s7 + $0x1700] sm:$0xff]
    %v2447 = vld [vmem:[%s7 + $0x1708] sm:$0xff]
    %v2448 = vld [vmem:[%s7 + $0x1710] sm:$0xff]
    %v2449 = vld [vmem:[%s7 + $0x1718] sm:$0xff]
    %v2450 = vld [vmem:[%s7 + $0x1720] sm:$0xff]
    %v2451 = vld [vmem:[%s7 + $0x1728] sm:$0xff]
    %v2452 = vld [vmem:[%s7 + $0x1730] sm:$0xff]
    %v2453 = vld [vmem:[%s7 + $0x1738] sm:$0xff]
    %v2454 = vld [vmem:[%s7 + $0x1740] sm:$0xff]
    %v2455 = vld [vmem:[%s7 + $0x1748] sm:$0xff]
    %v2456 = vld [vmem:[%s7 + $0x1750] sm:$0xff]
    %v2457 = vld [vmem:[%s7 + $0x1758] sm:$0xff]
    %v2458 = vld [vmem:[%s7 + $0x1760] sm:$0xff]
    %v2459 = vld [vmem:[%s7 + $0x1768] sm:$0xff]
    %v2460 = vld [vmem:[%s7 + $0x1770] sm:$0xff]
    %v2461 = vld [vmem:[%s7 + $0x1778] sm:$0xff]
    %v2462 = vld [vmem:[%s7 + $0x1780] sm:$0xff]
    %v2463 = vld [vmem:[%s7 + $0x1788] sm:$0xff]
    %v2464 = vld [vmem:[%s7 + $0x1790] sm:$0xff]
    %v2465 = vld [vmem:[%s7 + $0x1798] sm:$0xff]
    %v2466 = vld [vmem:[%s7 + $0x17a0] sm:$0xff]
    %v2467 = vld [vmem:[%s7 + $0x17a8] sm:$0xff]
    %v2468 = vld [vmem:[%s7 + $0x17b0] sm:$0xff]
    %v2469 = vld [vmem:[%s7 + $0x17b8] sm:$0xff]
    %v2470 = vld [vmem:[%s7 + $0x17c0] sm:$0xff]
    %v2471 = vld [vmem:[%s7 + $0x17c8] sm:$0xff]
    %v2472 = vld [vmem:[%s7 + $0x17d0] sm:$0xff]
    %v2473 = vld [vmem:[%s7 + $0x17d8] sm:$0xff]
    %v2474 = vld [vmem:[%s7 + $0x17e0] sm:$0xff]
    %v2475 = vld [vmem:[%s7 + $0x17e8] sm:$0xff]
    %v2476 = vld [vmem:[%s7 + $0x17f0] sm:$0xff]
    %v2477 = vld [vmem:[%s7 + $0x17f8] sm:$0xff]
    %v2478 = vld [vmem:[%s7 + $0x1800] sm:$0xff]
    %v2479 = vld [vmem:[%s7 + $0x1808] sm:$0xff]
    %v2480 = vld [vmem:[%s7 + $0x1810] sm:$0xff]
    %v2481 = vld [vmem:[%s7 + $0x1818] sm:$0xff]
    %v2482 = vld [vmem:[%s7 + $0x1820] sm:$0xff]
    %v2483 = vld [vmem:[%s7 + $0x1828] sm:$0xff]
    %v2484 = vld [vmem:[%s7 + $0x1830] sm:$0xff]
    %v2485 = vld [vmem:[%s7 + $0x1838] sm:$0xff]
    %v2486 = vld [vmem:[%s7 + $0x1840] sm:$0xff]
    %v2487 = vld [vmem:[%s7 + $0x1848] sm:$0xff]
    %v2488 = vld [vmem:[%s7 + $0x1850] sm:$0xff]
    %v2489 = vld [vmem:[%s7 + $0x1858] sm:$0xff]
    %v2490 = vld [vmem:[%s7 + $0x1860] sm:$0xff]
    %v2491 = vld [vmem:[%s7 + $0x1868] sm:$0xff]
    %v2492 = vld [vmem:[%s7 + $0x1870] sm:$0xff]
    %v2493 = vld [vmem:[%s7 + $0x1878] sm:$0xff]
    %v2494 = vld [vmem:[%s7 + $0x1880] sm:$0xff]
    %v2495 = vld [vmem:[%s7 + $0x1888] sm:$0xff]
    %v2496 = vld [vmem:[%s7 + $0x1890] sm:$0xff]
    %v2497 = vld [vmem:[%s7 + $0x1898] sm:$0xff]
    %v2498 = vld [vmem:[%s7 + $0x18a0] sm:$0xff]
    %v2499 = vld [vmem:[%s7 + $0x18a8] sm:$0xff]
    %v2500 = vld [vmem:[%s7 + $0x18b0] sm:$0xff]
    %v2501 = vld [vmem:[%s7 + $0x18b8] sm:$0xff]
    %v2502 = vld [vmem:[%s7 + $0x18c0] sm:$0xff]
    %v2503 = vld [vmem:[%s7 + $0x18c8] sm:$0xff]
    %v2504 = vld [vmem:[%s7 + $0x18d0] sm:$0xff]
    %v2505 = vld [vmem:[%s7 + $0x18d8] sm:$0xff]
    %v2506 = vld [vmem:[%s7 + $0x18e0] sm:$0xff]
    %v2507 = vld [vmem:[%s7 + $0x18e8] sm:$0xff]
    %v2508 = vld [vmem:[%s7 + $0x18f0] sm:$0xff]
    %v2509 = vld [vmem:[%s7 + $0x18f8] sm:$0xff]
    %v2510 = vld [vmem:[%s7 + $0x1900] sm:$0xff]
    %v2511 = vld [vmem:[%s7 + $0x1908] sm:$0xff]
    %v2512 = vld [vmem:[%s7 + $0x1910] sm:$0xff]
    %v2513 = vld [vmem:[%s7 + $0x1918] sm:$0xff]
    %v2514 = vld [vmem:[%s7 + $0x1920] sm:$0xff]
    %v2515 = vld [vmem:[%s7 + $0x1928] sm:$0xff]
    %v2516 = vld [vmem:[%s7 + $0x1930] sm:$0xff]
    %v2517 = vld [vmem:[%s7 + $0x1938] sm:$0xff]
    %v2518 = vld [vmem:[%s7 + $0x1940] sm:$0xff]
    %v2519 = vld [vmem:[%s7 + $0x1948] sm:$0xff]
    %v2520 = vld [vmem:[%s7 + $0x1950] sm:$0xff]
    %v2521 = vld [vmem:[%s7 + $0x1958] sm:$0xff]
    %v2522 = vld [vmem:[%s7 + $0x1960] sm:$0xff]
    %v2523 = vld [vmem:[%s7 + $0x1968] sm:$0xff]
    %v2524 = vld [vmem:[%s7 + $0x1970] sm:$0xff]
    %v2525 = vld [vmem:[%s7 + $0x1978] sm:$0xff]
    %v2526 = vld [vmem:[%s7 + $0x1980] sm:$0xff]
    %v2527 = vld [vmem:[%s7 + $0x1988] sm:$0xff]
    %v2528 = vld [vmem:[%s7 + $0x1990] sm:$0xff]
    %v2529 = vld [vmem:[%s7 + $0x1998] sm:$0xff]
    %v2530 = vld [vmem:[%s7 + $0x19a0] sm:$0xff]
    %v2531 = vld [vmem:[%s7 + $0x19a8] sm:$0xff]
    %v2532 = vld [vmem:[%s7 + $0x19b0] sm:$0xff]
    %v2533 = vld [vmem:[%s7 + $0x19b8] sm:$0xff]
    %v2534 = vld [vmem:[%s7 + $0x19c0] sm:$0xff]
    %v2535 = vld [vmem:[%s7 + $0x19c8] sm:$0xff]
    %v2536 = vld [vmem:[%s7 + $0x19d0] sm:$0xff]
    %v2537 = vld [vmem:[%s7 + $0x19d8] sm:$0xff]
    %v2538 = vld [vmem:[%s7 + $0x19e0] sm:$0xff]
    %v2539 = vld [vmem:[%s7 + $0x19e8] sm:$0xff]
    %v2540 = vld [vmem:[%s7 + $0x19f0] sm:$0xff]
    %v2541 = vld [vmem:[%s7 + $0x19f8] sm:$0xff]
    %v2542 = vld [vmem:[%s7 + $0x1a00] sm:$0xff]
    %v2543 = vld [vmem:[%s7 + $0x1a08] sm:$0xff]
    %v2544 = vld [vmem:[%s7 + $0x1a10] sm:$0xff]
    %v2545 = vld [vmem:[%s7 + $0x1a18] sm:$0xff]
    %v2546 = vld [vmem:[%s7 + $0x1a20] sm:$0xff]
    %v2547 = vld [vmem:[%s7 + $0x1a28] sm:$0xff]
    %v2548 = vld [vmem:[%s7 + $0x1a30] sm:$0xff]
    %v2549 = vld [vmem:[%s7 + $0x1a38] sm:$0xff]
    %v2550 = vld [vmem:[%s7 + $0x1a40] sm:$0xff]
    %v2551 = vld [vmem:[%s7 + $0x1a48] sm:$0xff]
    %v2552 = vld [vmem:[%s7 + $0x1a50] sm:$0xff]
    %v2553 = vld [vmem:[%s7 + $0x1a58] sm:$0xff]
    %v2554 = vld [vmem:[%s7 + $0x1a60] sm:$0xff]
    %v2555 = vld [vmem:[%s7 + $0x1a68] sm:$0xff]
    %v2556 = vld [vmem:[%s7 + $0x1a70] sm:$0xff]
    %v2557 = vld [vmem:[%s7 + $0x1a78] sm:$0xff]
    %v2558 = vld [vmem:[%s7 + $0x1a80] sm:$0xff]
    %v2559 = vld [vmem:[%s7 + $0x1a88] sm:$0xff]
    %v2560 = vld [vmem:[%s7 + $0x1a90] sm:$0xff]
    %v2561 = vld [vmem:[%s7 + $0x1a98] sm:$0xff]
    %v2562 = vld [vmem:[%s7 + $0x1aa0] sm:$0xff]
    %v2563 = vld [vmem:[%s7 + $0x1aa8] sm:$0xff]
    %v2564 = vld [vmem:[%s7 + $0x1ab0] sm:$0xff]
    %v2565 = vld [vmem:[%s7 + $0x1ab8] sm:$0xff]
    %v2566 = vld [vmem:[%s7 + $0x1ac0] sm:$0xff]
    %v2567 = vld [vmem:[%s7 + $0x1ac8] sm:$0xff]
    %v2568 = vld [vmem:[%s7 + $0x1ad0] sm:$0xff]
    %v2569 = vld [vmem:[%s7 + $0x1ad8] sm:$0xff]
    %v2570 = vld [vmem:[%s7 + $0x1ae0] sm:$0xff]
    %v2571 = vld [vmem:[%s7 + $0x1ae8] sm:$0xff]
    %v2572 = vld [vmem:[%s7 + $0x1af0] sm:$0xff]
    %v2573 = vld [vmem:[%s7 + $0x1af8] sm:$0xff]
    %v2574 = vld [vmem:[%s7 + $0x1b00] sm:$0xff]
    %v2575 = vld [vmem:[%s7 + $0x1b08] sm:$0xff]
    %v2576 = vld [vmem:[%s7 + $0x1b10] sm:$0xff]
    %v2577 = vld [vmem:[%s7 + $0x1b18] sm:$0xff]
    %v2578 = vld [vmem:[%s7 + $0x1b20] sm:$0xff]
    %v2579 = vld [vmem:[%s7 + $0x1b28] sm:$0xff]
    %v2580 = vld [vmem:[%s7 + $0x1b30] sm:$0xff]
    %v2581 = vld [vmem:[%s7 + $0x1b38] sm:$0xff]
    %v2582 = vld [vmem:[%s7 + $0x1b40] sm:$0xff]
    %v2583 = vld [vmem:[%s7 + $0x1b48] sm:$0xff]
    %v2584 = vld [vmem:[%s7 + $0x1b50] sm:$0xff]
    %v2585 = vld [vmem:[%s7 + $0x1b58] sm:$0xff]
    %v2586 = vld [vmem:[%s7 + $0x1b60] sm:$0xff]
    %v2587 = vld [vmem:[%s7 + $0x1b68] sm:$0xff]
    %v2588 = vld [vmem:[%s7 + $0x1b70] sm:$0xff]
    %v2589 = vld [vmem:[%s7 + $0x1b78] sm:$0xff]
    %v2590 = vld [vmem:[%s7 + $0x1b80] sm:$0xff]
    %v2591 = vld [vmem:[%s7 + $0x1b88] sm:$0xff]
    %v2592 = vld [vmem:[%s7 + $0x1b90] sm:$0xff]
    %v2593 = vld [vmem:[%s7 + $0x1b98] sm:$0xff]
    %v2594 = vld [vmem:[%s7 + $0x1ba0] sm:$0xff]
    %v2595 = vld [vmem:[%s7 + $0x1ba8] sm:$0xff]
    %v2596 = vld [vmem:[%s7 + $0x1bb0] sm:$0xff]
    %v2597 = vld [vmem:[%s7 + $0x1bb8] sm:$0xff]
    %v2598 = vld [vmem:[%s7 + $0x1bc0] sm:$0xff]
    %v2599 = vld [vmem:[%s7 + $0x1bc8] sm:$0xff]
    %v2600 = vld [vmem:[%s7 + $0x1bd0] sm:$0xff]
    %v2601 = vld [vmem:[%s7 + $0x1bd8] sm:$0xff]
    %v2602 = vld [vmem:[%s7 + $0x1be0] sm:$0xff]
    %v2603 = vld [vmem:[%s7 + $0x1be8] sm:$0xff]
    %v2604 = vld [vmem:[%s7 + $0x1bf0] sm:$0xff]
    %v2605 = vld [vmem:[%s7 + $0x1bf8] sm:$0xff]
    %v2606 = vld [vmem:[%s7 + $0x1c00] sm:$0xff]
    %v2607 = vld [vmem:[%s7 + $0x1c08] sm:$0xff]
    %v2608 = vld [vmem:[%s7 + $0x1c10] sm:$0xff]
    %v2609 = vld [vmem:[%s7 + $0x1c18] sm:$0xff]
    %v2610 = vld [vmem:[%s7 + $0x1c20] sm:$0xff]
    %v2611 = vld [vmem:[%s7 + $0x1c28] sm:$0xff]
    %v2612 = vld [vmem:[%s7 + $0x1c30] sm:$0xff]
    %v2613 = vld [vmem:[%s7 + $0x1c38] sm:$0xff]
    %v2614 = vld [vmem:[%s7 + $0x1c40] sm:$0xff]
    %v2615 = vld [vmem:[%s7 + $0x1c48] sm:$0xff]
    %v2616 = vld [vmem:[%s7 + $0x1c50] sm:$0xff]
    %v2617 = vld [vmem:[%s7 + $0x1c58] sm:$0xff]
    %v2618 = vld [vmem:[%s7 + $0x1c60] sm:$0xff]
    %v2619 = vld [vmem:[%s7 + $0x1c68] sm:$0xff]
    %v2620 = vld [vmem:[%s7 + $0x1c70] sm:$0xff]
    %v2621 = vld [vmem:[%s7 + $0x1c78] sm:$0xff]
    %v2622 = vld [vmem:[%s7 + $0x1c80] sm:$0xff]
    %v2623 = vld [vmem:[%s7 + $0x1c88] sm:$0xff]
    %v2624 = vld [vmem:[%s7 + $0x1c90] sm:$0xff]
    %v2625 = vld [vmem:[%s7 + $0x1c98] sm:$0xff]
    %v2626 = vld [vmem:[%s7 + $0x1ca0] sm:$0xff]
    %v2627 = vld [vmem:[%s7 + $0x1ca8] sm:$0xff]
    %v2628 = vld [vmem:[%s7 + $0x1cb0] sm:$0xff]
    %v2629 = vld [vmem:[%s7 + $0x1cb8] sm:$0xff]
    %v2630 = vld [vmem:[%s7 + $0x1cc0] sm:$0xff]
    %v2631 = vld [vmem:[%s7 + $0x1cc8] sm:$0xff]
    %v2632 = vld [vmem:[%s7 + $0x1cd0] sm:$0xff]
    %v2633 = vld [vmem:[%s7 + $0x1cd8] sm:$0xff]
    %v2634 = vld [vmem:[%s7 + $0x1ce0] sm:$0xff]
    %v2635 = vld [vmem:[%s7 + $0x1ce8] sm:$0xff]
    %v2636 = vld [vmem:[%s7 + $0x1cf0] sm:$0xff]
    %v2637 = vld [vmem:[%s7 + $0x1cf8] sm:$0xff]
    %v2638 = vld [vmem:[%s7 + $0x1d00] sm:$0xff]
    %v2639 = vld [vmem:[%s7 + $0x1d08] sm:$0xff]
    %v2640 = vld [vmem:[%s7 + $0x1d10] sm:$0xff]
    %v2641 = vld [vmem:[%s7 + $0x1d18] sm:$0xff]
    %v2642 = vld [vmem:[%s7 + $0x1d20] sm:$0xff]
    %v2643 = vld [vmem:[%s7 + $0x1d28] sm:$0xff]
    %v2644 = vld [vmem:[%s7 + $0x1d30] sm:$0xff]
    %v2645 = vld [vmem:[%s7 + $0x1d38] sm:$0xff]
    %v2646 = vld [vmem:[%s7 + $0x1d40] sm:$0xff]
    %v2647 = vld [vmem:[%s7 + $0x1d48] sm:$0xff]
    %v2648 = vld [vmem:[%s7 + $0x1d50] sm:$0xff]
    %v2649 = vld [vmem:[%s7 + $0x1d58] sm:$0xff]
    %v2650 = vld [vmem:[%s7 + $0x1d60] sm:$0xff]
    %v2651 = vld [vmem:[%s7 + $0x1d68] sm:$0xff]
    %v2652 = vld [vmem:[%s7 + $0x1d70] sm:$0xff]
    %v2653 = vld [vmem:[%s7 + $0x1d78] sm:$0xff]
    %v2654 = vld [vmem:[%s7 + $0x1d80] sm:$0xff]
    %v2655 = vld [vmem:[%s7 + $0x1d88] sm:$0xff]
    %v2656 = vld [vmem:[%s7 + $0x1d90] sm:$0xff]
    %v2657 = vld [vmem:[%s7 + $0x1d98] sm:$0xff]
    %v2658 = vld [vmem:[%s7 + $0x1da0] sm:$0xff]
    %v2659 = vld [vmem:[%s7 + $0x1da8] sm:$0xff]
    %v2660 = vld [vmem:[%s7 + $0x1db0] sm:$0xff]
    %v2661 = vld [vmem:[%s7 + $0x1db8] sm:$0xff]
    %v2662 = vld [vmem:[%s7 + $0x1dc0] sm:$0xff]
    %v2663 = vld [vmem:[%s7 + $0x1dc8] sm:$0xff]
    %v2664 = vld [vmem:[%s7 + $0x1dd0] sm:$0xff]
    %v2665 = vld [vmem:[%s7 + $0x1dd8] sm:$0xff]
    %v2666 = vld [vmem:[%s7 + $0x1de0] sm:$0xff]
    %v2667 = vld [vmem:[%s7 + $0x1de8] sm:$0xff]
    %v2668 = vld [vmem:[%s7 + $0x1df0] sm:$0xff]
    %v2669 = vld [vmem:[%s7 + $0x1df8] sm:$0xff]
    %v2670 = vld [vmem:[%s7 + $0x1e00] sm:$0xff]
    %v2671 = vld [vmem:[%s7 + $0x1e08] sm:$0xff]
    %v2672 = vld [vmem:[%s7 + $0x1e10] sm:$0xff]
    %v2673 = vld [vmem:[%s7 + $0x1e18] sm:$0xff]
    %v2674 = vld [vmem:[%s7 + $0x1e20] sm:$0xff]
    %v2675 = vld [vmem:[%s7 + $0x1e28] sm:$0xff]
    %v2676 = vld [vmem:[%s7 + $0x1e30] sm:$0xff]
    %v2677 = vld [vmem:[%s7 + $0x1e38] sm:$0xff]
    %v2678 = vld [vmem:[%s7 + $0x1e40] sm:$0xff]
    %v2679 = vld [vmem:[%s7 + $0x1e48] sm:$0xff]
    %v2680 = vld [vmem:[%s7 + $0x1e50] sm:$0xff]
    %v2681 = vld [vmem:[%s7 + $0x1e58] sm:$0xff]
    %v2682 = vld [vmem:[%s7 + $0x1e60] sm:$0xff]
    %v2683 = vld [vmem:[%s7 + $0x1e68] sm:$0xff]
    %v2684 = vld [vmem:[%s7 + $0x1e70] sm:$0xff]
    %v2685 = vld [vmem:[%s7 + $0x1e78] sm:$0xff]
    %v2686 = vld [vmem:[%s7 + $0x1e80] sm:$0xff]
    %v2687 = vld [vmem:[%s7 + $0x1e88] sm:$0xff]
    %v2688 = vld [vmem:[%s7 + $0x1e90] sm:$0xff]
    %v2689 = vld [vmem:[%s7 + $0x1e98] sm:$0xff]
    %v2690 = vld [vmem:[%s7 + $0x1ea0] sm:$0xff]
    %v2691 = vld [vmem:[%s7 + $0x1ea8] sm:$0xff]
    %v2692 = vld [vmem:[%s7 + $0x1eb0] sm:$0xff]
    %v2693 = vld [vmem:[%s7 + $0x1eb8] sm:$0xff]
    %v2694 = vld [vmem:[%s7 + $0x1ec0] sm:$0xff]
    %v2695 = vld [vmem:[%s7 + $0x1ec8] sm:$0xff]
    %v2696 = vld [vmem:[%s7 + $0x1ed0] sm:$0xff]
    %v2697 = vld [vmem:[%s7 + $0x1ed8] sm:$0xff]
    %v2698 = vld [vmem:[%s7 + $0x1ee0] sm:$0xff]
    %v2699 = vld [vmem:[%s7 + $0x1ee8] sm:$0xff]
    %v2700 = vld [vmem:[%s7 + $0x1ef0] sm:$0xff]
    %v2701 = vld [vmem:[%s7 + $0x1ef8] sm:$0xff]
    %v2702 = vld [vmem:[%s7 + $0x1f00] sm:$0xff]
    %v2703 = vld [vmem:[%s7 + $0x1f08] sm:$0xff]
    %v2704 = vld [vmem:[%s7 + $0x1f10] sm:$0xff]
    %v2705 = vld [vmem:[%s7 + $0x1f18] sm:$0xff]
    %v2706 = vld [vmem:[%s7 + $0x1f20] sm:$0xff]
    %v2707 = vld [vmem:[%s7 + $0x1f28] sm:$0xff]
    %v2708 = vld [vmem:[%s7 + $0x1f30] sm:$0xff]
    %v2709 = vld [vmem:[%s7 + $0x1f38] sm:$0xff]
    %v2710 = vld [vmem:[%s7 + $0x1f40] sm:$0xff]
    %v2711 = vld [vmem:[%s7 + $0x1f48] sm:$0xff]
    %v2712 = vld [vmem:[%s7 + $0x1f50] sm:$0xff]
    %v2713 = vld [vmem:[%s7 + $0x1f58] sm:$0xff]
    %v2714 = vld [vmem:[%s7 + $0x1f60] sm:$0xff]
    %v2715 = vld [vmem:[%s7 + $0x1f68] sm:$0xff]
    %v2716 = vld [vmem:[%s7 + $0x1f70] sm:$0xff]
    %v2717 = vld [vmem:[%s7 + $0x1f78] sm:$0xff]
    %v2718 = vld [vmem:[%s7 + $0x1f80] sm:$0xff]
    %v2719 = vld [vmem:[%s7 + $0x1f88] sm:$0xff]
    %v2720 = vld [vmem:[%s7 + $0x1f90] sm:$0xff]
    %v2721 = vld [vmem:[%s7 + $0x1f98] sm:$0xff]
    %v2722 = vld [vmem:[%s7 + $0x1fa0] sm:$0xff]
    %v2723 = vld [vmem:[%s7 + $0x1fa8] sm:$0xff]
    %v2724 = vld [vmem:[%s7 + $0x1fb0] sm:$0xff]
    %v2725 = vld [vmem:[%s7 + $0x1fb8] sm:$0xff]
    %v2726 = vld [vmem:[%s7 + $0x1fc0] sm:$0xff]
    %v2727 = vld [vmem:[%s7 + $0x1fc8] sm:$0xff]
    %v2728 = vld [vmem:[%s7 + $0x1fd0] sm:$0xff]
    %v2729 = vld [vmem:[%s7 + $0x1fd8] sm:$0xff]
    %v2730 = vld [vmem:[%s7 + $0x1fe0] sm:$0xff]
    %v2731 = vld [vmem:[%s7 + $0x1fe8] sm:$0xff]
    %v2732 = vld [vmem:[%s7 + $0x1ff0] sm:$0xff]
    %v2733 = vld [vmem:[%s7 + $0x1ff8] sm:$0xff]
    %v2734 = vld [vmem:[%s7 + $0x2000] sm:$0xff]
    %v2735 = vld [vmem:[%s7 + $0x2008] sm:$0xff]
    %v2736 = vld [vmem:[%s7 + $0x2010] sm:$0xff]
    %v2737 = vld [vmem:[%s7 + $0x2018] sm:$0xff]
    %v2738 = vld [vmem:[%s7 + $0x2020] sm:$0xff]
    %v2739 = vld [vmem:[%s7 + $0x2028] sm:$0xff]
    %v2740 = vld [vmem:[%s7 + $0x2030] sm:$0xff]
    %v2741 = vld [vmem:[%s7 + $0x2038] sm:$0xff]
    %v2742 = vld [vmem:[%s7 + $0x2040] sm:$0xff]
    %v2743 = vld [vmem:[%s7 + $0x2048] sm:$0xff]
    %v2744 = vld [vmem:[%s7 + $0x2050] sm:$0xff]
    %v2745 = vld [vmem:[%s7 + $0x2058] sm:$0xff]
    %v2746 = vld [vmem:[%s7 + $0x2060] sm:$0xff]
    %v2747 = vld [vmem:[%s7 + $0x2068] sm:$0xff]
    %v2748 = vld [vmem:[%s7 + $0x2070] sm:$0xff]
    %v2749 = vld [vmem:[%s7 + $0x2078] sm:$0xff]
    %v2750 = vld [vmem:[%s7 + $0x2080] sm:$0xff]
    %v2751 = vld [vmem:[%s7 + $0x2088] sm:$0xff]
    %v2752 = vld [vmem:[%s7 + $0x2090] sm:$0xff]
    %v2753 = vld [vmem:[%s7 + $0x2098] sm:$0xff]
    %v2754 = vld [vmem:[%s7 + $0x20a0] sm:$0xff]
    %v2755 = vld [vmem:[%s7 + $0x20a8] sm:$0xff]
    %v2756 = vld [vmem:[%s7 + $0x20b0] sm:$0xff]
    %v2757 = vld [vmem:[%s7 + $0x20b8] sm:$0xff]
    %v2758 = vld [vmem:[%s7 + $0x20c0] sm:$0xff]
    %v2759 = vld [vmem:[%s7 + $0x20c8] sm:$0xff]
    %v2760 = vld [vmem:[%s7 + $0x20d0] sm:$0xff]
    %v2761 = vld [vmem:[%s7 + $0x20d8] sm:$0xff]
    %v2762 = vld [vmem:[%s7 + $0x20e0] sm:$0xff]
    %v2763 = vld [vmem:[%s7 + $0x20e8] sm:$0xff]
    %v2764 = vld [vmem:[%s7 + $0x20f0] sm:$0xff]
    %v2765 = vld [vmem:[%s7 + $0x20f8] sm:$0xff]
    %v2766 = vld [vmem:[%s7 + $0x2100] sm:$0xff]
    %v2767 = vld [vmem:[%s7 + $0x2108] sm:$0xff]
    %v2768 = vld [vmem:[%s7 + $0x2110] sm:$0xff]
    %v2769 = vld [vmem:[%s7 + $0x2118] sm:$0xff]
    %v2770 = vld [vmem:[%s7 + $0x2120] sm:$0xff]
    %v2771 = vld [vmem:[%s7 + $0x2128] sm:$0xff]
    %v2772 = vld [vmem:[%s7 + $0x2130] sm:$0xff]
    %v2773 = vld [vmem:[%s7 + $0x2138] sm:$0xff]
    %v2774 = vld [vmem:[%s7 + $0x2140] sm:$0xff]
    %v2775 = vld [vmem:[%s7 + $0x2148] sm:$0xff]
    %v2776 = vld [vmem:[%s7 + $0x2150] sm:$0xff]
    %v2777 = vld [vmem:[%s7 + $0x2158] sm:$0xff]
    %v2778 = vld [vmem:[%s7 + $0x2160] sm:$0xff]
    %v2779 = vld [vmem:[%s7 + $0x2168] sm:$0xff]
    %v2780 = vld [vmem:[%s7 + $0x2170] sm:$0xff]
    %v2781 = vld [vmem:[%s7 + $0x2178] sm:$0xff]
    %v2782 = vld [vmem:[%s7 + $0x2180] sm:$0xff]
    %v2783 = vld [vmem:[%s7 + $0x2188] sm:$0xff]
    %v2784 = vld [vmem:[%s7 + $0x2190] sm:$0xff]
    %v2785 = vld [vmem:[%s7 + $0x2198] sm:$0xff]
    %v2786 = vld [vmem:[%s7 + $0x21a0] sm:$0xff]
    %v2787 = vld [vmem:[%s7 + $0x21a8] sm:$0xff]
    %v2788 = vld [vmem:[%s7 + $0x21b0] sm:$0xff]
    %v2789 = vld [vmem:[%s7 + $0x21b8] sm:$0xff]
    %v2790 = vld [vmem:[%s7 + $0x21c0] sm:$0xff]
    %v2791 = vld [vmem:[%s7 + $0x21c8] sm:$0xff]
    %v2792 = vld [vmem:[%s7 + $0x21d0] sm:$0xff]
    %v2793 = vld [vmem:[%s7 + $0x21d8] sm:$0xff]
    %v2794 = vld [vmem:[%s7 + $0x21e0] sm:$0xff]
    %v2795 = vld [vmem:[%s7 + $0x21e8] sm:$0xff]
    %v2796 = vld [vmem:[%s7 + $0x21f0] sm:$0xff]
    %v2797 = vld [vmem:[%s7 + $0x21f8] sm:$0xff]
    %v2798 = vld [vmem:[%s7 + $0x2200] sm:$0xff]
    %v2799 = vld [vmem:[%s7 + $0x2208] sm:$0xff]
    %v2800 = vld [vmem:[%s7 + $0x2210] sm:$0xff]
    %v2801 = vld [vmem:[%s7 + $0x2218] sm:$0xff]
    %v2802 = vld [vmem:[%s7 + $0x2220] sm:$0xff]
    %v2803 = vld [vmem:[%s7 + $0x2228] sm:$0xff]
    %v2804 = vld [vmem:[%s7 + $0x2230] sm:$0xff]
    %v2805 = vld [vmem:[%s7 + $0x2238] sm:$0xff]
    %v2806 = vld [vmem:[%s7 + $0x2240] sm:$0xff]
    %v2807 = vld [vmem:[%s7 + $0x2248] sm:$0xff]
    %v2808 = vld [vmem:[%s7 + $0x2250] sm:$0xff]
    %v2809 = vld [vmem:[%s7 + $0x2258] sm:$0xff]
    %v2810 = vld [vmem:[%s7 + $0x2260] sm:$0xff]
    %v2811 = vld [vmem:[%s7 + $0x2268] sm:$0xff]
    %v2812 = vld [vmem:[%s7 + $0x2270] sm:$0xff]
    %v2813 = vld [vmem:[%s7 + $0x2278] sm:$0xff]
    %v2814 = vld [vmem:[%s7 + $0x2280] sm:$0xff]
    %v2815 = vld [vmem:[%s7 + $0x2288] sm:$0xff]
    %v2816 = vld [vmem:[%s7 + $0x2290] sm:$0xff]
    %v2817 = vld [vmem:[%s7 + $0x2298] sm:$0xff]
    %v2818 = vld [vmem:[%s7 + $0x22a0] sm:$0xff]
    %v2819 = vld [vmem:[%s7 + $0x22a8] sm:$0xff]
    %v2820 = vld [vmem:[%s7 + $0x22b0] sm:$0xff]
    %v2821 = vld [vmem:[%s7 + $0x22b8] sm:$0xff]
    %v2822 = vld [vmem:[%s7 + $0x22c0] sm:$0xff]
    %v2823 = vld [vmem:[%s7 + $0x22c8] sm:$0xff]
    %v2824 = vld [vmem:[%s7 + $0x22d0] sm:$0xff]
    %v2825 = vld [vmem:[%s7 + $0x22d8] sm:$0xff]
    %v2826 = vld [vmem:[%s7 + $0x22e0] sm:$0xff]
    %v2827 = vld [vmem:[%s7 + $0x22e8] sm:$0xff]
    %v2828 = vld [vmem:[%s7 + $0x22f0] sm:$0xff]
    %v2829 = vld [vmem:[%s7 + $0x22f8] sm:$0xff]
    %v2830 = vld [vmem:[%s7 + $0x2300] sm:$0xff]
    %v2831 = vld [vmem:[%s7 + $0x2308] sm:$0xff]
    %v2832 = vld [vmem:[%s7 + $0x2310] sm:$0xff]
    %v2833 = vld [vmem:[%s7 + $0x2318] sm:$0xff]
    %v2834 = vld [vmem:[%s7 + $0x2320] sm:$0xff]
    %v2835 = vld [vmem:[%s7 + $0x2328] sm:$0xff]
    %v2836 = vld [vmem:[%s7 + $0x2330] sm:$0xff]
    %v2837 = vld [vmem:[%s7 + $0x2338] sm:$0xff]
    %v2838 = vld [vmem:[%s7 + $0x2340] sm:$0xff]
    %v2839 = vld [vmem:[%s7 + $0x2348] sm:$0xff]
    %v2840 = vld [vmem:[%s7 + $0x2350] sm:$0xff]
    %v2841 = vld [vmem:[%s7 + $0x2358] sm:$0xff]
    %v2842 = vld [vmem:[%s7 + $0x2360] sm:$0xff]
    %v2843 = vld [vmem:[%s7 + $0x2368] sm:$0xff]
    %v2844 = vld [vmem:[%s7 + $0x2370] sm:$0xff]
    %v2845 = vld [vmem:[%s7 + $0x2378] sm:$0xff]
    %v2846 = vld [vmem:[%s7 + $0x2380] sm:$0xf]
    %v2847 = vld [vmem:[%s7 + $0x2388] sm:$0xf]
    %v2848 = vld [vmem:[%s7 + $0x2390] sm:$0xf]
    %v2849 = vld [vmem:[%s7 + $0x2398] sm:$0xf]
    %v2850 = vld [vmem:[%s7 + $0x23a0] sm:$0xf]
    %v2851 = vld [vmem:[%s7 + $0x23a8] sm:$0xf]
    %v2852 = vld [vmem:[%s7 + $0x23b0] sm:$0xf]
    %v2853 = vld [vmem:[%s7 + $0x23b8] sm:$0xf]
    %v2854 = vld [vmem:[%s8] sm:$0xff]
    %v2856 = vlaneseq
    %v2857 = vshrl.u32 %v2856, 7
    %v2858 = vsub.s32 0, %v2857
    %v2859 = vrot.slane %v2854, %v2858
    %v2860 = vlaneseq
    %v2861 = vshrl.u32 %v2860, 7
    %v2862 = vsub.s32 1, %v2861
    %v2863 = vrot.slane %v2854, %v2862
    %v2864 = vlaneseq
    %v2865 = vshrl.u32 %v2864, 7
    %v2866 = vsub.s32 2, %v2865
    %v2867 = vrot.slane %v2854, %v2866
    %v2868 = vlaneseq
    %v2869 = vshrl.u32 %v2868, 7
    %v2870 = vsub.s32 3, %v2869
    %v2871 = vrot.slane %v2854, %v2870
    %v2872 = vlaneseq
    %v2873 = vshrl.u32 %v2872, 7
    %v2874 = vsub.s32 4, %v2873
    %v2875 = vrot.slane %v2854, %v2874
    %v2876 = vlaneseq
    %v2877 = vshrl.u32 %v2876, 7
    %v2878 = vsub.s32 5, %v2877
    %v2879 = vrot.slane %v2854, %v2878
    %v2880 = vlaneseq
    %v2881 = vshrl.u32 %v2880, 7
    %v2882 = vsub.s32 6, %v2881
    %v2883 = vrot.slane %v2854, %v2882
    %v2884 = vlaneseq
    %v2885 = vshrl.u32 %v2884, 7
    %v2886 = vsub.s32 7, %v2885
    %v2887 = vrot.slane %v2854, %v2886
    %v2897 = vsel %vm815, %v1709, 0
    %v2900 = vsel %vm525, %v2846, 0
    %v2903 = vsel %vm525, %v2847, 0
    %v2906 = vsel %vm525, %v2848, 0
    %v2909 = vsel %vm525, %v2849, 0
    %v2912 = vsel %vm525, %v2850, 0
    %v2915 = vsel %vm525, %v2851, 0
    %v2918 = vsel %vm525, %v2852, 0
    %v2921 = vsel %vm525, %v2853, 0
    %2923 = vmatprep.subr.mxu0 %v1831
    %2924 = vmatpush1.msra.mxu0 %v1830
    %2925 = vmatprep.subr.mxu0 %v1823
    %2926 = vmatpush1.msra.mxu0 %v1822
    %2927 = vmatprep.subr.mxu0 %v1815
    %2928 = vmatpush1.msra.mxu0 %v1814
    %2929 = vmatprep.subr.mxu0 %v1807
    %2930 = vmatpush1.msra.mxu0 %v1806
    %2931 = vmatprep.subr.mxu0 %v1799
    %2932 = vmatpush1.msra.mxu0 %v1798
    %2933 = vmatprep.subr.mxu0 %v1791
    %2934 = vmatpush1.msra.mxu0 %v1790
    %2935 = vmatprep.subr.mxu0 %v1783
    %2936 = vmatpush1.msra.mxu0 %v1782
    %2937 = vmatprep.subr.mxu0 %v1775
    %2938 = vmatpush1.msra.mxu0 %v1774
    %2939 = vmatprep.subr.mxu0 %v1767
    %2940 = vmatpush1.msra.mxu0 %v1766
    %2941 = vmatprep.subr.mxu0 %v1759
    %2942 = vmatpush1.msra.mxu0 %v1758
    %2943 = vmatprep.subr.mxu0 %v1751
    %2944 = vmatpush1.msra.mxu0 %v1750
    %2945 = vmatprep.subr.mxu0 %v1743
    %2946 = vmatpush1.msra.mxu0 %v1742
    %2947 = vmatprep.subr.mxu0 %v1735
    %2948 = vmatpush1.msra.mxu0 %v1734
    %2949 = vmatprep.subr.mxu0 %v1727
    %2950 = vmatpush1.msra.mxu0 %v1726
    %2951 = vmatprep.subr.mxu0 %v1719
    %2952 = vmatpush1.msra.mxu0 %v1718
    %2953 = vmatprep.subr.mxu0 %v1711
    %2954 = vmatpush1.msra.mxu0 %v1710
    %2955 = vmatprep.subr.mxu0 %v1959
    %2956 = vmatpush2.msra.mxu0 %v1958
    %2957 = vmatprep.subr.mxu0 %v1951
    %2958 = vmatpush2.msra.mxu0 %v1950
    %2959 = vmatprep.subr.mxu0 %v1943
    %2960 = vmatpush2.msra.mxu0 %v1942
    %2961 = vmatprep.subr.mxu0 %v1935
    %2962 = vmatpush2.msra.mxu0 %v1934
    %2963 = vmatprep.subr.mxu0 %v1927
    %2964 = vmatpush2.msra.mxu0 %v1926
    %2965 = vmatprep.subr.mxu0 %v1919
    %2966 = vmatpush2.msra.mxu0 %v1918
    %2967 = vmatprep.subr.mxu0 %v1911
    %2968 = vmatpush2.msra.mxu0 %v1910
    %2969 = vmatprep.subr.mxu0 %v1903
    %2970 = vmatpush2.msra.mxu0 %v1902
    %2971 = vmatprep.subr.mxu0 %v1895
    %2972 = vmatpush2.msra.mxu0 %v1894
    %2973 = vmatprep.subr.mxu0 %v1887
    %2974 = vmatpush2.msra.mxu0 %v1886
    %2975 = vmatprep.subr.mxu0 %v1879
    %2976 = vmatpush2.msra.mxu0 %v1878
    %2977 = vmatprep.subr.mxu0 %v1871
    %2978 = vmatpush2.msra.mxu0 %v1870
    %2979 = vmatprep.subr.mxu0 %v1863
    %2980 = vmatpush2.msra.mxu0 %v1862
    %2981 = vmatprep.subr.mxu0 %v1855
    %2982 = vmatpush2.msra.mxu0 %v1854
    %2983 = vmatprep.subr.mxu0 %v1847
    %2984 = vmatpush2.msra.mxu0 %v1846
    %2985 = vmatprep.subr.mxu0 %v1839
    %2986 = vmatpush2.msra.mxu0 %v1838
    %2987 = vmatprep.mubr.f32.mxu0 %v1702
    %2988 = vmatmul.mubr.f32.gmra.mxu0 %v1701
    %v2989 = vpop.f32.mrf.mxu0
    %v2990 = vadd.f32 %v2859, %v2989
    %v2991 = vpop.f32.mrf.mxu0
    %v2992 = vadd.f32 %v2863, %v2991
    %2993 = vdwg.mxu0
    %2994 = vmatprep.subr.mxu0 %v2087
    %2995 = vmatpush1.msra.mxu0 %v2086
    %2996 = vmatprep.subr.mxu0 %v2079
    %2997 = vmatpush1.msra.mxu0 %v2078
    %2998 = vmatprep.subr.mxu0 %v2071
    %2999 = vmatpush1.msra.mxu0 %v2070
    %3000 = vmatprep.subr.mxu0 %v2063
    %3001 = vmatpush1.msra.mxu0 %v2062
    %3002 = vmatprep.subr.mxu0 %v2055
    %3003 = vmatpush1.msra.mxu0 %v2054
    %3004 = vmatprep.subr.mxu0 %v2047
    %3005 = vmatpush1.msra.mxu0 %v2046
    %3006 = vmatprep.subr.mxu0 %v2039
    %3007 = vmatpush1.msra.mxu0 %v2038
    %3008 = vmatprep.subr.mxu0 %v2031
    %3009 = vmatpush1.msra.mxu0 %v2030
    %3010 = vmatprep.subr.mxu0 %v2023
    %3011 = vmatpush1.msra.mxu0 %v2022
    %3012 = vmatprep.subr.mxu0 %v2015
    %3013 = vmatpush1.msra.mxu0 %v2014
    %3014 = vmatprep.subr.mxu0 %v2007
    %3015 = vmatpush1.msra.mxu0 %v2006
    %3016 = vmatprep.subr.mxu0 %v1999
    %3017 = vmatpush1.msra.mxu0 %v1998
    %3018 = vmatprep.subr.mxu0 %v1991
    %3019 = vmatpush1.msra.mxu0 %v1990
    %3020 = vmatprep.subr.mxu0 %v1983
    %3021 = vmatpush1.msra.mxu0 %v1982
    %3022 = vmatprep.subr.mxu0 %v1975
    %3023 = vmatpush1.msra.mxu0 %v1974
    %3024 = vmatprep.subr.mxu0 %v1967
    %3025 = vmatpush1.msra.mxu0 %v1966
    %3026 = vmatprep.subr.mxu0 %v2215
    %3027 = vmatpush2.msra.mxu0 %v2214
    %3028 = vmatprep.subr.mxu0 %v2207
    %3029 = vmatpush2.msra.mxu0 %v2206
    %3030 = vmatprep.subr.mxu0 %v2199
    %3031 = vmatpush2.msra.mxu0 %v2198
    %3032 = vmatprep.subr.mxu0 %v2191
    %3033 = vmatpush2.msra.mxu0 %v2190
    %3034 = vmatprep.subr.mxu0 %v2183
    %3035 = vmatpush2.msra.mxu0 %v2182
    %3036 = vmatprep.subr.mxu0 %v2175
    %3037 = vmatpush2.msra.mxu0 %v2174
    %3038 = vmatprep.subr.mxu0 %v2167
    %3039 = vmatpush2.msra.mxu0 %v2166
    %3040 = vmatprep.subr.mxu0 %v2159
    %3041 = vmatpush2.msra.mxu0 %v2158
    %3042 = vmatprep.subr.mxu0 %v2151
    %3043 = vmatpush2.msra.mxu0 %v2150
    %3044 = vmatprep.subr.mxu0 %v2143
    %3045 = vmatpush2.msra.mxu0 %v2142
    %3046 = vmatprep.subr.mxu0 %v2135
    %3047 = vmatpush2.msra.mxu0 %v2134
    %3048 = vmatprep.subr.mxu0 %v2127
    %3049 = vmatpush2.msra.mxu0 %v2126
    %3050 = vmatprep.subr.mxu0 %v2119
    %3051 = vmatpush2.msra.mxu0 %v2118
    %3052 = vmatprep.subr.mxu0 %v2111
    %3053 = vmatpush2.msra.mxu0 %v2110
    %3054 = vmatprep.subr.mxu0 %v2103
    %3055 = vmatpush2.msra.mxu0 %v2102
    %3056 = vmatprep.subr.mxu0 %v2095
    %3057 = vmatpush2.msra.mxu0 %v2094
    %3058 = vmatprep.mubr.f32.mxu0 %v1704
    %3059 = vmatmul.mubr.f32.gmra.mxu0 %v1703
    %v3060 = vpop.f32.mrf.mxu0
    %v3061 = vadd.f32 %v2990, %v3060
    %v3062 = vpop.f32.mrf.mxu0
    %v3063 = vadd.f32 %v2992, %v3062
    %3064 = vdwg.mxu0
    %3065 = vmatprep.subr.mxu0 %v2343
    %3066 = vmatpush1.msra.mxu0 %v2342
    %3067 = vmatprep.subr.mxu0 %v2335
    %3068 = vmatpush1.msra.mxu0 %v2334
    %3069 = vmatprep.subr.mxu0 %v2327
    %3070 = vmatpush1.msra.mxu0 %v2326
    %3071 = vmatprep.subr.mxu0 %v2319
    %3072 = vmatpush1.msra.mxu0 %v2318
    %3073 = vmatprep.subr.mxu0 %v2311
    %3074 = vmatpush1.msra.mxu0 %v2310
    %3075 = vmatprep.subr.mxu0 %v2303
    %3076 = vmatpush1.msra.mxu0 %v2302
    %3077 = vmatprep.subr.mxu0 %v2295
    %3078 = vmatpush1.msra.mxu0 %v2294
    %3079 = vmatprep.subr.mxu0 %v2287
    %3080 = vmatpush1.msra.mxu0 %v2286
    %3081 = vmatprep.subr.mxu0 %v2279
    %3082 = vmatpush1.msra.mxu0 %v2278
    %3083 = vmatprep.subr.mxu0 %v2271
    %3084 = vmatpush1.msra.mxu0 %v2270
    %3085 = vmatprep.subr.mxu0 %v2263
    %3086 = vmatpush1.msra.mxu0 %v2262
    %3087 = vmatprep.subr.mxu0 %v2255
    %3088 = vmatpush1.msra.mxu0 %v2254
    %3089 = vmatprep.subr.mxu0 %v2247
    %3090 = vmatpush1.msra.mxu0 %v2246
    %3091 = vmatprep.subr.mxu0 %v2239
    %3092 = vmatpush1.msra.mxu0 %v2238
    %3093 = vmatprep.subr.mxu0 %v2231
    %3094 = vmatpush1.msra.mxu0 %v2230
    %3095 = vmatprep.subr.mxu0 %v2223
    %3096 = vmatpush1.msra.mxu0 %v2222
    %3097 = vmatprep.subr.mxu0 %v2471
    %3098 = vmatpush2.msra.mxu0 %v2470
    %3099 = vmatprep.subr.mxu0 %v2463
    %3100 = vmatpush2.msra.mxu0 %v2462
    %3101 = vmatprep.subr.mxu0 %v2455
    %3102 = vmatpush2.msra.mxu0 %v2454
    %3103 = vmatprep.subr.mxu0 %v2447
    %3104 = vmatpush2.msra.mxu0 %v2446
    %3105 = vmatprep.subr.mxu0 %v2439
    %3106 = vmatpush2.msra.mxu0 %v2438
    %3107 = vmatprep.subr.mxu0 %v2431
    %3108 = vmatpush2.msra.mxu0 %v2430
    %3109 = vmatprep.subr.mxu0 %v2423
    %3110 = vmatpush2.msra.mxu0 %v2422
    %3111 = vmatprep.subr.mxu0 %v2415
    %3112 = vmatpush2.msra.mxu0 %v2414
    %3113 = vmatprep.subr.mxu0 %v2407
    %3114 = vmatpush2.msra.mxu0 %v2406
    %3115 = vmatprep.subr.mxu0 %v2399
    %3116 = vmatpush2.msra.mxu0 %v2398
    %3117 = vmatprep.subr.mxu0 %v2391
    %3118 = vmatpush2.msra.mxu0 %v2390
    %3119 = vmatprep.subr.mxu0 %v2383
    %3120 = vmatpush2.msra.mxu0 %v2382
    %3121 = vmatprep.subr.mxu0 %v2375
    %3122 = vmatpush2.msra.mxu0 %v2374
    %3123 = vmatprep.subr.mxu0 %v2367
    %3124 = vmatpush2.msra.mxu0 %v2366
    %3125 = vmatprep.subr.mxu0 %v2359
    %3126 = vmatpush2.msra.mxu0 %v2358
    %3127 = vmatprep.subr.mxu0 %v2351
    %3128 = vmatpush2.msra.mxu0 %v2350
    %3129 = vmatprep.mubr.f32.mxu0 %v1706
    %3130 = vmatmul.mubr.f32.gmra.mxu0 %v1705
    %v3131 = vpop.f32.mrf.mxu0
    %v3132 = vadd.f32 %v3061, %v3131
    %v3133 = vpop.f32.mrf.mxu0
    %v3134 = vadd.f32 %v3063, %v3133
    %3135 = vdwg.mxu0
    %3136 = vmatprep.subr.mxu0 %v2599
    %3137 = vmatpush1.msra.mxu0 %v2598
    %3138 = vmatprep.subr.mxu0 %v2591
    %3139 = vmatpush1.msra.mxu0 %v2590
    %3140 = vmatprep.subr.mxu0 %v2583
    %3141 = vmatpush1.msra.mxu0 %v2582
    %3142 = vmatprep.subr.mxu0 %v2575
    %3143 = vmatpush1.msra.mxu0 %v2574
    %3144 = vmatprep.subr.mxu0 %v2567
    %3145 = vmatpush1.msra.mxu0 %v2566
    %3146 = vmatprep.subr.mxu0 %v2559
    %3147 = vmatpush1.msra.mxu0 %v2558
    %3148 = vmatprep.subr.mxu0 %v2551
    %3149 = vmatpush1.msra.mxu0 %v2550
    %3150 = vmatprep.subr.mxu0 %v2543
    %3151 = vmatpush1.msra.mxu0 %v2542
    %3152 = vmatprep.subr.mxu0 %v2535
    %3153 = vmatpush1.msra.mxu0 %v2534
    %3154 = vmatprep.subr.mxu0 %v2527
    %3155 = vmatpush1.msra.mxu0 %v2526
    %3156 = vmatprep.subr.mxu0 %v2519
    %3157 = vmatpush1.msra.mxu0 %v2518
    %3158 = vmatprep.subr.mxu0 %v2511
    %3159 = vmatpush1.msra.mxu0 %v2510
    %3160 = vmatprep.subr.mxu0 %v2503
    %3161 = vmatpush1.msra.mxu0 %v2502
    %3162 = vmatprep.subr.mxu0 %v2495
    %3163 = vmatpush1.msra.mxu0 %v2494
    %3164 = vmatprep.subr.mxu0 %v2487
    %3165 = vmatpush1.msra.mxu0 %v2486
    %3166 = vmatprep.subr.mxu0 %v2479
    %3167 = vmatpush1.msra.mxu0 %v2478
    %3168 = vmatprep.subr.mxu0 %v2727
    %3169 = vmatpush2.msra.mxu0 %v2726
    %3170 = vmatprep.subr.mxu0 %v2719
    %3171 = vmatpush2.msra.mxu0 %v2718
    %3172 = vmatprep.subr.mxu0 %v2711
    %3173 = vmatpush2.msra.mxu0 %v2710
    %3174 = vmatprep.subr.mxu0 %v2703
    %3175 = vmatpush2.msra.mxu0 %v2702
    %3176 = vmatprep.subr.mxu0 %v2695
    %3177 = vmatpush2.msra.mxu0 %v2694
    %3178 = vmatprep.subr.mxu0 %v2687
    %3179 = vmatpush2.msra.mxu0 %v2686
    %3180 = vmatprep.subr.mxu0 %v2679
    %3181 = vmatpush2.msra.mxu0 %v2678
    %3182 = vmatprep.subr.mxu0 %v2671
    %3183 = vmatpush2.msra.mxu0 %v2670
    %3184 = vmatprep.subr.mxu0 %v2663
    %3185 = vmatpush2.msra.mxu0 %v2662
    %3186 = vmatprep.subr.mxu0 %v2655
    %3187 = vmatpush2.msra.mxu0 %v2654
    %3188 = vmatprep.subr.mxu0 %v2647
    %3189 = vmatpush2.msra.mxu0 %v2646
    %3190 = vmatprep.subr.mxu0 %v2639
    %3191 = vmatpush2.msra.mxu0 %v2638
    %3192 = vmatprep.subr.mxu0 %v2631
    %3193 = vmatpush2.msra.mxu0 %v2630
    %3194 = vmatprep.subr.mxu0 %v2623
    %3195 = vmatpush2.msra.mxu0 %v2622
    %3196 = vmatprep.subr.mxu0 %v2615
    %3197 = vmatpush2.msra.mxu0 %v2614
    %3198 = vmatprep.subr.mxu0 %v2607
    %3199 = vmatpush2.msra.mxu0 %v2606
    %3200 = vmatprep.mubr.f32.mxu0 %v1708
    %3201 = vmatmul.mubr.f32.gmra.mxu0 %v1707
    %v3202 = vpop.f32.mrf.mxu0
    %v3203 = vadd.f32 %v3132, %v3202
    %v3204 = vpop.f32.mrf.mxu0
    %v3205 = vadd.f32 %v3134, %v3204
    %3206 = vdwg.mxu0
    %3207 = vmatprep.subr.mxu0 0.0
    %3208 = vmatpush1.msra.mxu0 0.0
    %3209 = vmatprep.subr.mxu0 %v2903
    %3210 = vmatpush1.msra.mxu0 %v2900
    %3211 = vmatprep.subr.mxu0 %v2839
    %3212 = vmatpush1.msra.mxu0 %v2838
    %3213 = vmatprep.subr.mxu0 %v2831
    %3214 = vmatpush1.msra.mxu0 %v2830
    %3215 = vmatprep.subr.mxu0 %v2823
    %3216 = vmatpush1.msra.mxu0 %v2822
    %3217 = vmatprep.subr.mxu0 %v2815
    %3218 = vmatpush1.msra.mxu0 %v2814
    %3219 = vmatprep.subr.mxu0 %v2807
    %3220 = vmatpush1.msra.mxu0 %v2806
    %3221 = vmatprep.subr.mxu0 %v2799
    %3222 = vmatpush1.msra.mxu0 %v2798
    %3223 = vmatprep.subr.mxu0 %v2791
    %3224 = vmatpush1.msra.mxu0 %v2790
    %3225 = vmatprep.subr.mxu0 %v2783
    %3226 = vmatpush1.msra.mxu0 %v2782
    %3227 = vmatprep.subr.mxu0 %v2775
    %3228 = vmatpush1.msra.mxu0 %v2774
    %3229 = vmatprep.subr.mxu0 %v2767
    %3230 = vmatpush1.msra.mxu0 %v2766
    %3231 = vmatprep.subr.mxu0 %v2759
    %3232 = vmatpush1.msra.mxu0 %v2758
    %3233 = vmatprep.subr.mxu0 %v2751
    %3234 = vmatpush1.msra.mxu0 %v2750
    %3235 = vmatprep.subr.mxu0 %v2743
    %3236 = vmatpush1.msra.mxu0 %v2742
    %3237 = vmatprep.subr.mxu0 %v2735
    %3238 = vmatpush1.msra.mxu0 %v2734
    %3239 = vmatprep.subr.mxu0 0.0
    %3240 = vmatpush2.msra.mxu0 0.0
    %3241 = vmatprep.subr.mxu0 0.0
    %3242 = vmatpush2.msra.mxu0 0.0
    %3243 = vmatprep.subr.mxu0 0.0
    %3244 = vmatpush2.msra.mxu0 0.0
    %3245 = vmatprep.subr.mxu0 0.0
    %3246 = vmatpush2.msra.mxu0 0.0
    %3247 = vmatprep.subr.mxu0 0.0
    %3248 = vmatpush2.msra.mxu0 0.0
    %3249 = vmatprep.subr.mxu0 0.0
    %3250 = vmatpush2.msra.mxu0 0.0
    %3251 = vmatprep.subr.mxu0 0.0
    %3252 = vmatpush2.msra.mxu0 0.0
    %3253 = vmatprep.subr.mxu0 0.0
    %3254 = vmatpush2.msra.mxu0 0.0
    %3255 = vmatprep.subr.mxu0 0.0
    %3256 = vmatpush2.msra.mxu0 0.0
    %3257 = vmatprep.subr.mxu0 0.0
    %3258 = vmatpush2.msra.mxu0 0.0
    %3259 = vmatprep.subr.mxu0 0.0
    %3260 = vmatpush2.msra.mxu0 0.0
    %3261 = vmatprep.subr.mxu0 0.0
    %3262 = vmatpush2.msra.mxu0 0.0
    %3263 = vmatprep.subr.mxu0 0.0
    %3264 = vmatpush2.msra.mxu0 0.0
    %3265 = vmatprep.subr.mxu0 0.0
    %3266 = vmatpush2.msra.mxu0 0.0
    %3267 = vmatprep.subr.mxu0 0.0
    %3268 = vmatpush2.msra.mxu0 0.0
    %3269 = vmatprep.subr.mxu0 0.0
    %3270 = vmatpush2.msra.mxu0 0.0
    %3271 = vmatprep.mubr.f32.mxu0 0.0
    %3272 = vmatmul.mubr.f32.gmra.mxu0 %v2897
    %v3273 = vpop.f32.mrf.mxu0
    %v3274 = vadd.f32 %v3203, %v3273
    %v3275 = vpop.f32.mrf.mxu0
    %v3276 = vadd.f32 %v3205, %v3275
    %3277 = vdwg.mxu0
    %3278 = vmatprep.subr.mxu0 %v1833
    %3279 = vmatpush1.msra.mxu0 %v1832
    %3280 = vmatprep.subr.mxu0 %v1825
    %3281 = vmatpush1.msra.mxu0 %v1824
    %3282 = vmatprep.subr.mxu0 %v1817
    %3283 = vmatpush1.msra.mxu0 %v1816
    %3284 = vmatprep.subr.mxu0 %v1809
    %3285 = vmatpush1.msra.mxu0 %v1808
    %3286 = vmatprep.subr.mxu0 %v1801
    %3287 = vmatpush1.msra.mxu0 %v1800
    %3288 = vmatprep.subr.mxu0 %v1793
    %3289 = vmatpush1.msra.mxu0 %v1792
    %3290 = vmatprep.subr.mxu0 %v1785
    %3291 = vmatpush1.msra.mxu0 %v1784
    %3292 = vmatprep.subr.mxu0 %v1777
    %3293 = vmatpush1.msra.mxu0 %v1776
    %3294 = vmatprep.subr.mxu0 %v1769
    %3295 = vmatpush1.msra.mxu0 %v1768
    %3296 = vmatprep.subr.mxu0 %v1761
    %3297 = vmatpush1.msra.mxu0 %v1760
    %3298 = vmatprep.subr.mxu0 %v1753
    %3299 = vmatpush1.msra.mxu0 %v1752
    %3300 = vmatprep.subr.mxu0 %v1745
    %3301 = vmatpush1.msra.mxu0 %v1744
    %3302 = vmatprep.subr.mxu0 %v1737
    %3303 = vmatpush1.msra.mxu0 %v1736
    %3304 = vmatprep.subr.mxu0 %v1729
    %3305 = vmatpush1.msra.mxu0 %v1728
    %3306 = vmatprep.subr.mxu0 %v1721
    %3307 = vmatpush1.msra.mxu0 %v1720
    %3308 = vmatprep.subr.mxu0 %v1713
    %3309 = vmatpush1.msra.mxu0 %v1712
    %3310 = vmatprep.subr.mxu0 %v1961
    %3311 = vmatpush2.msra.mxu0 %v1960
    %3312 = vmatprep.subr.mxu0 %v1953
    %3313 = vmatpush2.msra.mxu0 %v1952
    %3314 = vmatprep.subr.mxu0 %v1945
    %3315 = vmatpush2.msra.mxu0 %v1944
    %3316 = vmatprep.subr.mxu0 %v1937
    %3317 = vmatpush2.msra.mxu0 %v1936
    %3318 = vmatprep.subr.mxu0 %v1929
    %3319 = vmatpush2.msra.mxu0 %v1928
    %3320 = vmatprep.subr.mxu0 %v1921
    %3321 = vmatpush2.msra.mxu0 %v1920
    %3322 = vmatprep.subr.mxu0 %v1913
    %3323 = vmatpush2.msra.mxu0 %v1912
    %3324 = vmatprep.subr.mxu0 %v1905
    %3325 = vmatpush2.msra.mxu0 %v1904
    %3326 = vmatprep.subr.mxu0 %v1897
    %3327 = vmatpush2.msra.mxu0 %v1896
    %3328 = vmatprep.subr.mxu0 %v1889
    %3329 = vmatpush2.msra.mxu0 %v1888
    %3330 = vmatprep.subr.mxu0 %v1881
    %3331 = vmatpush2.msra.mxu0 %v1880
    %3332 = vmatprep.subr.mxu0 %v1873
    %3333 = vmatpush2.msra.mxu0 %v1872
    %3334 = vmatprep.subr.mxu0 %v1865
    %3335 = vmatpush2.msra.mxu0 %v1864
    %3336 = vmatprep.subr.mxu0 %v1857
    %3337 = vmatpush2.msra.mxu0 %v1856
    %3338 = vmatprep.subr.mxu0 %v1849
    %3339 = vmatpush2.msra.mxu0 %v1848
    %3340 = vmatprep.subr.mxu0 %v1841
    %3341 = vmatpush2.msra.mxu0 %v1840
    %3342 = vmatprep.mubr.f32.mxu0 %v1702
    %3343 = vmatmul.mubr.f32.gmra.mxu0 %v1701
    %v3344 = vpop.f32.mrf.mxu0
    %v3345 = vadd.f32 %v2867, %v3344
    %v3346 = vpop.f32.mrf.mxu0
    %v3347 = vadd.f32 %v2871, %v3346
    %3348 = vdwg.mxu0
    %3349 = vmatprep.subr.mxu0 %v2089
    %3350 = vmatpush1.msra.mxu0 %v2088
    %3351 = vmatprep.subr.mxu0 %v2081
    %3352 = vmatpush1.msra.mxu0 %v2080
    %3353 = vmatprep.subr.mxu0 %v2073
    %3354 = vmatpush1.msra.mxu0 %v2072
    %3355 = vmatprep.subr.mxu0 %v2065
    %3356 = vmatpush1.msra.mxu0 %v2064
    %3357 = vmatprep.subr.mxu0 %v2057
    %3358 = vmatpush1.msra.mxu0 %v2056
    %3359 = vmatprep.subr.mxu0 %v2049
    %3360 = vmatpush1.msra.mxu0 %v2048
    %3361 = vmatprep.subr.mxu0 %v2041
    %3362 = vmatpush1.msra.mxu0 %v2040
    %3363 = vmatprep.subr.mxu0 %v2033
    %3364 = vmatpush1.msra.mxu0 %v2032
    %3365 = vmatprep.subr.mxu0 %v2025
    %3366 = vmatpush1.msra.mxu0 %v2024
    %3367 = vmatprep.subr.mxu0 %v2017
    %3368 = vmatpush1.msra.mxu0 %v2016
    %3369 = vmatprep.subr.mxu0 %v2009
    %3370 = vmatpush1.msra.mxu0 %v2008
    %3371 = vmatprep.subr.mxu0 %v2001
    %3372 = vmatpush1.msra.mxu0 %v2000
    %3373 = vmatprep.subr.mxu0 %v1993
    %3374 = vmatpush1.msra.mxu0 %v1992
    %3375 = vmatprep.subr.mxu0 %v1985
    %3376 = vmatpush1.msra.mxu0 %v1984
    %3377 = vmatprep.subr.mxu0 %v1977
    %3378 = vmatpush1.msra.mxu0 %v1976
    %3379 = vmatprep.subr.mxu0 %v1969
    %3380 = vmatpush1.msra.mxu0 %v1968
    %3381 = vmatprep.subr.mxu0 %v2217
    %3382 = vmatpush2.msra.mxu0 %v2216
    %3383 = vmatprep.subr.mxu0 %v2209
    %3384 = vmatpush2.msra.mxu0 %v2208
    %3385 = vmatprep.subr.mxu0 %v2201
    %3386 = vmatpush2.msra.mxu0 %v2200
    %3387 = vmatprep.subr.mxu0 %v2193
    %3388 = vmatpush2.msra.mxu0 %v2192
    %3389 = vmatprep.subr.mxu0 %v2185
    %3390 = vmatpush2.msra.mxu0 %v2184
    %3391 = vmatprep.subr.mxu0 %v2177
    %3392 = vmatpush2.msra.mxu0 %v2176
    %3393 = vmatprep.subr.mxu0 %v2169
    %3394 = vmatpush2.msra.mxu0 %v2168
    %3395 = vmatprep.subr.mxu0 %v2161
    %3396 = vmatpush2.msra.mxu0 %v2160
    %3397 = vmatprep.subr.mxu0 %v2153
    %3398 = vmatpush2.msra.mxu0 %v2152
    %3399 = vmatprep.subr.mxu0 %v2145
    %3400 = vmatpush2.msra.mxu0 %v2144
    %3401 = vmatprep.subr.mxu0 %v2137
    %3402 = vmatpush2.msra.mxu0 %v2136
    %3403 = vmatprep.subr.mxu0 %v2129
    %3404 = vmatpush2.msra.mxu0 %v2128
    %3405 = vmatprep.subr.mxu0 %v2121
    %3406 = vmatpush2.msra.mxu0 %v2120
    %3407 = vmatprep.subr.mxu0 %v2113
    %3408 = vmatpush2.msra.mxu0 %v2112
    %3409 = vmatprep.subr.mxu0 %v2105
    %3410 = vmatpush2.msra.mxu0 %v2104
    %3411 = vmatprep.subr.mxu0 %v2097
    %3412 = vmatpush2.msra.mxu0 %v2096
    %3413 = vmatprep.mubr.f32.mxu0 %v1704
    %3414 = vmatmul.mubr.f32.gmra.mxu0 %v1703
    %v3415 = vpop.f32.mrf.mxu0
    %v3416 = vadd.f32 %v3345, %v3415
    %v3417 = vpop.f32.mrf.mxu0
    %v3418 = vadd.f32 %v3347, %v3417
    %3419 = vdwg.mxu0
    %3420 = vmatprep.subr.mxu0 %v2345
    %3421 = vmatpush1.msra.mxu0 %v2344
    %3422 = vmatprep.subr.mxu0 %v2337
    %3423 = vmatpush1.msra.mxu0 %v2336
    %3424 = vmatprep.subr.mxu0 %v2329
    %3425 = vmatpush1.msra.mxu0 %v2328
    %3426 = vmatprep.subr.mxu0 %v2321
    %3427 = vmatpush1.msra.mxu0 %v2320
    %3428 = vmatprep.subr.mxu0 %v2313
    %3429 = vmatpush1.msra.mxu0 %v2312
    %3430 = vmatprep.subr.mxu0 %v2305
    %3431 = vmatpush1.msra.mxu0 %v2304
    %3432 = vmatprep.subr.mxu0 %v2297
    %3433 = vmatpush1.msra.mxu0 %v2296
    %3434 = vmatprep.subr.mxu0 %v2289
    %3435 = vmatpush1.msra.mxu0 %v2288
    %3436 = vmatprep.subr.mxu0 %v2281
    %3437 = vmatpush1.msra.mxu0 %v2280
    %3438 = vmatprep.subr.mxu0 %v2273
    %3439 = vmatpush1.msra.mxu0 %v2272
    %3440 = vmatprep.subr.mxu0 %v2265
    %3441 = vmatpush1.msra.mxu0 %v2264
    %3442 = vmatprep.subr.mxu0 %v2257
    %3443 = vmatpush1.msra.mxu0 %v2256
    %3444 = vmatprep.subr.mxu0 %v2249
    %3445 = vmatpush1.msra.mxu0 %v2248
    %3446 = vmatprep.subr.mxu0 %v2241
    %3447 = vmatpush1.msra.mxu0 %v2240
    %3448 = vmatprep.subr.mxu0 %v2233
    %3449 = vmatpush1.msra.mxu0 %v2232
    %3450 = vmatprep.subr.mxu0 %v2225
    %3451 = vmatpush1.msra.mxu0 %v2224
    %3452 = vmatprep.subr.mxu0 %v2473
    %3453 = vmatpush2.msra.mxu0 %v2472
    %3454 = vmatprep.subr.mxu0 %v2465
    %3455 = vmatpush2.msra.mxu0 %v2464
    %3456 = vmatprep.subr.mxu0 %v2457
    %3457 = vmatpush2.msra.mxu0 %v2456
    %3458 = vmatprep.subr.mxu0 %v2449
    %3459 = vmatpush2.msra.mxu0 %v2448
    %3460 = vmatprep.subr.mxu0 %v2441
    %3461 = vmatpush2.msra.mxu0 %v2440
    %3462 = vmatprep.subr.mxu0 %v2433
    %3463 = vmatpush2.msra.mxu0 %v2432
    %3464 = vmatprep.subr.mxu0 %v2425
    %3465 = vmatpush2.msra.mxu0 %v2424
    %3466 = vmatprep.subr.mxu0 %v2417
    %3467 = vmatpush2.msra.mxu0 %v2416
    %3468 = vmatprep.subr.mxu0 %v2409
    %3469 = vmatpush2.msra.mxu0 %v2408
    %3470 = vmatprep.subr.mxu0 %v2401
    %3471 = vmatpush2.msra.mxu0 %v2400
    %3472 = vmatprep.subr.mxu0 %v2393
    %3473 = vmatpush2.msra.mxu0 %v2392
    %3474 = vmatprep.subr.mxu0 %v2385
    %3475 = vmatpush2.msra.mxu0 %v2384
    %3476 = vmatprep.subr.mxu0 %v2377
    %3477 = vmatpush2.msra.mxu0 %v2376
    %3478 = vmatprep.subr.mxu0 %v2369
    %3479 = vmatpush2.msra.mxu0 %v2368
    %3480 = vmatprep.subr.mxu0 %v2361
    %3481 = vmatpush2.msra.mxu0 %v2360
    %3482 = vmatprep.subr.mxu0 %v2353
    %3483 = vmatpush2.msra.mxu0 %v2352
    %3484 = vmatprep.mubr.f32.mxu0 %v1706
    %3485 = vmatmul.mubr.f32.gmra.mxu0 %v1705
    %v3486 = vpop.f32.mrf.mxu0
    %v3487 = vadd.f32 %v3416, %v3486
    %v3488 = vpop.f32.mrf.mxu0
    %v3489 = vadd.f32 %v3418, %v3488
    %3490 = vdwg.mxu0
    %3491 = vmatprep.subr.mxu0 %v2601
    %3492 = vmatpush1.msra.mxu0 %v2600
    %3493 = vmatprep.subr.mxu0 %v2593
    %3494 = vmatpush1.msra.mxu0 %v2592
    %3495 = vmatprep.subr.mxu0 %v2585
    %3496 = vmatpush1.msra.mxu0 %v2584
    %3497 = vmatprep.subr.mxu0 %v2577
    %3498 = vmatpush1.msra.mxu0 %v2576
    %3499 = vmatprep.subr.mxu0 %v2569
    %3500 = vmatpush1.msra.mxu0 %v2568
    %3501 = vmatprep.subr.mxu0 %v2561
    %3502 = vmatpush1.msra.mxu0 %v2560
    %3503 = vmatprep.subr.mxu0 %v2553
    %3504 = vmatpush1.msra.mxu0 %v2552
    %3505 = vmatprep.subr.mxu0 %v2545
    %3506 = vmatpush1.msra.mxu0 %v2544
    %3507 = vmatprep.subr.mxu0 %v2537
    %3508 = vmatpush1.msra.mxu0 %v2536
    %3509 = vmatprep.subr.mxu0 %v2529
    %3510 = vmatpush1.msra.mxu0 %v2528
    %3511 = vmatprep.subr.mxu0 %v2521
    %3512 = vmatpush1.msra.mxu0 %v2520
    %3513 = vmatprep.subr.mxu0 %v2513
    %3514 = vmatpush1.msra.mxu0 %v2512
    %3515 = vmatprep.subr.mxu0 %v2505
    %3516 = vmatpush1.msra.mxu0 %v2504
    %3517 = vmatprep.subr.mxu0 %v2497
    %3518 = vmatpush1.msra.mxu0 %v2496
    %3519 = vmatprep.subr.mxu0 %v2489
    %3520 = vmatpush1.msra.mxu0 %v2488
    %3521 = vmatprep.subr.mxu0 %v2481
    %3522 = vmatpush1.msra.mxu0 %v2480
    %3523 = vmatprep.subr.mxu0 %v2729
    %3524 = vmatpush2.msra.mxu0 %v2728
    %3525 = vmatprep.subr.mxu0 %v2721
    %3526 = vmatpush2.msra.mxu0 %v2720
    %3527 = vmatprep.subr.mxu0 %v2713
    %3528 = vmatpush2.msra.mxu0 %v2712
    %3529 = vmatprep.subr.mxu0 %v2705
    %3530 = vmatpush2.msra.mxu0 %v2704
    %3531 = vmatprep.subr.mxu0 %v2697
    %3532 = vmatpush2.msra.mxu0 %v2696
    %3533 = vmatprep.subr.mxu0 %v2689
    %3534 = vmatpush2.msra.mxu0 %v2688
    %3535 = vmatprep.subr.mxu0 %v2681
    %3536 = vmatpush2.msra.mxu0 %v2680
    %3537 = vmatprep.subr.mxu0 %v2673
    %3538 = vmatpush2.msra.mxu0 %v2672
    %3539 = vmatprep.subr.mxu0 %v2665
    %3540 = vmatpush2.msra.mxu0 %v2664
    %3541 = vmatprep.subr.mxu0 %v2657
    %3542 = vmatpush2.msra.mxu0 %v2656
    %3543 = vmatprep.subr.mxu0 %v2649
    %3544 = vmatpush2.msra.mxu0 %v2648
    %3545 = vmatprep.subr.mxu0 %v2641
    %3546 = vmatpush2.msra.mxu0 %v2640
    %3547 = vmatprep.subr.mxu0 %v2633
    %3548 = vmatpush2.msra.mxu0 %v2632
    %3549 = vmatprep.subr.mxu0 %v2625
    %3550 = vmatpush2.msra.mxu0 %v2624
    %3551 = vmatprep.subr.mxu0 %v2617
    %3552 = vmatpush2.msra.mxu0 %v2616
    %3553 = vmatprep.subr.mxu0 %v2609
    %3554 = vmatpush2.msra.mxu0 %v2608
    %3555 = vmatprep.mubr.f32.mxu0 %v1708
    %3556 = vmatmul.mubr.f32.gmra.mxu0 %v1707
    %v3557 = vpop.f32.mrf.mxu0
    %v3558 = vadd.f32 %v3487, %v3557
    %v3559 = vpop.f32.mrf.mxu0
    %v3560 = vadd.f32 %v3489, %v3559
    %3561 = vdwg.mxu0
    %3562 = vmatprep.subr.mxu0 0.0
    %3563 = vmatpush1.msra.mxu0 0.0
    %3564 = vmatprep.subr.mxu0 %v2909
    %3565 = vmatpush1.msra.mxu0 %v2906
    %3566 = vmatprep.subr.mxu0 %v2841
    %3567 = vmatpush1.msra.mxu0 %v2840
    %3568 = vmatprep.subr.mxu0 %v2833
    %3569 = vmatpush1.msra.mxu0 %v2832
    %3570 = vmatprep.subr.mxu0 %v2825
    %3571 = vmatpush1.msra.mxu0 %v2824
    %3572 = vmatprep.subr.mxu0 %v2817
    %3573 = vmatpush1.msra.mxu0 %v2816
    %3574 = vmatprep.subr.mxu0 %v2809
    %3575 = vmatpush1.msra.mxu0 %v2808
    %3576 = vmatprep.subr.mxu0 %v2801
    %3577 = vmatpush1.msra.mxu0 %v2800
    %3578 = vmatprep.subr.mxu0 %v2793
    %3579 = vmatpush1.msra.mxu0 %v2792
    %3580 = vmatprep.subr.mxu0 %v2785
    %3581 = vmatpush1.msra.mxu0 %v2784
    %3582 = vmatprep.subr.mxu0 %v2777
    %3583 = vmatpush1.msra.mxu0 %v2776
    %3584 = vmatprep.subr.mxu0 %v2769
    %3585 = vmatpush1.msra.mxu0 %v2768
    %3586 = vmatprep.subr.mxu0 %v2761
    %3587 = vmatpush1.msra.mxu0 %v2760
    %3588 = vmatprep.subr.mxu0 %v2753
    %3589 = vmatpush1.msra.mxu0 %v2752
    %3590 = vmatprep.subr.mxu0 %v2745
    %3591 = vmatpush1.msra.mxu0 %v2744
    %3592 = vmatprep.subr.mxu0 %v2737
    %3593 = vmatpush1.msra.mxu0 %v2736
    %3594 = vmatprep.subr.mxu0 0.0
    %3595 = vmatpush2.msra.mxu0 0.0
    %3596 = vmatprep.subr.mxu0 0.0
    %3597 = vmatpush2.msra.mxu0 0.0
    %3598 = vmatprep.subr.mxu0 0.0
    %3599 = vmatpush2.msra.mxu0 0.0
    %3600 = vmatprep.subr.mxu0 0.0
    %3601 = vmatpush2.msra.mxu0 0.0
    %3602 = vmatprep.subr.mxu0 0.0
    %3603 = vmatpush2.msra.mxu0 0.0
    %3604 = vmatprep.subr.mxu0 0.0
    %3605 = vmatpush2.msra.mxu0 0.0
    %3606 = vmatprep.subr.mxu0 0.0
    %3607 = vmatpush2.msra.mxu0 0.0
    %3608 = vmatprep.subr.mxu0 0.0
    %3609 = vmatpush2.msra.mxu0 0.0
    %3610 = vmatprep.subr.mxu0 0.0
    %3611 = vmatpush2.msra.mxu0 0.0
    %3612 = vmatprep.subr.mxu0 0.0
    %3613 = vmatpush2.msra.mxu0 0.0
    %3614 = vmatprep.subr.mxu0 0.0
    %3615 = vmatpush2.msra.mxu0 0.0
    %3616 = vmatprep.subr.mxu0 0.0
    %3617 = vmatpush2.msra.mxu0 0.0
    %3618 = vmatprep.subr.mxu0 0.0
    %3619 = vmatpush2.msra.mxu0 0.0
    %3620 = vmatprep.subr.mxu0 0.0
    %3621 = vmatpush2.msra.mxu0 0.0
    %3622 = vmatprep.subr.mxu0 0.0
    %3623 = vmatpush2.msra.mxu0 0.0
    %3624 = vmatprep.subr.mxu0 0.0
    %3625 = vmatpush2.msra.mxu0 0.0
    %3626 = vmatprep.mubr.f32.mxu0 0.0
    %3627 = vmatmul.mubr.f32.gmra.mxu0 %v2897
    %v3628 = vpop.f32.mrf.mxu0
    %v3629 = vadd.f32 %v3558, %v3628
    %v3630 = vpop.f32.mrf.mxu0
    %v3631 = vadd.f32 %v3560, %v3630
    %3632 = vdwg.mxu0
    %3633 = vmatprep.subr.mxu0 %v1835
    %3634 = vmatpush1.msra.mxu0 %v1834
    %3635 = vmatprep.subr.mxu0 %v1827
    %3636 = vmatpush1.msra.mxu0 %v1826
    %3637 = vmatprep.subr.mxu0 %v1819
    %3638 = vmatpush1.msra.mxu0 %v1818
    %3639 = vmatprep.subr.mxu0 %v1811
    %3640 = vmatpush1.msra.mxu0 %v1810
    %3641 = vmatprep.subr.mxu0 %v1803
    %3642 = vmatpush1.msra.mxu0 %v1802
    %3643 = vmatprep.subr.mxu0 %v1795
    %3644 = vmatpush1.msra.mxu0 %v1794
    %3645 = vmatprep.subr.mxu0 %v1787
    %3646 = vmatpush1.msra.mxu0 %v1786
    %3647 = vmatprep.subr.mxu0 %v1779
    %3648 = vmatpush1.msra.mxu0 %v1778
    %3649 = vmatprep.subr.mxu0 %v1771
    %3650 = vmatpush1.msra.mxu0 %v1770
    %3651 = vmatprep.subr.mxu0 %v1763
    %3652 = vmatpush1.msra.mxu0 %v1762
    %3653 = vmatprep.subr.mxu0 %v1755
    %3654 = vmatpush1.msra.mxu0 %v1754
    %3655 = vmatprep.subr.mxu0 %v1747
    %3656 = vmatpush1.msra.mxu0 %v1746
    %3657 = vmatprep.subr.mxu0 %v1739
    %3658 = vmatpush1.msra.mxu0 %v1738
    %3659 = vmatprep.subr.mxu0 %v1731
    %3660 = vmatpush1.msra.mxu0 %v1730
    %3661 = vmatprep.subr.mxu0 %v1723
    %3662 = vmatpush1.msra.mxu0 %v1722
    %3663 = vmatprep.subr.mxu0 %v1715
    %3664 = vmatpush1.msra.mxu0 %v1714
    %3665 = vmatprep.subr.mxu0 %v1963
    %3666 = vmatpush2.msra.mxu0 %v1962
    %3667 = vmatprep.subr.mxu0 %v1955
    %3668 = vmatpush2.msra.mxu0 %v1954
    %3669 = vmatprep.subr.mxu0 %v1947
    %3670 = vmatpush2.msra.mxu0 %v1946
    %3671 = vmatprep.subr.mxu0 %v1939
    %3672 = vmatpush2.msra.mxu0 %v1938
    %3673 = vmatprep.subr.mxu0 %v1931
    %3674 = vmatpush2.msra.mxu0 %v1930
    %3675 = vmatprep.subr.mxu0 %v1923
    %3676 = vmatpush2.msra.mxu0 %v1922
    %3677 = vmatprep.subr.mxu0 %v1915
    %3678 = vmatpush2.msra.mxu0 %v1914
    %3679 = vmatprep.subr.mxu0 %v1907
    %3680 = vmatpush2.msra.mxu0 %v1906
    %3681 = vmatprep.subr.mxu0 %v1899
    %3682 = vmatpush2.msra.mxu0 %v1898
    %3683 = vmatprep.subr.mxu0 %v1891
    %3684 = vmatpush2.msra.mxu0 %v1890
    %3685 = vmatprep.subr.mxu0 %v1883
    %3686 = vmatpush2.msra.mxu0 %v1882
    %3687 = vmatprep.subr.mxu0 %v1875
    %3688 = vmatpush2.msra.mxu0 %v1874
    %3689 = vmatprep.subr.mxu0 %v1867
    %3690 = vmatpush2.msra.mxu0 %v1866
    %3691 = vmatprep.subr.mxu0 %v1859
    %3692 = vmatpush2.msra.mxu0 %v1858
    %3693 = vmatprep.subr.mxu0 %v1851
    %3694 = vmatpush2.msra.mxu0 %v1850
    %3695 = vmatprep.subr.mxu0 %v1843
    %3696 = vmatpush2.msra.mxu0 %v1842
    %3697 = vmatprep.mubr.f32.mxu0 %v1702
    %3698 = vmatmul.mubr.f32.gmra.mxu0 %v1701
    %v3699 = vpop.f32.mrf.mxu0
    %v3700 = vadd.f32 %v2875, %v3699
    %v3701 = vpop.f32.mrf.mxu0
    %v3702 = vadd.f32 %v2879, %v3701
    %3703 = vdwg.mxu0
    %3704 = vmatprep.subr.mxu0 %v2091
    %3705 = vmatpush1.msra.mxu0 %v2090
    %3706 = vmatprep.subr.mxu0 %v2083
    %3707 = vmatpush1.msra.mxu0 %v2082
    %3708 = vmatprep.subr.mxu0 %v2075
    %3709 = vmatpush1.msra.mxu0 %v2074
    %3710 = vmatprep.subr.mxu0 %v2067
    %3711 = vmatpush1.msra.mxu0 %v2066
    %3712 = vmatprep.subr.mxu0 %v2059
    %3713 = vmatpush1.msra.mxu0 %v2058
    %3714 = vmatprep.subr.mxu0 %v2051
    %3715 = vmatpush1.msra.mxu0 %v2050
    %3716 = vmatprep.subr.mxu0 %v2043
    %3717 = vmatpush1.msra.mxu0 %v2042
    %3718 = vmatprep.subr.mxu0 %v2035
    %3719 = vmatpush1.msra.mxu0 %v2034
    %3720 = vmatprep.subr.mxu0 %v2027
    %3721 = vmatpush1.msra.mxu0 %v2026
    %3722 = vmatprep.subr.mxu0 %v2019
    %3723 = vmatpush1.msra.mxu0 %v2018
    %3724 = vmatprep.subr.mxu0 %v2011
    %3725 = vmatpush1.msra.mxu0 %v2010
    %3726 = vmatprep.subr.mxu0 %v2003
    %3727 = vmatpush1.msra.mxu0 %v2002
    %3728 = vmatprep.subr.mxu0 %v1995
    %3729 = vmatpush1.msra.mxu0 %v1994
    %3730 = vmatprep.subr.mxu0 %v1987
    %3731 = vmatpush1.msra.mxu0 %v1986
    %3732 = vmatprep.subr.mxu0 %v1979
    %3733 = vmatpush1.msra.mxu0 %v1978
    %3734 = vmatprep.subr.mxu0 %v1971
    %3735 = vmatpush1.msra.mxu0 %v1970
    %3736 = vmatprep.subr.mxu0 %v2219
    %3737 = vmatpush2.msra.mxu0 %v2218
    %3738 = vmatprep.subr.mxu0 %v2211
    %3739 = vmatpush2.msra.mxu0 %v2210
    %3740 = vmatprep.subr.mxu0 %v2203
    %3741 = vmatpush2.msra.mxu0 %v2202
    %3742 = vmatprep.subr.mxu0 %v2195
    %3743 = vmatpush2.msra.mxu0 %v2194
    %3744 = vmatprep.subr.mxu0 %v2187
    %3745 = vmatpush2.msra.mxu0 %v2186
    %3746 = vmatprep.subr.mxu0 %v2179
    %3747 = vmatpush2.msra.mxu0 %v2178
    %3748 = vmatprep.subr.mxu0 %v2171
    %3749 = vmatpush2.msra.mxu0 %v2170
    %3750 = vmatprep.subr.mxu0 %v2163
    %3751 = vmatpush2.msra.mxu0 %v2162
    %3752 = vmatprep.subr.mxu0 %v2155
    %3753 = vmatpush2.msra.mxu0 %v2154
    %3754 = vmatprep.subr.mxu0 %v2147
    %3755 = vmatpush2.msra.mxu0 %v2146
    %3756 = vmatprep.subr.mxu0 %v2139
    %3757 = vmatpush2.msra.mxu0 %v2138
    %3758 = vmatprep.subr.mxu0 %v2131
    %3759 = vmatpush2.msra.mxu0 %v2130
    %3760 = vmatprep.subr.mxu0 %v2123
    %3761 = vmatpush2.msra.mxu0 %v2122
    %3762 = vmatprep.subr.mxu0 %v2115
    %3763 = vmatpush2.msra.mxu0 %v2114
    %3764 = vmatprep.subr.mxu0 %v2107
    %3765 = vmatpush2.msra.mxu0 %v2106
    %3766 = vmatprep.subr.mxu0 %v2099
    %3767 = vmatpush2.msra.mxu0 %v2098
    %3768 = vmatprep.mubr.f32.mxu0 %v1704
    %3769 = vmatmul.mubr.f32.gmra.mxu0 %v1703
    %v3770 = vpop.f32.mrf.mxu0
    %v3771 = vadd.f32 %v3700, %v3770
    %v3772 = vpop.f32.mrf.mxu0
    %v3773 = vadd.f32 %v3702, %v3772
    %3774 = vdwg.mxu0
    %3775 = vmatprep.subr.mxu0 %v2347
    %3776 = vmatpush1.msra.mxu0 %v2346
    %3777 = vmatprep.subr.mxu0 %v2339
    %3778 = vmatpush1.msra.mxu0 %v2338
    %3779 = vmatprep.subr.mxu0 %v2331
    %3780 = vmatpush1.msra.mxu0 %v2330
    %3781 = vmatprep.subr.mxu0 %v2323
    %3782 = vmatpush1.msra.mxu0 %v2322
    %3783 = vmatprep.subr.mxu0 %v2315
    %3784 = vmatpush1.msra.mxu0 %v2314
    %3785 = vmatprep.subr.mxu0 %v2307
    %3786 = vmatpush1.msra.mxu0 %v2306
    %3787 = vmatprep.subr.mxu0 %v2299
    %3788 = vmatpush1.msra.mxu0 %v2298
    %3789 = vmatprep.subr.mxu0 %v2291
    %3790 = vmatpush1.msra.mxu0 %v2290
    %3791 = vmatprep.subr.mxu0 %v2283
    %3792 = vmatpush1.msra.mxu0 %v2282
    %3793 = vmatprep.subr.mxu0 %v2275
    %3794 = vmatpush1.msra.mxu0 %v2274
    %3795 = vmatprep.subr.mxu0 %v2267
    %3796 = vmatpush1.msra.mxu0 %v2266
    %3797 = vmatprep.subr.mxu0 %v2259
    %3798 = vmatpush1.msra.mxu0 %v2258
    %3799 = vmatprep.subr.mxu0 %v2251
    %3800 = vmatpush1.msra.mxu0 %v2250
    %3801 = vmatprep.subr.mxu0 %v2243
    %3802 = vmatpush1.msra.mxu0 %v2242
    %3803 = vmatprep.subr.mxu0 %v2235
    %3804 = vmatpush1.msra.mxu0 %v2234
    %3805 = vmatprep.subr.mxu0 %v2227
    %3806 = vmatpush1.msra.mxu0 %v2226
    %3807 = vmatprep.subr.mxu0 %v2475
    %3808 = vmatpush2.msra.mxu0 %v2474
    %3809 = vmatprep.subr.mxu0 %v2467
    %3810 = vmatpush2.msra.mxu0 %v2466
    %3811 = vmatprep.subr.mxu0 %v2459
    %3812 = vmatpush2.msra.mxu0 %v2458
    %3813 = vmatprep.subr.mxu0 %v2451
    %3814 = vmatpush2.msra.mxu0 %v2450
    %3815 = vmatprep.subr.mxu0 %v2443
    %3816 = vmatpush2.msra.mxu0 %v2442
    %3817 = vmatprep.subr.mxu0 %v2435
    %3818 = vmatpush2.msra.mxu0 %v2434
    %3819 = vmatprep.subr.mxu0 %v2427
    %3820 = vmatpush2.msra.mxu0 %v2426
    %3821 = vmatprep.subr.mxu0 %v2419
    %3822 = vmatpush2.msra.mxu0 %v2418
    %3823 = vmatprep.subr.mxu0 %v2411
    %3824 = vmatpush2.msra.mxu0 %v2410
    %3825 = vmatprep.subr.mxu0 %v2403
    %3826 = vmatpush2.msra.mxu0 %v2402
    %3827 = vmatprep.subr.mxu0 %v2395
    %3828 = vmatpush2.msra.mxu0 %v2394
    %3829 = vmatprep.subr.mxu0 %v2387
    %3830 = vmatpush2.msra.mxu0 %v2386
    %3831 = vmatprep.subr.mxu0 %v2379
    %3832 = vmatpush2.msra.mxu0 %v2378
    %3833 = vmatprep.subr.mxu0 %v2371
    %3834 = vmatpush2.msra.mxu0 %v2370
    %3835 = vmatprep.subr.mxu0 %v2363
    %3836 = vmatpush2.msra.mxu0 %v2362
    %3837 = vmatprep.subr.mxu0 %v2355
    %3838 = vmatpush2.msra.mxu0 %v2354
    %3839 = vmatprep.mubr.f32.mxu0 %v1706
    %3840 = vmatmul.mubr.f32.gmra.mxu0 %v1705
    %v3841 = vpop.f32.mrf.mxu0
    %v3842 = vadd.f32 %v3771, %v3841
    %v3843 = vpop.f32.mrf.mxu0
    %v3844 = vadd.f32 %v3773, %v3843
    %3845 = vdwg.mxu0
    %3846 = vmatprep.subr.mxu0 %v2603
    %3847 = vmatpush1.msra.mxu0 %v2602
    %3848 = vmatprep.subr.mxu0 %v2595
    %3849 = vmatpush1.msra.mxu0 %v2594
    %3850 = vmatprep.subr.mxu0 %v2587
    %3851 = vmatpush1.msra.mxu0 %v2586
    %3852 = vmatprep.subr.mxu0 %v2579
    %3853 = vmatpush1.msra.mxu0 %v2578
    %3854 = vmatprep.subr.mxu0 %v2571
    %3855 = vmatpush1.msra.mxu0 %v2570
    %3856 = vmatprep.subr.mxu0 %v2563
    %3857 = vmatpush1.msra.mxu0 %v2562
    %3858 = vmatprep.subr.mxu0 %v2555
    %3859 = vmatpush1.msra.mxu0 %v2554
    %3860 = vmatprep.subr.mxu0 %v2547
    %3861 = vmatpush1.msra.mxu0 %v2546
    %3862 = vmatprep.subr.mxu0 %v2539
    %3863 = vmatpush1.msra.mxu0 %v2538
    %3864 = vmatprep.subr.mxu0 %v2531
    %3865 = vmatpush1.msra.mxu0 %v2530
    %3866 = vmatprep.subr.mxu0 %v2523
    %3867 = vmatpush1.msra.mxu0 %v2522
    %3868 = vmatprep.subr.mxu0 %v2515
    %3869 = vmatpush1.msra.mxu0 %v2514
    %3870 = vmatprep.subr.mxu0 %v2507
    %3871 = vmatpush1.msra.mxu0 %v2506
    %3872 = vmatprep.subr.mxu0 %v2499
    %3873 = vmatpush1.msra.mxu0 %v2498
    %3874 = vmatprep.subr.mxu0 %v2491
    %3875 = vmatpush1.msra.mxu0 %v2490
    %3876 = vmatprep.subr.mxu0 %v2483
    %3877 = vmatpush1.msra.mxu0 %v2482
    %3878 = vmatprep.subr.mxu0 %v2731
    %3879 = vmatpush2.msra.mxu0 %v2730
    %3880 = vmatprep.subr.mxu0 %v2723
    %3881 = vmatpush2.msra.mxu0 %v2722
    %3882 = vmatprep.subr.mxu0 %v2715
    %3883 = vmatpush2.msra.mxu0 %v2714
    %3884 = vmatprep.subr.mxu0 %v2707
    %3885 = vmatpush2.msra.mxu0 %v2706
    %3886 = vmatprep.subr.mxu0 %v2699
    %3887 = vmatpush2.msra.mxu0 %v2698
    %3888 = vmatprep.subr.mxu0 %v2691
    %3889 = vmatpush2.msra.mxu0 %v2690
    %3890 = vmatprep.subr.mxu0 %v2683
    %3891 = vmatpush2.msra.mxu0 %v2682
    %3892 = vmatprep.subr.mxu0 %v2675
    %3893 = vmatpush2.msra.mxu0 %v2674
    %3894 = vmatprep.subr.mxu0 %v2667
    %3895 = vmatpush2.msra.mxu0 %v2666
    %3896 = vmatprep.subr.mxu0 %v2659
    %3897 = vmatpush2.msra.mxu0 %v2658
    %3898 = vmatprep.subr.mxu0 %v2651
    %3899 = vmatpush2.msra.mxu0 %v2650
    %3900 = vmatprep.subr.mxu0 %v2643
    %3901 = vmatpush2.msra.mxu0 %v2642
    %3902 = vmatprep.subr.mxu0 %v2635
    %3903 = vmatpush2.msra.mxu0 %v2634
    %3904 = vmatprep.subr.mxu0 %v2627
    %3905 = vmatpush2.msra.mxu0 %v2626
    %3906 = vmatprep.subr.mxu0 %v2619
    %3907 = vmatpush2.msra.mxu0 %v2618
    %3908 = vmatprep.subr.mxu0 %v2611
    %3909 = vmatpush2.msra.mxu0 %v2610
    %3910 = vmatprep.mubr.f32.mxu0 %v1708
    %3911 = vmatmul.mubr.f32.gmra.mxu0 %v1707
    %v3912 = vpop.f32.mrf.mxu0
    %v3913 = vadd.f32 %v3842, %v3912
    %v3914 = vpop.f32.mrf.mxu0
    %v3915 = vadd.f32 %v3844, %v3914
    %3916 = vdwg.mxu0
    %3917 = vmatprep.subr.mxu0 0.0
    %3918 = vmatpush1.msra.mxu0 0.0
    %3919 = vmatprep.subr.mxu0 %v2915
    %3920 = vmatpush1.msra.mxu0 %v2912
    %3921 = vmatprep.subr.mxu0 %v2843
    %3922 = vmatpush1.msra.mxu0 %v2842
    %3923 = vmatprep.subr.mxu0 %v2835
    %3924 = vmatpush1.msra.mxu0 %v2834
    %3925 = vmatprep.subr.mxu0 %v2827
    %3926 = vmatpush1.msra.mxu0 %v2826
    %3927 = vmatprep.subr.mxu0 %v2819
    %3928 = vmatpush1.msra.mxu0 %v2818
    %3929 = vmatprep.subr.mxu0 %v2811
    %3930 = vmatpush1.msra.mxu0 %v2810
    %3931 = vmatprep.subr.mxu0 %v2803
    %3932 = vmatpush1.msra.mxu0 %v2802
    %3933 = vmatprep.subr.mxu0 %v2795
    %3934 = vmatpush1.msra.mxu0 %v2794
    %3935 = vmatprep.subr.mxu0 %v2787
    %3936 = vmatpush1.msra.mxu0 %v2786
    %3937 = vmatprep.subr.mxu0 %v2779
    %3938 = vmatpush1.msra.mxu0 %v2778
    %3939 = vmatprep.subr.mxu0 %v2771
    %3940 = vmatpush1.msra.mxu0 %v2770
    %3941 = vmatprep.subr.mxu0 %v2763
    %3942 = vmatpush1.msra.mxu0 %v2762
    %3943 = vmatprep.subr.mxu0 %v2755
    %3944 = vmatpush1.msra.mxu0 %v2754
    %3945 = vmatprep.subr.mxu0 %v2747
    %3946 = vmatpush1.msra.mxu0 %v2746
    %3947 = vmatprep.subr.mxu0 %v2739
    %3948 = vmatpush1.msra.mxu0 %v2738
    %3949 = vmatprep.subr.mxu0 0.0
    %3950 = vmatpush2.msra.mxu0 0.0
    %3951 = vmatprep.subr.mxu0 0.0
    %3952 = vmatpush2.msra.mxu0 0.0
    %3953 = vmatprep.subr.mxu0 0.0
    %3954 = vmatpush2.msra.mxu0 0.0
    %3955 = vmatprep.subr.mxu0 0.0
    %3956 = vmatpush2.msra.mxu0 0.0
    %3957 = vmatprep.subr.mxu0 0.0
    %3958 = vmatpush2.msra.mxu0 0.0
    %3959 = vmatprep.subr.mxu0 0.0
    %3960 = vmatpush2.msra.mxu0 0.0
    %3961 = vmatprep.subr.mxu0 0.0
    %3962 = vmatpush2.msra.mxu0 0.0
    %3963 = vmatprep.subr.mxu0 0.0
    %3964 = vmatpush2.msra.mxu0 0.0
    %3965 = vmatprep.subr.mxu0 0.0
    %3966 = vmatpush2.msra.mxu0 0.0
    %3967 = vmatprep.subr.mxu0 0.0
    %3968 = vmatpush2.msra.mxu0 0.0
    %3969 = vmatprep.subr.mxu0 0.0
    %3970 = vmatpush2.msra.mxu0 0.0
    %3971 = vmatprep.subr.mxu0 0.0
    %3972 = vmatpush2.msra.mxu0 0.0
    %3973 = vmatprep.subr.mxu0 0.0
    %3974 = vmatpush2.msra.mxu0 0.0
    %3975 = vmatprep.subr.mxu0 0.0
    %3976 = vmatpush2.msra.mxu0 0.0
    %3977 = vmatprep.subr.mxu0 0.0
    %3978 = vmatpush2.msra.mxu0 0.0
    %3979 = vmatprep.subr.mxu0 0.0
    %3980 = vmatpush2.msra.mxu0 0.0
    %3981 = vmatprep.mubr.f32.mxu0 0.0
    %3982 = vmatmul.mubr.f32.gmra.mxu0 %v2897
    %v3983 = vpop.f32.mrf.mxu0
    %v3984 = vadd.f32 %v3913, %v3983
    %v3985 = vpop.f32.mrf.mxu0
    %v3986 = vadd.f32 %v3915, %v3985
    %3987 = vdwg.mxu0
    %3988 = vmatprep.subr.mxu0 %v1837
    %3989 = vmatpush1.msra.mxu0 %v1836
    %3990 = vmatprep.subr.mxu0 %v1829
    %3991 = vmatpush1.msra.mxu0 %v1828
    %3992 = vmatprep.subr.mxu0 %v1821
    %3993 = vmatpush1.msra.mxu0 %v1820
    %3994 = vmatprep.subr.mxu0 %v1813
    %3995 = vmatpush1.msra.mxu0 %v1812
    %3996 = vmatprep.subr.mxu0 %v1805
    %3997 = vmatpush1.msra.mxu0 %v1804
    %3998 = vmatprep.subr.mxu0 %v1797
    %3999 = vmatpush1.msra.mxu0 %v1796
    %4000 = vmatprep.subr.mxu0 %v1789
    %4001 = vmatpush1.msra.mxu0 %v1788
    %4002 = vmatprep.subr.mxu0 %v1781
    %4003 = vmatpush1.msra.mxu0 %v1780
    %4004 = vmatprep.subr.mxu0 %v1773
    %4005 = vmatpush1.msra.mxu0 %v1772
    %4006 = vmatprep.subr.mxu0 %v1765
    %4007 = vmatpush1.msra.mxu0 %v1764
    %4008 = vmatprep.subr.mxu0 %v1757
    %4009 = vmatpush1.msra.mxu0 %v1756
    %4010 = vmatprep.subr.mxu0 %v1749
    %4011 = vmatpush1.msra.mxu0 %v1748
    %4012 = vmatprep.subr.mxu0 %v1741
    %4013 = vmatpush1.msra.mxu0 %v1740
    %4014 = vmatprep.subr.mxu0 %v1733
    %4015 = vmatpush1.msra.mxu0 %v1732
    %4016 = vmatprep.subr.mxu0 %v1725
    %4017 = vmatpush1.msra.mxu0 %v1724
    %4018 = vmatprep.subr.mxu0 %v1717
    %4019 = vmatpush1.msra.mxu0 %v1716
    %4020 = vmatprep.subr.mxu0 %v1965
    %4021 = vmatpush2.msra.mxu0 %v1964
    %4022 = vmatprep.subr.mxu0 %v1957
    %4023 = vmatpush2.msra.mxu0 %v1956
    %4024 = vmatprep.subr.mxu0 %v1949
    %4025 = vmatpush2.msra.mxu0 %v1948
    %4026 = vmatprep.subr.mxu0 %v1941
    %4027 = vmatpush2.msra.mxu0 %v1940
    %4028 = vmatprep.subr.mxu0 %v1933
    %4029 = vmatpush2.msra.mxu0 %v1932
    %4030 = vmatprep.subr.mxu0 %v1925
    %4031 = vmatpush2.msra.mxu0 %v1924
    %4032 = vmatprep.subr.mxu0 %v1917
    %4033 = vmatpush2.msra.mxu0 %v1916
    %4034 = vmatprep.subr.mxu0 %v1909
    %4035 = vmatpush2.msra.mxu0 %v1908
    %4036 = vmatprep.subr.mxu0 %v1901
    %4037 = vmatpush2.msra.mxu0 %v1900
    %4038 = vmatprep.subr.mxu0 %v1893
    %4039 = vmatpush2.msra.mxu0 %v1892
    %4040 = vmatprep.subr.mxu0 %v1885
    %4041 = vmatpush2.msra.mxu0 %v1884
    %4042 = vmatprep.subr.mxu0 %v1877
    %4043 = vmatpush2.msra.mxu0 %v1876
    %4044 = vmatprep.subr.mxu0 %v1869
    %4045 = vmatpush2.msra.mxu0 %v1868
    %4046 = vmatprep.subr.mxu0 %v1861
    %4047 = vmatpush2.msra.mxu0 %v1860
    %4048 = vmatprep.subr.mxu0 %v1853
    %4049 = vmatpush2.msra.mxu0 %v1852
    %4050 = vmatprep.subr.mxu0 %v1845
    %4051 = vmatpush2.msra.mxu0 %v1844
    %4052 = vmatprep.mubr.f32.mxu0 %v1702
    %4053 = vmatmul.mubr.f32.gmra.mxu0 %v1701
    %v4054 = vpop.f32.mrf.mxu0
    %v4055 = vadd.f32 %v2883, %v4054
    %v4056 = vpop.f32.mrf.mxu0
    %v4057 = vadd.f32 %v2887, %v4056
    %4058 = vdwg.mxu0
    %4059 = vmatprep.subr.mxu0 %v2093
    %4060 = vmatpush1.msra.mxu0 %v2092
    %4061 = vmatprep.subr.mxu0 %v2085
    %4062 = vmatpush1.msra.mxu0 %v2084
    %4063 = vmatprep.subr.mxu0 %v2077
    %4064 = vmatpush1.msra.mxu0 %v2076
    %4065 = vmatprep.subr.mxu0 %v2069
    %4066 = vmatpush1.msra.mxu0 %v2068
    %4067 = vmatprep.subr.mxu0 %v2061
    %4068 = vmatpush1.msra.mxu0 %v2060
    %4069 = vmatprep.subr.mxu0 %v2053
    %4070 = vmatpush1.msra.mxu0 %v2052
    %4071 = vmatprep.subr.mxu0 %v2045
    %4072 = vmatpush1.msra.mxu0 %v2044
    %4073 = vmatprep.subr.mxu0 %v2037
    %4074 = vmatpush1.msra.mxu0 %v2036
    %4075 = vmatprep.subr.mxu0 %v2029
    %4076 = vmatpush1.msra.mxu0 %v2028
    %4077 = vmatprep.subr.mxu0 %v2021
    %4078 = vmatpush1.msra.mxu0 %v2020
    %4079 = vmatprep.subr.mxu0 %v2013
    %4080 = vmatpush1.msra.mxu0 %v2012
    %4081 = vmatprep.subr.mxu0 %v2005
    %4082 = vmatpush1.msra.mxu0 %v2004
    %4083 = vmatprep.subr.mxu0 %v1997
    %4084 = vmatpush1.msra.mxu0 %v1996
    %4085 = vmatprep.subr.mxu0 %v1989
    %4086 = vmatpush1.msra.mxu0 %v1988
    %4087 = vmatprep.subr.mxu0 %v1981
    %4088 = vmatpush1.msra.mxu0 %v1980
    %4089 = vmatprep.subr.mxu0 %v1973
    %4090 = vmatpush1.msra.mxu0 %v1972
    %4091 = vmatprep.subr.mxu0 %v2221
    %4092 = vmatpush2.msra.mxu0 %v2220
    %4093 = vmatprep.subr.mxu0 %v2213
    %4094 = vmatpush2.msra.mxu0 %v2212
    %4095 = vmatprep.subr.mxu0 %v2205
    %4096 = vmatpush2.msra.mxu0 %v2204
    %4097 = vmatprep.subr.mxu0 %v2197
    %4098 = vmatpush2.msra.mxu0 %v2196
    %4099 = vmatprep.subr.mxu0 %v2189
    %4100 = vmatpush2.msra.mxu0 %v2188
    %4101 = vmatprep.subr.mxu0 %v2181
    %4102 = vmatpush2.msra.mxu0 %v2180
    %4103 = vmatprep.subr.mxu0 %v2173
    %4104 = vmatpush2.msra.mxu0 %v2172
    %4105 = vmatprep.subr.mxu0 %v2165
    %4106 = vmatpush2.msra.mxu0 %v2164
    %4107 = vmatprep.subr.mxu0 %v2157
    %4108 = vmatpush2.msra.mxu0 %v2156
    %4109 = vmatprep.subr.mxu0 %v2149
    %4110 = vmatpush2.msra.mxu0 %v2148
    %4111 = vmatprep.subr.mxu0 %v2141
    %4112 = vmatpush2.msra.mxu0 %v2140
    %4113 = vmatprep.subr.mxu0 %v2133
    %4114 = vmatpush2.msra.mxu0 %v2132
    %4115 = vmatprep.subr.mxu0 %v2125
    %4116 = vmatpush2.msra.mxu0 %v2124
    %4117 = vmatprep.subr.mxu0 %v2117
    %4118 = vmatpush2.msra.mxu0 %v2116
    %4119 = vmatprep.subr.mxu0 %v2109
    %4120 = vmatpush2.msra.mxu0 %v2108
    %4121 = vmatprep.subr.mxu0 %v2101
    %4122 = vmatpush2.msra.mxu0 %v2100
    %4123 = vmatprep.mubr.f32.mxu0 %v1704
    %4124 = vmatmul.mubr.f32.gmra.mxu0 %v1703
    %v4125 = vpop.f32.mrf.mxu0
    %v4126 = vadd.f32 %v4055, %v4125
    %v4127 = vpop.f32.mrf.mxu0
    %v4128 = vadd.f32 %v4057, %v4127
    %4129 = vdwg.mxu0
    %4130 = vmatprep.subr.mxu0 %v2349
    %4131 = vmatpush1.msra.mxu0 %v2348
    %4132 = vmatprep.subr.mxu0 %v2341
    %4133 = vmatpush1.msra.mxu0 %v2340
    %4134 = vmatprep.subr.mxu0 %v2333
    %4135 = vmatpush1.msra.mxu0 %v2332
    %4136 = vmatprep.subr.mxu0 %v2325
    %4137 = vmatpush1.msra.mxu0 %v2324
    %4138 = vmatprep.subr.mxu0 %v2317
    %4139 = vmatpush1.msra.mxu0 %v2316
    %4140 = vmatprep.subr.mxu0 %v2309
    %4141 = vmatpush1.msra.mxu0 %v2308
    %4142 = vmatprep.subr.mxu0 %v2301
    %4143 = vmatpush1.msra.mxu0 %v2300
    %4144 = vmatprep.subr.mxu0 %v2293
    %4145 = vmatpush1.msra.mxu0 %v2292
    %4146 = vmatprep.subr.mxu0 %v2285
    %4147 = vmatpush1.msra.mxu0 %v2284
    %4148 = vmatprep.subr.mxu0 %v2277
    %4149 = vmatpush1.msra.mxu0 %v2276
    %4150 = vmatprep.subr.mxu0 %v2269
    %4151 = vmatpush1.msra.mxu0 %v2268
    %4152 = vmatprep.subr.mxu0 %v2261
    %4153 = vmatpush1.msra.mxu0 %v2260
    %4154 = vmatprep.subr.mxu0 %v2253
    %4155 = vmatpush1.msra.mxu0 %v2252
    %4156 = vmatprep.subr.mxu0 %v2245
    %4157 = vmatpush1.msra.mxu0 %v2244
    %4158 = vmatprep.subr.mxu0 %v2237
    %4159 = vmatpush1.msra.mxu0 %v2236
    %4160 = vmatprep.subr.mxu0 %v2229
    %4161 = vmatpush1.msra.mxu0 %v2228
    %4162 = vmatprep.subr.mxu0 %v2477
    %4163 = vmatpush2.msra.mxu0 %v2476
    %4164 = vmatprep.subr.mxu0 %v2469
    %4165 = vmatpush2.msra.mxu0 %v2468
    %4166 = vmatprep.subr.mxu0 %v2461
    %4167 = vmatpush2.msra.mxu0 %v2460
    %4168 = vmatprep.subr.mxu0 %v2453
    %4169 = vmatpush2.msra.mxu0 %v2452
    %4170 = vmatprep.subr.mxu0 %v2445
    %4171 = vmatpush2.msra.mxu0 %v2444
    %4172 = vmatprep.subr.mxu0 %v2437
    %4173 = vmatpush2.msra.mxu0 %v2436
    %4174 = vmatprep.subr.mxu0 %v2429
    %4175 = vmatpush2.msra.mxu0 %v2428
    %4176 = vmatprep.subr.mxu0 %v2421
    %4177 = vmatpush2.msra.mxu0 %v2420
    %4178 = vmatprep.subr.mxu0 %v2413
    %4179 = vmatpush2.msra.mxu0 %v2412
    %4180 = vmatprep.subr.mxu0 %v2405
    %4181 = vmatpush2.msra.mxu0 %v2404
    %4182 = vmatprep.subr.mxu0 %v2397
    %4183 = vmatpush2.msra.mxu0 %v2396
    %4184 = vmatprep.subr.mxu0 %v2389
    %4185 = vmatpush2.msra.mxu0 %v2388
    %4186 = vmatprep.subr.mxu0 %v2381
    %4187 = vmatpush2.msra.mxu0 %v2380
    %4188 = vmatprep.subr.mxu0 %v2373
    %4189 = vmatpush2.msra.mxu0 %v2372
    %4190 = vmatprep.subr.mxu0 %v2365
    %4191 = vmatpush2.msra.mxu0 %v2364
    %4192 = vmatprep.subr.mxu0 %v2357
    %4193 = vmatpush2.msra.mxu0 %v2356
    %4194 = vmatprep.mubr.f32.mxu0 %v1706
    %4195 = vmatmul.mubr.f32.gmra.mxu0 %v1705
    %v4196 = vpop.f32.mrf.mxu0
    %v4197 = vadd.f32 %v4126, %v4196
    %v4198 = vpop.f32.mrf.mxu0
    %v4199 = vadd.f32 %v4128, %v4198
    %4200 = vdwg.mxu0
    %4201 = vmatprep.subr.mxu0 %v2605
    %4202 = vmatpush1.msra.mxu0 %v2604
    %4203 = vmatprep.subr.mxu0 %v2597
    %4204 = vmatpush1.msra.mxu0 %v2596
    %4205 = vmatprep.subr.mxu0 %v2589
    %4206 = vmatpush1.msra.mxu0 %v2588
    %4207 = vmatprep.subr.mxu0 %v2581
    %4208 = vmatpush1.msra.mxu0 %v2580
    %4209 = vmatprep.subr.mxu0 %v2573
    %4210 = vmatpush1.msra.mxu0 %v2572
    %4211 = vmatprep.subr.mxu0 %v2565
    %4212 = vmatpush1.msra.mxu0 %v2564
    %4213 = vmatprep.subr.mxu0 %v2557
    %4214 = vmatpush1.msra.mxu0 %v2556
    %4215 = vmatprep.subr.mxu0 %v2549
    %4216 = vmatpush1.msra.mxu0 %v2548
    %4217 = vmatprep.subr.mxu0 %v2541
    %4218 = vmatpush1.msra.mxu0 %v2540
    %4219 = vmatprep.subr.mxu0 %v2533
    %4220 = vmatpush1.msra.mxu0 %v2532
    %4221 = vmatprep.subr.mxu0 %v2525
    %4222 = vmatpush1.msra.mxu0 %v2524
    %4223 = vmatprep.subr.mxu0 %v2517
    %4224 = vmatpush1.msra.mxu0 %v2516
    %4225 = vmatprep.subr.mxu0 %v2509
    %4226 = vmatpush1.msra.mxu0 %v2508
    %4227 = vmatprep.subr.mxu0 %v2501
    %4228 = vmatpush1.msra.mxu0 %v2500
    %4229 = vmatprep.subr.mxu0 %v2493
    %4230 = vmatpush1.msra.mxu0 %v2492
    %4231 = vmatprep.subr.mxu0 %v2485
    %4232 = vmatpush1.msra.mxu0 %v2484
    %4233 = vmatprep.subr.mxu0 %v2733
    %4234 = vmatpush2.msra.mxu0 %v2732
    %4235 = vmatprep.subr.mxu0 %v2725
    %4236 = vmatpush2.msra.mxu0 %v2724
    %4237 = vmatprep.subr.mxu0 %v2717
    %4238 = vmatpush2.msra.mxu0 %v2716
    %4239 = vmatprep.subr.mxu0 %v2709
    %4240 = vmatpush2.msra.mxu0 %v2708
    %4241 = vmatprep.subr.mxu0 %v2701
    %4242 = vmatpush2.msra.mxu0 %v2700
    %4243 = vmatprep.subr.mxu0 %v2693
    %4244 = vmatpush2.msra.mxu0 %v2692
    %4245 = vmatprep.subr.mxu0 %v2685
    %4246 = vmatpush2.msra.mxu0 %v2684
    %4247 = vmatprep.subr.mxu0 %v2677
    %4248 = vmatpush2.msra.mxu0 %v2676
    %4249 = vmatprep.subr.mxu0 %v2669
    %4250 = vmatpush2.msra.mxu0 %v2668
    %4251 = vmatprep.subr.mxu0 %v2661
    %4252 = vmatpush2.msra.mxu0 %v2660
    %4253 = vmatprep.subr.mxu0 %v2653
    %4254 = vmatpush2.msra.mxu0 %v2652
    %4255 = vmatprep.subr.mxu0 %v2645
    %4256 = vmatpush2.msra.mxu0 %v2644
    %4257 = vmatprep.subr.mxu0 %v2637
    %4258 = vmatpush2.msra.mxu0 %v2636
    %4259 = vmatprep.subr.mxu0 %v2629
    %4260 = vmatpush2.msra.mxu0 %v2628
    %4261 = vmatprep.subr.mxu0 %v2621
    %4262 = vmatpush2.msra.mxu0 %v2620
    %4263 = vmatprep.subr.mxu0 %v2613
    %4264 = vmatpush2.msra.mxu0 %v2612
    %4265 = vmatprep.mubr.f32.mxu0 %v1708
    %4266 = vmatmul.mubr.f32.gmra.mxu0 %v1707
    %v4267 = vpop.f32.mrf.mxu0
    %v4268 = vadd.f32 %v4197, %v4267
    %v4269 = vpop.f32.mrf.mxu0
    %v4270 = vadd.f32 %v4199, %v4269
    %4271 = vdwg.mxu0
    %4272 = vmatprep.subr.mxu0 0.0
    %4273 = vmatpush1.msra.mxu0 0.0
    %4274 = vmatprep.subr.mxu0 %v2921
    %4275 = vmatpush1.msra.mxu0 %v2918
    %4276 = vmatprep.subr.mxu0 %v2845
    %4277 = vmatpush1.msra.mxu0 %v2844
    %4278 = vmatprep.subr.mxu0 %v2837
    %4279 = vmatpush1.msra.mxu0 %v2836
    %4280 = vmatprep.subr.mxu0 %v2829
    %4281 = vmatpush1.msra.mxu0 %v2828
    %4282 = vmatprep.subr.mxu0 %v2821
    %4283 = vmatpush1.msra.mxu0 %v2820
    %4284 = vmatprep.subr.mxu0 %v2813
    %4285 = vmatpush1.msra.mxu0 %v2812
    %4286 = vmatprep.subr.mxu0 %v2805
    %4287 = vmatpush1.msra.mxu0 %v2804
    %4288 = vmatprep.subr.mxu0 %v2797
    %4289 = vmatpush1.msra.mxu0 %v2796
    %4290 = vmatprep.subr.mxu0 %v2789
    %4291 = vmatpush1.msra.mxu0 %v2788
    %4292 = vmatprep.subr.mxu0 %v2781
    %4293 = vmatpush1.msra.mxu0 %v2780
    %4294 = vmatprep.subr.mxu0 %v2773
    %4295 = vmatpush1.msra.mxu0 %v2772
    %4296 = vmatprep.subr.mxu0 %v2765
    %4297 = vmatpush1.msra.mxu0 %v2764
    %4298 = vmatprep.subr.mxu0 %v2757
    %4299 = vmatpush1.msra.mxu0 %v2756
    %4300 = vmatprep.subr.mxu0 %v2749
    %4301 = vmatpush1.msra.mxu0 %v2748
    %4302 = vmatprep.subr.mxu0 %v2741
    %4303 = vmatpush1.msra.mxu0 %v2740
    %4304 = vmatprep.subr.mxu0 0.0
    %4305 = vmatpush2.msra.mxu0 0.0
    %4306 = vmatprep.subr.mxu0 0.0
    %4307 = vmatpush2.msra.mxu0 0.0
    %4308 = vmatprep.subr.mxu0 0.0
    %4309 = vmatpush2.msra.mxu0 0.0
    %4310 = vmatprep.subr.mxu0 0.0
    %4311 = vmatpush2.msra.mxu0 0.0
    %4312 = vmatprep.subr.mxu0 0.0
    %4313 = vmatpush2.msra.mxu0 0.0
    %4314 = vmatprep.subr.mxu0 0.0
    %4315 = vmatpush2.msra.mxu0 0.0
    %4316 = vmatprep.subr.mxu0 0.0
    %4317 = vmatpush2.msra.mxu0 0.0
    %4318 = vmatprep.subr.mxu0 0.0
    %4319 = vmatpush2.msra.mxu0 0.0
    %4320 = vmatprep.subr.mxu0 0.0
    %4321 = vmatpush2.msra.mxu0 0.0
    %4322 = vmatprep.subr.mxu0 0.0
    %4323 = vmatpush2.msra.mxu0 0.0
    %4324 = vmatprep.subr.mxu0 0.0
    %4325 = vmatpush2.msra.mxu0 0.0
    %4326 = vmatprep.subr.mxu0 0.0
    %4327 = vmatpush2.msra.mxu0 0.0
    %4328 = vmatprep.subr.mxu0 0.0
    %4329 = vmatpush2.msra.mxu0 0.0
    %4330 = vmatprep.subr.mxu0 0.0
    %4331 = vmatpush2.msra.mxu0 0.0
    %4332 = vmatprep.subr.mxu0 0.0
    %4333 = vmatpush2.msra.mxu0 0.0
    %4334 = vmatprep.subr.mxu0 0.0
    %4335 = vmatpush2.msra.mxu0 0.0
    %4336 = vmatprep.mubr.f32.mxu0 0.0
    %4337 = vmatmul.mubr.f32.gmra.mxu0 %v2897
    %v4338 = vpop.f32.mrf.mxu0
    %v4339 = vadd.f32 %v4268, %v4338
    %v4340 = vpop.f32.mrf.mxu0
    %v4341 = vadd.f32 %v4270, %v4340
    %4342 = vdwg.mxu0
    %4351 = vrot.lane.b32.xlu0 %v3274, 127
    %v4352 = vpop.permute.xlu0 %4351
    %4353 = vrot.lane.b32.xlu0 %v3276, 127
    %v4354 = vpop.permute.xlu0 %4353
    %4355 = vrot.lane.b32.xlu0 %v3629, 127
    %v4356 = vpop.permute.xlu0 %4355
    %4357 = vrot.lane.b32.xlu0 %v3631, 127
    %v4358 = vpop.permute.xlu0 %4357
    %4359 = vrot.lane.b32.xlu0 %v3984, 127
    %v4360 = vpop.permute.xlu0 %4359
    %4361 = vrot.lane.b32.xlu0 %v3986, 127
    %v4362 = vpop.permute.xlu0 %4361
    %4363 = vrot.lane.b32.xlu0 %v4339, 127
    %v4364 = vpop.permute.xlu0 %4363
    %4365 = vrot.lane.b32.xlu0 %v4341, 127
    %v4366 = vpop.permute.xlu0 %4365
    %vm4367 = vcmask 1039360
    %v4368 = vsel %vm4367, %v4352, %v4354
    %v4369 = vsel %vm4367, %v4354, %v4356
    %v4370 = vsel %vm4367, %v4356, %v4358
    %v4371 = vsel %vm4367, %v4358, %v4360
    %v4372 = vsel %vm4367, %v4360, %v4362
    %v4373 = vsel %vm4367, %v4362, %v4364
    %v4374 = vsel %vm4367, %v4364, %v4366
    %4383 = vrot.lane.b32.xlu0 %v3274, 103
    %v4384 = vpop.permute.xlu0 %4383
    %vm4386 = vcmask 842752
    %v4387 = vsel %vm4386, %v4366, %v4384
    %v4388 = vmax.f32 %v3274, %v4368
    %v4389 = vmax.f32 %v3276, %v4369
    %v4390 = vmax.f32 %v3629, %v4370
    %v4391 = vmax.f32 %v3631, %v4371
    %v4392 = vmax.f32 %v3984, %v4372
    %v4393 = vmax.f32 %v3986, %v4373
    %v4394 = vmax.f32 %v4339, %v4374
    %v4395 = vmax.f32 %v4341, %v4387
    %v4396 = vtanh.pop %v4388
    %v4397 = vtanh.pop %v4389
    %v4398 = vtanh.pop %v4390
    %v4399 = vtanh.pop %v4391
    %v4400 = vtanh.pop %v4392
    %v4401 = vtanh.pop %v4393
    %v4402 = vtanh.pop %v4394
    %v4403 = vtanh.pop %v4395
    %v4404 = vld [vmem:[%s9] sm:$0xff]
    %v4405 = vld [vmem:[%s9 + $0x8] sm:$0xff]
    %v4406 = vld [vmem:[%s9 + $0x10] sm:$0xff]
    %v4407 = vld [vmem:[%s9 + $0x18] sm:$0xff]
    %v4408 = vld [vmem:[%s9 + $0x20] sm:$0xff]
    %v4409 = vld [vmem:[%s9 + $0x28] sm:$0xff]
    %v4410 = vld [vmem:[%s9 + $0x30] sm:$0xff]
    %v4411 = vld [vmem:[%s9 + $0x38] sm:$0xff]
    %v4412 = vld [vmem:[%s9 + $0x40] sm:$0xff]
    %v4413 = vld [vmem:[%s9 + $0x48] sm:$0xff]
    %v4414 = vld [vmem:[%s9 + $0x50] sm:$0xff]
    %v4415 = vld [vmem:[%s9 + $0x58] sm:$0xff]
    %v4416 = vld [vmem:[%s9 + $0x60] sm:$0xff]
    %v4417 = vld [vmem:[%s9 + $0x68] sm:$0xff]
    %v4418 = vld [vmem:[%s9 + $0x70] sm:$0xff]
    %v4419 = vld [vmem:[%s9 + $0x78] sm:$0xff]
    %v4420 = vld [vmem:[%s9 + $0x80] sm:$0xff]
    %v4421 = vld [vmem:[%s9 + $0x88] sm:$0xff]
    %v4422 = vld [vmem:[%s9 + $0x90] sm:$0xff]
    %v4423 = vld [vmem:[%s9 + $0x98] sm:$0xff]
    %v4424 = vld [vmem:[%s9 + $0xa0] sm:$0xff]
    %v4425 = vld [vmem:[%s9 + $0xa8] sm:$0xff]
    %v4426 = vld [vmem:[%s9 + $0xb0] sm:$0xff]
    %v4427 = vld [vmem:[%s9 + $0xb8] sm:$0xff]
    %v4428 = vld [vmem:[%s9 + $0xc0] sm:$0xff]
    %v4429 = vld [vmem:[%s9 + $0xc8] sm:$0xff]
    %v4430 = vld [vmem:[%s9 + $0xd0] sm:$0xff]
    %v4431 = vld [vmem:[%s9 + $0xd8] sm:$0xff]
    %v4432 = vld [vmem:[%s9 + $0xe0] sm:$0xff]
    %v4433 = vld [vmem:[%s9 + $0xe8] sm:$0xff]
    %v4434 = vld [vmem:[%s9 + $0xf0] sm:$0xff]
    %v4435 = vld [vmem:[%s9 + $0xf8] sm:$0xff]
    %v4436 = vld [vmem:[%s9 + $0x100] sm:$0xff]
    %v4437 = vld [vmem:[%s9 + $0x108] sm:$0xff]
    %v4438 = vld [vmem:[%s9 + $0x110] sm:$0xff]
    %v4439 = vld [vmem:[%s9 + $0x118] sm:$0xff]
    %v4440 = vld [vmem:[%s9 + $0x120] sm:$0xff]
    %v4441 = vld [vmem:[%s9 + $0x128] sm:$0xff]
    %v4442 = vld [vmem:[%s9 + $0x130] sm:$0xff]
    %v4443 = vld [vmem:[%s9 + $0x138] sm:$0xff]
    %v4444 = vld [vmem:[%s9 + $0x140] sm:$0xff]
    %v4445 = vld [vmem:[%s9 + $0x148] sm:$0xff]
    %v4446 = vld [vmem:[%s9 + $0x150] sm:$0xff]
    %v4447 = vld [vmem:[%s9 + $0x158] sm:$0xff]
    %v4448 = vld [vmem:[%s9 + $0x160] sm:$0xff]
    %v4449 = vld [vmem:[%s9 + $0x168] sm:$0xff]
    %v4450 = vld [vmem:[%s9 + $0x170] sm:$0xff]
    %v4451 = vld [vmem:[%s9 + $0x178] sm:$0xff]
    %v4452 = vld [vmem:[%s9 + $0x180] sm:$0xff]
    %v4453 = vld [vmem:[%s9 + $0x188] sm:$0xff]
    %v4454 = vld [vmem:[%s9 + $0x190] sm:$0xff]
    %v4455 = vld [vmem:[%s9 + $0x198] sm:$0xff]
    %v4456 = vld [vmem:[%s9 + $0x1a0] sm:$0xff]
    %v4457 = vld [vmem:[%s9 + $0x1a8] sm:$0xff]
    %v4458 = vld [vmem:[%s9 + $0x1b0] sm:$0xff]
    %v4459 = vld [vmem:[%s9 + $0x1b8] sm:$0xff]
    %v4460 = vld [vmem:[%s9 + $0x1c0] sm:$0xff]
    %v4461 = vld [vmem:[%s9 + $0x1c8] sm:$0xff]
    %v4462 = vld [vmem:[%s9 + $0x1d0] sm:$0xff]
    %v4463 = vld [vmem:[%s9 + $0x1d8] sm:$0xff]
    %v4464 = vld [vmem:[%s9 + $0x1e0] sm:$0xff]
    %v4465 = vld [vmem:[%s9 + $0x1e8] sm:$0xff]
    %v4466 = vld [vmem:[%s9 + $0x1f0] sm:$0xff]
    %v4467 = vld [vmem:[%s9 + $0x1f8] sm:$0xff]
    %v4468 = vld [vmem:[%s9 + $0x200] sm:$0xff]
    %v4469 = vld [vmem:[%s9 + $0x208] sm:$0xff]
    %v4470 = vld [vmem:[%s9 + $0x210] sm:$0xff]
    %v4471 = vld [vmem:[%s9 + $0x218] sm:$0xff]
    %v4472 = vld [vmem:[%s9 + $0x220] sm:$0xff]
    %v4473 = vld [vmem:[%s9 + $0x228] sm:$0xff]
    %v4474 = vld [vmem:[%s9 + $0x230] sm:$0xff]
    %v4475 = vld [vmem:[%s9 + $0x238] sm:$0xff]
    %v4476 = vld [vmem:[%s9 + $0x240] sm:$0xff]
    %v4477 = vld [vmem:[%s9 + $0x248] sm:$0xff]
    %v4478 = vld [vmem:[%s9 + $0x250] sm:$0xff]
    %v4479 = vld [vmem:[%s9 + $0x258] sm:$0xff]
    %v4480 = vld [vmem:[%s9 + $0x260] sm:$0xff]
    %v4481 = vld [vmem:[%s9 + $0x268] sm:$0xff]
    %v4482 = vld [vmem:[%s9 + $0x270] sm:$0xff]
    %v4483 = vld [vmem:[%s9 + $0x278] sm:$0xff]
    %v4484 = vld [vmem:[%s9 + $0x280] sm:$0xff]
    %v4485 = vld [vmem:[%s9 + $0x288] sm:$0xff]
    %v4486 = vld [vmem:[%s9 + $0x290] sm:$0xff]
    %v4487 = vld [vmem:[%s9 + $0x298] sm:$0xff]
    %v4488 = vld [vmem:[%s9 + $0x2a0] sm:$0xff]
    %v4489 = vld [vmem:[%s9 + $0x2a8] sm:$0xff]
    %v4490 = vld [vmem:[%s9 + $0x2b0] sm:$0xff]
    %v4491 = vld [vmem:[%s9 + $0x2b8] sm:$0xff]
    %v4492 = vld [vmem:[%s9 + $0x2c0] sm:$0xff]
    %v4493 = vld [vmem:[%s9 + $0x2c8] sm:$0xff]
    %v4494 = vld [vmem:[%s9 + $0x2d0] sm:$0xff]
    %v4495 = vld [vmem:[%s9 + $0x2d8] sm:$0xff]
    %v4496 = vld [vmem:[%s9 + $0x2e0] sm:$0xff]
    %v4497 = vld [vmem:[%s9 + $0x2e8] sm:$0xff]
    %v4498 = vld [vmem:[%s9 + $0x2f0] sm:$0xff]
    %v4499 = vld [vmem:[%s9 + $0x2f8] sm:$0xff]
    %v4500 = vld [vmem:[%s9 + $0x300] sm:$0xff]
    %v4501 = vld [vmem:[%s9 + $0x308] sm:$0xff]
    %v4502 = vld [vmem:[%s9 + $0x310] sm:$0xff]
    %v4503 = vld [vmem:[%s9 + $0x318] sm:$0xff]
    %v4504 = vld [vmem:[%s9 + $0x320] sm:$0xff]
    %v4505 = vld [vmem:[%s9 + $0x328] sm:$0xff]
    %v4506 = vld [vmem:[%s9 + $0x330] sm:$0xff]
    %v4507 = vld [vmem:[%s9 + $0x338] sm:$0xff]
    %v4508 = vld [vmem:[%s9 + $0x340] sm:$0xff]
    %v4509 = vld [vmem:[%s9 + $0x348] sm:$0xff]
    %v4510 = vld [vmem:[%s9 + $0x350] sm:$0xff]
    %v4511 = vld [vmem:[%s9 + $0x358] sm:$0xff]
    %v4512 = vld [vmem:[%s9 + $0x360] sm:$0xff]
    %v4513 = vld [vmem:[%s9 + $0x368] sm:$0xff]
    %v4514 = vld [vmem:[%s9 + $0x370] sm:$0xff]
    %v4515 = vld [vmem:[%s9 + $0x378] sm:$0xff]
    %v4516 = vld [vmem:[%s9 + $0x380] sm:$0xff]
    %v4517 = vld [vmem:[%s9 + $0x388] sm:$0xff]
    %v4518 = vld [vmem:[%s9 + $0x390] sm:$0xff]
    %v4519 = vld [vmem:[%s9 + $0x398] sm:$0xff]
    %v4520 = vld [vmem:[%s9 + $0x3a0] sm:$0xff]
    %v4521 = vld [vmem:[%s9 + $0x3a8] sm:$0xff]
    %v4522 = vld [vmem:[%s9 + $0x3b0] sm:$0xff]
    %v4523 = vld [vmem:[%s9 + $0x3b8] sm:$0xff]
    %v4524 = vld [vmem:[%s9 + $0x3c0] sm:$0xff]
    %v4525 = vld [vmem:[%s9 + $0x3c8] sm:$0xff]
    %v4526 = vld [vmem:[%s9 + $0x3d0] sm:$0xff]
    %v4527 = vld [vmem:[%s9 + $0x3d8] sm:$0xff]
    %v4528 = vld [vmem:[%s9 + $0x3e0] sm:$0xff]
    %v4529 = vld [vmem:[%s10] sm:$0x1]
    %v4531 = vlaneseq
    %v4532 = vshrl.u32 %v4531, 7
    %v4533 = vsub.s32 0, %v4532
    %v4534 = vrot.slane %v4529, %v4533
    %vm4536 = vcmask 850944
    %v4538 = vsel %vm4536, %v4403, 0
    %4540 = vmatprep.subr.mxu0 0.0
    %4541 = vmatpush1.msra.mxu0 %v4419
    %4542 = vmatprep.subr.mxu0 0.0
    %4543 = vmatpush1.msra.mxu0 %v4418
    %4544 = vmatprep.subr.mxu0 0.0
    %4545 = vmatpush1.msra.mxu0 %v4417
    %4546 = vmatprep.subr.mxu0 0.0
    %4547 = vmatpush1.msra.mxu0 %v4416
    %4548 = vmatprep.subr.mxu0 0.0
    %4549 = vmatpush1.msra.mxu0 %v4415
    %4550 = vmatprep.subr.mxu0 0.0
    %4551 = vmatpush1.msra.mxu0 %v4414
    %4552 = vmatprep.subr.mxu0 0.0
    %4553 = vmatpush1.msra.mxu0 %v4413
    %4554 = vmatprep.subr.mxu0 0.0
    %4555 = vmatpush1.msra.mxu0 %v4412
    %4556 = vmatprep.subr.mxu0 0.0
    %4557 = vmatpush1.msra.mxu0 %v4411
    %4558 = vmatprep.subr.mxu0 0.0
    %4559 = vmatpush1.msra.mxu0 %v4410
    %4560 = vmatprep.subr.mxu0 0.0
    %4561 = vmatpush1.msra.mxu0 %v4409
    %4562 = vmatprep.subr.mxu0 0.0
    %4563 = vmatpush1.msra.mxu0 %v4408
    %4564 = vmatprep.subr.mxu0 0.0
    %4565 = vmatpush1.msra.mxu0 %v4407
    %4566 = vmatprep.subr.mxu0 0.0
    %4567 = vmatpush1.msra.mxu0 %v4406
    %4568 = vmatprep.subr.mxu0 0.0
    %4569 = vmatpush1.msra.mxu0 %v4405
    %4570 = vmatprep.subr.mxu0 0.0
    %4571 = vmatpush1.msra.mxu0 %v4404
    %4572 = vmatprep.subr.mxu0 0.0
    %4573 = vmatpush2.msra.mxu0 %v4435
    %4574 = vmatprep.subr.mxu0 0.0
    %4575 = vmatpush2.msra.mxu0 %v4434
    %4576 = vmatprep.subr.mxu0 0.0
    %4577 = vmatpush2.msra.mxu0 %v4433
    %4578 = vmatprep.subr.mxu0 0.0
    %4579 = vmatpush2.msra.mxu0 %v4432
    %4580 = vmatprep.subr.mxu0 0.0
    %4581 = vmatpush2.msra.mxu0 %v4431
    %4582 = vmatprep.subr.mxu0 0.0
    %4583 = vmatpush2.msra.mxu0 %v4430
    %4584 = vmatprep.subr.mxu0 0.0
    %4585 = vmatpush2.msra.mxu0 %v4429
    %4586 = vmatprep.subr.mxu0 0.0
    %4587 = vmatpush2.msra.mxu0 %v4428
    %4588 = vmatprep.subr.mxu0 0.0
    %4589 = vmatpush2.msra.mxu0 %v4427
    %4590 = vmatprep.subr.mxu0 0.0
    %4591 = vmatpush2.msra.mxu0 %v4426
    %4592 = vmatprep.subr.mxu0 0.0
    %4593 = vmatpush2.msra.mxu0 %v4425
    %4594 = vmatprep.subr.mxu0 0.0
    %4595 = vmatpush2.msra.mxu0 %v4424
    %4596 = vmatprep.subr.mxu0 0.0
    %4597 = vmatpush2.msra.mxu0 %v4423
    %4598 = vmatprep.subr.mxu0 0.0
    %4599 = vmatpush2.msra.mxu0 %v4422
    %4600 = vmatprep.subr.mxu0 0.0
    %4601 = vmatpush2.msra.mxu0 %v4421
    %4602 = vmatprep.subr.mxu0 0.0
    %4603 = vmatpush2.msra.mxu0 %v4420
    %4604 = vmatprep.mubr.f32.mxu0 %v4397
    %4605 = vmatmul.mubr.f32.gmra.mxu0 %v4396
    %v4606 = vpop.f32.mrf.mxu0
    %v4607 = vadd.f32 %v4534, %v4606
    %v4608 = vpop.f32.mrf.mxu0
    %4609 = vdwg.mxu0
    %4610 = vmatprep.subr.mxu0 0.0
    %4611 = vmatpush1.msra.mxu0 %v4451
    %4612 = vmatprep.subr.mxu0 0.0
    %4613 = vmatpush1.msra.mxu0 %v4450
    %4614 = vmatprep.subr.mxu0 0.0
    %4615 = vmatpush1.msra.mxu0 %v4449
    %4616 = vmatprep.subr.mxu0 0.0
    %4617 = vmatpush1.msra.mxu0 %v4448
    %4618 = vmatprep.subr.mxu0 0.0
    %4619 = vmatpush1.msra.mxu0 %v4447
    %4620 = vmatprep.subr.mxu0 0.0
    %4621 = vmatpush1.msra.mxu0 %v4446
    %4622 = vmatprep.subr.mxu0 0.0
    %4623 = vmatpush1.msra.mxu0 %v4445
    %4624 = vmatprep.subr.mxu0 0.0
    %4625 = vmatpush1.msra.mxu0 %v4444
    %4626 = vmatprep.subr.mxu0 0.0
    %4627 = vmatpush1.msra.mxu0 %v4443
    %4628 = vmatprep.subr.mxu0 0.0
    %4629 = vmatpush1.msra.mxu0 %v4442
    %4630 = vmatprep.subr.mxu0 0.0
    %4631 = vmatpush1.msra.mxu0 %v4441
    %4632 = vmatprep.subr.mxu0 0.0
    %4633 = vmatpush1.msra.mxu0 %v4440
    %4634 = vmatprep.subr.mxu0 0.0
    %4635 = vmatpush1.msra.mxu0 %v4439
    %4636 = vmatprep.subr.mxu0 0.0
    %4637 = vmatpush1.msra.mxu0 %v4438
    %4638 = vmatprep.subr.mxu0 0.0
    %4639 = vmatpush1.msra.mxu0 %v4437
    %4640 = vmatprep.subr.mxu0 0.0
    %4641 = vmatpush1.msra.mxu0 %v4436
    %4642 = vmatprep.subr.mxu0 0.0
    %4643 = vmatpush2.msra.mxu0 %v4467
    %4644 = vmatprep.subr.mxu0 0.0
    %4645 = vmatpush2.msra.mxu0 %v4466
    %4646 = vmatprep.subr.mxu0 0.0
    %4647 = vmatpush2.msra.mxu0 %v4465
    %4648 = vmatprep.subr.mxu0 0.0
    %4649 = vmatpush2.msra.mxu0 %v4464
    %4650 = vmatprep.subr.mxu0 0.0
    %4651 = vmatpush2.msra.mxu0 %v4463
    %4652 = vmatprep.subr.mxu0 0.0
    %4653 = vmatpush2.msra.mxu0 %v4462
    %4654 = vmatprep.subr.mxu0 0.0
    %4655 = vmatpush2.msra.mxu0 %v4461
    %4656 = vmatprep.subr.mxu0 0.0
    %4657 = vmatpush2.msra.mxu0 %v4460
    %4658 = vmatprep.subr.mxu0 0.0
    %4659 = vmatpush2.msra.mxu0 %v4459
    %4660 = vmatprep.subr.mxu0 0.0
    %4661 = vmatpush2.msra.mxu0 %v4458
    %4662 = vmatprep.subr.mxu0 0.0
    %4663 = vmatpush2.msra.mxu0 %v4457
    %4664 = vmatprep.subr.mxu0 0.0
    %4665 = vmatpush2.msra.mxu0 %v4456
    %4666 = vmatprep.subr.mxu0 0.0
    %4667 = vmatpush2.msra.mxu0 %v4455
    %4668 = vmatprep.subr.mxu0 0.0
    %4669 = vmatpush2.msra.mxu0 %v4454
    %4670 = vmatprep.subr.mxu0 0.0
    %4671 = vmatpush2.msra.mxu0 %v4453
    %4672 = vmatprep.subr.mxu0 0.0
    %4673 = vmatpush2.msra.mxu0 %v4452
    %4674 = vmatprep.mubr.f32.mxu0 %v4399
    %4675 = vmatmul.mubr.f32.gmra.mxu0 %v4398
    %v4676 = vpop.f32.mrf.mxu0
    %v4677 = vadd.f32 %v4607, %v4676
    %v4678 = vpop.f32.mrf.mxu0
    %4679 = vdwg.mxu0
    %4680 = vmatprep.subr.mxu0 0.0
    %4681 = vmatpush1.msra.mxu0 %v4483
    %4682 = vmatprep.subr.mxu0 0.0
    %4683 = vmatpush1.msra.mxu0 %v4482
    %4684 = vmatprep.subr.mxu0 0.0
    %4685 = vmatpush1.msra.mxu0 %v4481
    %4686 = vmatprep.subr.mxu0 0.0
    %4687 = vmatpush1.msra.mxu0 %v4480
    %4688 = vmatprep.subr.mxu0 0.0
    %4689 = vmatpush1.msra.mxu0 %v4479
    %4690 = vmatprep.subr.mxu0 0.0
    %4691 = vmatpush1.msra.mxu0 %v4478
    %4692 = vmatprep.subr.mxu0 0.0
    %4693 = vmatpush1.msra.mxu0 %v4477
    %4694 = vmatprep.subr.mxu0 0.0
    %4695 = vmatpush1.msra.mxu0 %v4476
    %4696 = vmatprep.subr.mxu0 0.0
    %4697 = vmatpush1.msra.mxu0 %v4475
    %4698 = vmatprep.subr.mxu0 0.0
    %4699 = vmatpush1.msra.mxu0 %v4474
    %4700 = vmatprep.subr.mxu0 0.0
    %4701 = vmatpush1.msra.mxu0 %v4473
    %4702 = vmatprep.subr.mxu0 0.0
    %4703 = vmatpush1.msra.mxu0 %v4472
    %4704 = vmatprep.subr.mxu0 0.0
    %4705 = vmatpush1.msra.mxu0 %v4471
    %4706 = vmatprep.subr.mxu0 0.0
    %4707 = vmatpush1.msra.mxu0 %v4470
    %4708 = vmatprep.subr.mxu0 0.0
    %4709 = vmatpush1.msra.mxu0 %v4469
    %4710 = vmatprep.subr.mxu0 0.0
    %4711 = vmatpush1.msra.mxu0 %v4468
    %4712 = vmatprep.subr.mxu0 0.0
    %4713 = vmatpush2.msra.mxu0 %v4499
    %4714 = vmatprep.subr.mxu0 0.0
    %4715 = vmatpush2.msra.mxu0 %v4498
    %4716 = vmatprep.subr.mxu0 0.0
    %4717 = vmatpush2.msra.mxu0 %v4497
    %4718 = vmatprep.subr.mxu0 0.0
    %4719 = vmatpush2.msra.mxu0 %v4496
    %4720 = vmatprep.subr.mxu0 0.0
    %4721 = vmatpush2.msra.mxu0 %v4495
    %4722 = vmatprep.subr.mxu0 0.0
    %4723 = vmatpush2.msra.mxu0 %v4494
    %4724 = vmatprep.subr.mxu0 0.0
    %4725 = vmatpush2.msra.mxu0 %v4493
    %4726 = vmatprep.subr.mxu0 0.0
    %4727 = vmatpush2.msra.mxu0 %v4492
    %4728 = vmatprep.subr.mxu0 0.0
    %4729 = vmatpush2.msra.mxu0 %v4491
    %4730 = vmatprep.subr.mxu0 0.0
    %4731 = vmatpush2.msra.mxu0 %v4490
    %4732 = vmatprep.subr.mxu0 0.0
    %4733 = vmatpush2.msra.mxu0 %v4489
    %4734 = vmatprep.subr.mxu0 0.0
    %4735 = vmatpush2.msra.mxu0 %v4488
    %4736 = vmatprep.subr.mxu0 0.0
    %4737 = vmatpush2.msra.mxu0 %v4487
    %4738 = vmatprep.subr.mxu0 0.0
    %4739 = vmatpush2.msra.mxu0 %v4486
    %4740 = vmatprep.subr.mxu0 0.0
    %4741 = vmatpush2.msra.mxu0 %v4485
    %4742 = vmatprep.subr.mxu0 0.0
    %4743 = vmatpush2.msra.mxu0 %v4484
    %4744 = vmatprep.mubr.f32.mxu0 %v4401
    %4745 = vmatmul.mubr.f32.gmra.mxu0 %v4400
    %v4746 = vpop.f32.mrf.mxu0
    %v4747 = vadd.f32 %v4677, %v4746
    %v4748 = vpop.f32.mrf.mxu0
    %4749 = vdwg.mxu0
    %4750 = vmatprep.subr.mxu0 0.0
    %4751 = vmatpush1.msra.mxu0 %v4515
    %4752 = vmatprep.subr.mxu0 0.0
    %4753 = vmatpush1.msra.mxu0 %v4514
    %4754 = vmatprep.subr.mxu0 0.0
    %4755 = vmatpush1.msra.mxu0 %v4513
    %4756 = vmatprep.subr.mxu0 0.0
    %4757 = vmatpush1.msra.mxu0 %v4512
    %4758 = vmatprep.subr.mxu0 0.0
    %4759 = vmatpush1.msra.mxu0 %v4511
    %4760 = vmatprep.subr.mxu0 0.0
    %4761 = vmatpush1.msra.mxu0 %v4510
    %4762 = vmatprep.subr.mxu0 0.0
    %4763 = vmatpush1.msra.mxu0 %v4509
    %4764 = vmatprep.subr.mxu0 0.0
    %4765 = vmatpush1.msra.mxu0 %v4508
    %4766 = vmatprep.subr.mxu0 0.0
    %4767 = vmatpush1.msra.mxu0 %v4507
    %4768 = vmatprep.subr.mxu0 0.0
    %4769 = vmatpush1.msra.mxu0 %v4506
    %4770 = vmatprep.subr.mxu0 0.0
    %4771 = vmatpush1.msra.mxu0 %v4505
    %4772 = vmatprep.subr.mxu0 0.0
    %4773 = vmatpush1.msra.mxu0 %v4504
    %4774 = vmatprep.subr.mxu0 0.0
    %4775 = vmatpush1.msra.mxu0 %v4503
    %4776 = vmatprep.subr.mxu0 0.0
    %4777 = vmatpush1.msra.mxu0 %v4502
    %4778 = vmatprep.subr.mxu0 0.0
    %4779 = vmatpush1.msra.mxu0 %v4501
    %4780 = vmatprep.subr.mxu0 0.0
    %4781 = vmatpush1.msra.mxu0 %v4500
    %4782 = vmatprep.subr.mxu0 0.0
    %4783 = vmatpush2.msra.mxu0 0.0
    %4784 = vmatprep.subr.mxu0 0.0
    %4785 = vmatpush2.msra.mxu0 0.0
    %4786 = vmatprep.subr.mxu0 0.0
    %4787 = vmatpush2.msra.mxu0 0.0
    %4788 = vmatprep.subr.mxu0 0.0
    %4789 = vmatpush2.msra.mxu0 %v4528
    %4790 = vmatprep.subr.mxu0 0.0
    %4791 = vmatpush2.msra.mxu0 %v4527
    %4792 = vmatprep.subr.mxu0 0.0
    %4793 = vmatpush2.msra.mxu0 %v4526
    %4794 = vmatprep.subr.mxu0 0.0
    %4795 = vmatpush2.msra.mxu0 %v4525
    %4796 = vmatprep.subr.mxu0 0.0
    %4797 = vmatpush2.msra.mxu0 %v4524
    %4798 = vmatprep.subr.mxu0 0.0
    %4799 = vmatpush2.msra.mxu0 %v4523
    %4800 = vmatprep.subr.mxu0 0.0
    %4801 = vmatpush2.msra.mxu0 %v4522
    %4802 = vmatprep.subr.mxu0 0.0
    %4803 = vmatpush2.msra.mxu0 %v4521
    %4804 = vmatprep.subr.mxu0 0.0
    %4805 = vmatpush2.msra.mxu0 %v4520
    %4806 = vmatprep.subr.mxu0 0.0
    %4807 = vmatpush2.msra.mxu0 %v4519
    %4808 = vmatprep.subr.mxu0 0.0
    %4809 = vmatpush2.msra.mxu0 %v4518
    %4810 = vmatprep.subr.mxu0 0.0
    %4811 = vmatpush2.msra.mxu0 %v4517
    %4812 = vmatprep.subr.mxu0 0.0
    %4813 = vmatpush2.msra.mxu0 %v4516
    %4814 = vmatprep.mubr.f32.mxu0 %v4538
    %4815 = vmatmul.mubr.f32.gmra.mxu0 %v4402
    %v4816 = vpop.f32.mrf.mxu0
    %v4817 = vadd.f32 %v4747, %v4816
    %v4818 = vpop.f32.mrf.mxu0
    %4819 = vdwg.mxu0
    %v4820 = vtanh.pop %v4817
    %v4821 = vld [vmem:[%s11] sm:$0xff]
    %v4822 = vld [vmem:[%s11 + $0x8] sm:$0xff]
    %v4823 = vld [vmem:[%s11 + $0x10] sm:$0xff]
    %v4824 = vld [vmem:[%s11 + $0x18] sm:$0xff]
    %v4825 = vld [vmem:[%s11 + $0x20] sm:$0xff]
    %v4826 = vld [vmem:[%s11 + $0x28] sm:$0xff]
    %v4827 = vld [vmem:[%s11 + $0x30] sm:$0xff]
    %v4828 = vld [vmem:[%s11 + $0x38] sm:$0xff]
    %v4829 = vld [vmem:[%s11 + $0x40] sm:$0xff]
    %v4830 = vld [vmem:[%s11 + $0x48] sm:$0xff]
    %v4831 = vld [vmem:[%s11 + $0x50] sm:$0xff]
    %v4832 = vld [vmem:[%s11 + $0x58] sm:$0xff]
    %v4833 = vld [vmem:[%s11 + $0x60] sm:$0xf]
    %v4834 = vld [vmem:[%s12] sm:$0x1]
    %v4836 = vlaneseq
    %v4837 = vshrl.u32 %v4836, 7
    %v4838 = vsub.s32 0, %v4837
    %v4839 = vrot.slane %v4834, %v4838
    %vm4841 = vcmask 818176
    %v4843 = vsel %vm4841, %v4820, 0
    %v4846 = vsel %vm525, %v4833, 0
    %4848 = vmatprep.subr.mxu0 0.0
    %4849 = vmatpush1.msra.mxu0 0.0
    %4850 = vmatprep.subr.mxu0 0.0
    %4851 = vmatpush1.msra.mxu0 0.0
    %4852 = vmatprep.subr.mxu0 0.0
    %4853 = vmatpush1.msra.mxu0 0.0
    %4854 = vmatprep.subr.mxu0 0.0
    %4855 = vmatpush1.msra.mxu0 %v4846
    %4856 = vmatprep.subr.mxu0 0.0
    %4857 = vmatpush1.msra.mxu0 %v4832
    %4858 = vmatprep.subr.mxu0 0.0
    %4859 = vmatpush1.msra.mxu0 %v4831
    %4860 = vmatprep.subr.mxu0 0.0
    %4861 = vmatpush1.msra.mxu0 %v4830
    %4862 = vmatprep.subr.mxu0 0.0
    %4863 = vmatpush1.msra.mxu0 %v4829
    %4864 = vmatprep.subr.mxu0 0.0
    %4865 = vmatpush1.msra.mxu0 %v4828
    %4866 = vmatprep.subr.mxu0 0.0
    %4867 = vmatpush1.msra.mxu0 %v4827
    %4868 = vmatprep.subr.mxu0 0.0
    %4869 = vmatpush1.msra.mxu0 %v4826
    %4870 = vmatprep.subr.mxu0 0.0
    %4871 = vmatpush1.msra.mxu0 %v4825
    %4872 = vmatprep.subr.mxu0 0.0
    %4873 = vmatpush1.msra.mxu0 %v4824
    %4874 = vmatprep.subr.mxu0 0.0
    %4875 = vmatpush1.msra.mxu0 %v4823
    %4876 = vmatprep.subr.mxu0 0.0
    %4877 = vmatpush1.msra.mxu0 %v4822
    %4878 = vmatprep.subr.mxu0 0.0
    %4879 = vmatpush1.msra.mxu0 %v4821
    %4880 = vmatprep.subr.mxu0 0.0
    %4881 = vmatpush2.msra.mxu0 0.0
    %4882 = vmatprep.subr.mxu0 0.0
    %4883 = vmatpush2.msra.mxu0 0.0
    %4884 = vmatprep.subr.mxu0 0.0
    %4885 = vmatpush2.msra.mxu0 0.0
    %4886 = vmatprep.subr.mxu0 0.0
    %4887 = vmatpush2.msra.mxu0 0.0
    %4888 = vmatprep.subr.mxu0 0.0
    %4889 = vmatpush2.msra.mxu0 0.0
    %4890 = vmatprep.subr.mxu0 0.0
    %4891 = vmatpush2.msra.mxu0 0.0
    %4892 = vmatprep.subr.mxu0 0.0
    %4893 = vmatpush2.msra.mxu0 0.0
    %4894 = vmatprep.subr.mxu0 0.0
    %4895 = vmatpush2.msra.mxu0 0.0
    %4896 = vmatprep.subr.mxu0 0.0
    %4897 = vmatpush2.msra.mxu0 0.0
    %4898 = vmatprep.subr.mxu0 0.0
    %4899 = vmatpush2.msra.mxu0 0.0
    %4900 = vmatprep.subr.mxu0 0.0
    %4901 = vmatpush2.msra.mxu0 0.0
    %4902 = vmatprep.subr.mxu0 0.0
    %4903 = vmatpush2.msra.mxu0 0.0
    %4904 = vmatprep.subr.mxu0 0.0
    %4905 = vmatpush2.msra.mxu0 0.0
    %4906 = vmatprep.subr.mxu0 0.0
    %4907 = vmatpush2.msra.mxu0 0.0
    %4908 = vmatprep.subr.mxu0 0.0
    %4909 = vmatpush2.msra.mxu0 0.0
    %4910 = vmatprep.subr.mxu0 0.0
    %4911 = vmatpush2.msra.mxu0 0.0
    %4912 = vmatprep.mubr.f32.mxu0 0.0
    %4913 = vmatmul.mubr.f32.gmra.mxu0 %v4843
    %v4914 = vpop.f32.mrf.mxu0
    %v4915 = vadd.f32 %v4839, %v4914
    %v4916 = vpop.f32.mrf.mxu0
    %4917 = vdwg.mxu0
    %4918 = vst [vmem:[#allocation2] sm:$0xf] %v4915
    // Predicated region
    $region54: #{m1dcnn_forward.1} parent=1 // pred_check
      _
    $region55: #{m1dcnn_forward.1} parent=1 // pred_check_branch
      %4920 = sbr.rel (0) target = $region57
    $region56: #{m1dcnn_forward.1} parent=1 // pred_region
      %s4922 = ssub.s32 64, 64
      %4923 = vsyncadd [#allocation3], %s4922
      %s4925 = sshll.u32 [#allocation2], 4
      %s4926 = int_to_ptr.vmem [resolvable:$true] %s4925
      %4928 = dma.vmem_to_hbm [thread:$0]  %s4926, 64, %s13, [#allocation3]
    $region57: #{m1dcnn_forward.1} parent=1 // pred_fallthru
      _
    // Predicated region
    $region58: #{m1dcnn_forward.1} parent=1 // pred_check
      _
    $region59: #{m1dcnn_forward.1} parent=1 // pred_check_branch
      %4930 = sbr.rel (0) target = $region61
    $region60: #{m1dcnn_forward.1} parent=1 // pred_region
      %4931 = dma.done [#allocation3], 64
    $region61: #{m1dcnn_forward.1} parent=1 // pred_fallthru
      _
    %4932 = vsyncpa [#allocation3], 1

</llo_original>
